<compile_context>
chip_gen: v7x
topology: tpu7x:2x2x1
jax: 0.10.0
libtpu: 0.0.40
codegen_flags: <defaults>
</compile_context>

<pallas_src>
import jax
import jax.numpy as jnp
from jax.experimental import pallas as pl
from jax.experimental.pallas import tpu as pltpu


# ---------------------------------------------------------------------------
# Math helpers (shared by kernel and reference)
# ---------------------------------------------------------------------------
def _gelu(x):
    # exact GELU (torch.nn.GELU default): 0.5 * x * (1 + erf(x / sqrt(2)))
    return 0.5 * x * (1.0 + jax.lax.erf(x * 0.7071067811865476))


def _layernorm(x, gamma, beta, eps=1e-5):
    mu = jnp.mean(x, axis=-1, keepdims=True)
    var = jnp.mean((x - mu) ** 2, axis=-1, keepdims=True)
    return (x - mu) * jax.lax.rsqrt(var + eps) * gamma + beta


# ---------------------------------------------------------------------------
# Kernel (one batch TILE of Bt examples per grid step)
# ---------------------------------------------------------------------------
def entity_head_kernel(
    off_ref,                      # SMEM  [B, 5] int32 (scalar-prefetched)
    bert_ref,                     # VMEM  [Bt, S, H] bf16
    wp1, bp1, gp, btp, wp2, bp2,  # pronoun FFNN params (VMEM, resident)
    we1, be1, ge, bte, we2, be2,  # entity FFNN params  (VMEM, resident)
    wl, bl, wc, bc,               # linear + classifier params
    out_ref,                      # VMEM  [Bt, num_output] f32
    g_scr,                        # VMEM  [Bt*8, H] f32 scratch (gather results)
):
    t = pl.program_id(0)
    Bt, S, H = bert_ref.shape
    f32 = jnp.float32
    bf16 = jnp.bfloat16

    # ---- iotas hoisted once per tile (shared by every example) ------------
    row = jax.lax.broadcasted_iota(jnp.int32, (8, S), 0)
    lane = jax.lax.broadcasted_iota(jnp.int32, (8, S), 1)
    row_col = jax.lax.broadcasted_iota(jnp.int32, (8, 1), 0)

    # ---- per-example gather: one (8,S)x(S,H) bf16 MXU matmul each ----------
    # selector rows: 0 start_A, 1 end_A-1, 2 span_A sum, 3 start_B, 4 end_B-1,
    #                5 span_B sum, 6 pronoun, 7 unused
    for ex in range(Bt):                                   # static unroll
        gi = t * Bt + ex
        sA = off_ref[gi, 0]
        eA = off_ref[gi, 1]
        sB = off_ref[gi, 2]
        eB = off_ref[gi, 3]
        pp = off_ref[gi, 4]

        def onehot(r, idx):
            return jnp.logical_and(row == r, lane == idx)

        def span(r, lo, hi):
            return jnp.logical_and(row == r,
                                   jnp.logical_and(lane >= lo, lane < hi))

        sel_bool = (onehot(0, sA) | onehot(1, eA - 1) | span(2, sA, eA)
                    | onehot(3, sB) | onehot(4, eB - 1) | span(5, sB, eB)
                    | onehot(6, pp))
        sel = sel_bool.astype(f32).astype(bf16)            # 0/1 exact in bf16

        g = jnp.dot(sel, bert_ref[ex], preferred_element_type=f32)  # (8,H) f32

        # span sums -> means; 1/len kept in f32 (NOT folded into bf16 selector)
        # (empty spans would NaN here exactly like the PyTorch reference)
        inv_lenA = 1.0 / (eA - sA).astype(f32)
        inv_lenB = 1.0 / (eB - sB).astype(f32)
        scale = jnp.where(row_col == 2, inv_lenA,
                          jnp.where(row_col == 5, inv_lenB, 1.0))
        g_scr[ex * 8:(ex + 1) * 8, :] = g * scale          # aligned 8-row store

    G = g_scr[...]                                          # (8*Bt, H) f32

    # ---- re-batch: component-major (Bt, H) blocks via tiny constant matmuls
    ex_idx8 = jax.lax.broadcasted_iota(jnp.int32, (Bt, Bt * 8), 0) * 8
    col_idx = jax.lax.broadcasted_iota(jnp.int32, (Bt, Bt * 8), 1)

    def component(k):                                       # (Bt, H) f32
        P = (col_idx == ex_idx8 + k).astype(f32)
        return jnp.dot(P, G, preferred_element_type=f32)

    def mm(a, w):                                           # bf16 MXU, f32 accum
        return jnp.dot(a.astype(bf16), w.astype(bf16),
                       preferred_element_type=f32)

    # ---- ffnn_pronoun: Linear -> LayerNorm -> GELU -> Dropout(id) -> Linear
    hp = mm(component(6), wp1[...]) + bp1[...]
    hp = _gelu(_layernorm(hp, gp[...], btp[...]))
    hp = mm(hp, wp2[...]) + bp2[...]                        # (Bt, head_hidden)

    # ---- ffnn_entities: we1 consumed as six [H,H] ref-sliced row blocks ----
    he = mm(component(0), we1[0:H, :])
    for k in range(1, 6):                                   # static unroll
        he = he + mm(component(k), we1[k * H:(k + 1) * H, :])
    he = he + be1[...]
    he = _gelu(_layernorm(he, ge[...], bte[...]))
    he = mm(he, we2[...]) + be2[...]                        # (Bt, head_hidden)

    # ---- linear -> GELU -> Dropout(id) -> classifier (wl ref-sliced) -------
    hh = hp.shape[1]
    x = mm(hp, wl[0:hh, :]) + mm(he, wl[hh:2 * hh, :]) + bl[...]
    x = _gelu(x)
    out_ref[...] = (mm(x, wc[...]) + bc[...]).astype(out_ref.dtype)


# ---------------------------------------------------------------------------
# Wrapper
# ---------------------------------------------------------------------------
def entity_resolution_head(bert_outputs, offsets, params, *, block_b=None):
    B, S, H = bert_outputs.shape
    num_output = params["wc"].shape[1]

    if block_b is None:
        block_b = B
        for bt in (128, 64, 32, 16, 8):
            # largest batch tile that divides B with a <=8 MiB bf16 input tile
            if B % bt == 0 and bt * S * H * 2 <= (8 << 20):
                block_b = bt
                break
    assert B % block_b == 0, "batch must be divisible by block_b"
    assert block_b == B or block_b % 8 == 0, \
        "block_b must equal B or be a multiple of 8 (BlockSpec (8,128) rule)"

    param_order = [
        "wp1", "bp1", "gp", "btp", "wp2", "bp2",
        "we1", "be1", "ge", "bte", "we2", "be2",
        "wl", "bl", "wc", "bc",
    ]
    mxu_weight_keys = {"wp1", "wp2", "we1", "we2", "wl", "wc"}
    # matmul weights in bf16; biases / LayerNorm params stay f32
    weights = [params[k].astype(jnp.bfloat16 if k in mxu_weight_keys
                                else jnp.float32) for k in param_order]
    bert_bf16 = bert_outputs.astype(jnp.bfloat16)

    def resident(arr):
        # full-array block + constant index map -> DMA'd once, VMEM-resident
        return pl.BlockSpec(arr.shape, lambda t, off, _n=arr.ndim: (0,) * _n)

    in_specs = [pl.BlockSpec((block_b, S, H), lambda t, off: (t, 0, 0))] + \
               [resident(w) for w in weights]

    # VMEM budget from actual buffer sizes (assume 2 buffers each) + slack.
    weight_bytes = sum(int(w.size) * w.dtype.itemsize for w in weights)
    bert_tile_bytes = block_b * S * H * 2
    out_tile_bytes = block_b * num_output * 4
    scratch_bytes = block_b * 8 * H * 4
    need = (2 * bert_tile_bytes + 2 * weight_bytes + 2 * out_tile_bytes
            + scratch_bytes + (4 << 20))
    vmem_limit = int(min(max(need, 32 << 20), 64 << 20))   # fits v7x's 64 MiB

    grid_spec = pltpu.PrefetchScalarGridSpec(
        num_scalar_prefetch=1,
        grid=(B // block_b,),
        in_specs=in_specs,
        out_specs=pl.BlockSpec((block_b, num_output), lambda t, off: (t, 0)),
        scratch_shapes=[pltpu.VMEM((block_b * 8, H), jnp.float32)],
    )

    out = pl.pallas_call(
        entity_head_kernel,
        out_shape=jax.ShapeDtypeStruct((B, num_output), jnp.float32),
        grid_spec=grid_spec,
        compiler_params=pltpu.CompilerParams(
            dimension_semantics=("parallel",),
            vmem_limit_bytes=vmem_limit,
        ),
    )(offsets.astype(jnp.int32), bert_bf16, *weights)

    return out


# ---------------------------------------------------------------------------
# Deterministic synthetic parameters + pure-JAX reference
# ---------------------------------------------------------------------------
def init_params(key, H, head_hidden, linear_hidden, num_output):
    ks = jax.random.split(key, 10)
    s = 0.05

    def w(k, i, o):
        return jax.random.normal(k, (i, o), jnp.float32) * s

    return {
        # ffnn_pronoun
        "wp1": w(ks[0], H, H),           "bp1": jnp.full((1, H), 0.01, jnp.float32),
        "gp": jnp.ones((1, H), jnp.float32), "btp": jnp.zeros((1, H), jnp.float32),
        "wp2": w(ks[1], H, head_hidden), "bp2": jnp.full((1, head_hidden), 0.02, jnp.float32),
        # ffnn_entities
        "we1": w(ks[2], 6 * H, H),       "be1": jnp.full((1, H), -0.01, jnp.float32),
        "ge": jnp.ones((1, H), jnp.float32), "bte": jnp.zeros((1, H), jnp.float32),
        "we2": w(ks[3], H, head_hidden), "be2": jnp.full((1, head_hidden), 0.03, jnp.float32),
        # linear + classifier
        "wl": w(ks[4], 2 * head_hidden, linear_hidden),
        "bl": jnp.full((1, linear_hidden), 0.005, jnp.float32),
        "wc": w(ks[5], linear_hidden, num_output),
        "bc": jnp.zeros((1, num_output), jnp.float32),
    }


def reference(bert_outputs, offsets, params, matmul_dtype=jnp.float32):
    """Module semantics; matmul_dtype=bf16 mirrors the kernel's MXU precision."""
    f32 = jnp.float32

    def mm(a, w):
        return jnp.dot(a.astype(matmul_dtype), w.astype(matmul_dtype),
                       preferred_element_type=f32)

    emb_all = bert_outputs.astype(matmul_dtype).astype(f32)
    offs = jax.device_get(offsets)
    B = emb_all.shape[0]
    prons, ents = [], []
    for b in range(B):
        sA, eA, sB, eB, pp = (int(v) for v in offs[b])
        emb = emb_all[b]
        entA = jnp.concatenate([emb[sA], emb[eA - 1], emb[sA:eA].mean(axis=0)])
        entB = jnp.concatenate([emb[sB], emb[eB - 1], emb[sB:eB].mean(axis=0)])
        ents.append(jnp.concatenate([entA, entB]))
        prons.append(emb[pp])
    xp = jnp.stack(prons)
    xe = jnp.stack(ents)

    hp = mm(xp, params["wp1"]) + params["bp1"]
    hp = _gelu(_layernorm(hp, params["gp"], params["btp"]))
    hp = mm(hp, params["wp2"]) + params["bp2"]

    he = mm(xe, params["we1"]) + params["be1"]
    he = _gelu(_layernorm(he, params["ge"], params["bte"]))
    he = mm(he, params["we2"]) + params["be2"]

    x = jnp.concatenate([hp, he], axis=-1)
    x = _gelu(mm(x, params["wl"]) + params["bl"])
    return mm(x, params["wc"]) + params["bc"]


if __name__ == "__main__":
    B, S, H = 16, 8, 32
    head_hidden, linear_hidden, num_output = 16, 16, 2

    key = jax.random.PRNGKey(0)
    k_bert, k_params = jax.random.split(key)

    bert_outputs = jax.random.normal(k_bert, (B, S, H), jnp.float32)

    # deterministic valid offsets: [start_A, end_A, start_B, end_B, pron_off],
    # every span has length >= 1 and lies inside [0, S)
    idx = jnp.arange(B, dtype=jnp.int32)
    sA = idx % (S - 3)
    eA = sA + 1 + (idx % 3)
    sB = (idx * 2 + 1) % (S - 3)
    eB = sB + 1 + ((idx + 1) % 3)
    pp = (idx * 3) % S
    offsets = jnp.stack([sA, eA, sB, eB, pp], axis=1).astype(jnp.int32)

    params = init_params(k_params, H, head_hidden, linear_hidden, num_output)

    out = entity_resolution_head(bert_outputs, offsets, params, block_b=8)
    out = jax.block_until_ready(out)
    assert out.shape == (B, num_output)

    # tight check against a reference that mirrors the kernel's bf16 MXU math
    ref_bf16 = reference(bert_outputs, offsets, params, matmul_dtype=jnp.bfloat16)
    assert jnp.allclose(out, ref_bf16, rtol=5e-3, atol=5e-4), (out, ref_bf16)

    # loose sanity check against the exact f32 module semantics
    ref_f32 = reference(bert_outputs, offsets, params, matmul_dtype=jnp.float32)
    assert jnp.allclose(out, ref_f32, rtol=2e-1, atol=2e-2), (out, ref_f32)

    print("KERNEL_OK")
</pallas_src>

<mosaic_0001>
module attributes {stable_mosaic.version = 11 : i64} {
  func.func @entity_head_kernel(%arg0: i32, %arg1: memref<16x5xi32, #tpu.memory_space<smem>>, %arg2: memref<8x8x32xbf16, #tpu.memory_space<vmem>>, %arg3: memref<32x32xbf16, #tpu.memory_space<vmem>>, %arg4: memref<1x32xf32, #tpu.memory_space<vmem>>, %arg5: memref<1x32xf32, #tpu.memory_space<vmem>>, %arg6: memref<1x32xf32, #tpu.memory_space<vmem>>, %arg7: memref<32x16xbf16, #tpu.memory_space<vmem>>, %arg8: memref<1x16xf32, #tpu.memory_space<vmem>>, %arg9: memref<192x32xbf16, #tpu.memory_space<vmem>>, %arg10: memref<1x32xf32, #tpu.memory_space<vmem>>, %arg11: memref<1x32xf32, #tpu.memory_space<vmem>>, %arg12: memref<1x32xf32, #tpu.memory_space<vmem>>, %arg13: memref<32x16xbf16, #tpu.memory_space<vmem>>, %arg14: memref<1x16xf32, #tpu.memory_space<vmem>>, %arg15: memref<32x16xbf16, #tpu.memory_space<vmem>>, %arg16: memref<1x16xf32, #tpu.memory_space<vmem>>, %arg17: memref<16x2xbf16, #tpu.memory_space<vmem>>, %arg18: memref<1x2xf32, #tpu.memory_space<vmem>>, %arg19: memref<8x2xf32, #tpu.memory_space<vmem>>, %arg20: memref<64x32xf32, #tpu.memory_space<vmem>>) attributes {dimension_semantics = [#tpu.dimension_semantics<parallel>], iteration_bounds = array<i64: 2>, scalar_prefetch = 1 : i64, scratch_operands = 1 : i64, tpu.core_type = #tpu.core_type<tc>, window_params = [{transform_indices = @transform_0, window_bounds = array<i64: 8, 8, 32>}, {pipeline_mode = #tpu.pipeline_mode<synchronous>, transform_indices = @transform_1, window_bounds = array<i64: 32, 32>}, {pipeline_mode = #tpu.pipeline_mode<synchronous>, transform_indices = @transform_2, window_bounds = array<i64: 1, 32>}, {pipeline_mode = #tpu.pipeline_mode<synchronous>, transform_indices = @transform_3, window_bounds = array<i64: 1, 32>}, {pipeline_mode = #tpu.pipeline_mode<synchronous>, transform_indices = @transform_4, window_bounds = array<i64: 1, 32>}, {pipeline_mode = #tpu.pipeline_mode<synchronous>, transform_indices = @transform_5, window_bounds = array<i64: 32, 16>}, {pipeline_mode = #tpu.pipeline_mode<synchronous>, transform_indices = @transform_6, window_bounds = array<i64: 1, 16>}, {pipeline_mode = #tpu.pipeline_mode<synchronous>, transform_indices = @transform_7, window_bounds = array<i64: 192, 32>}, {pipeline_mode = #tpu.pipeline_mode<synchronous>, transform_indices = @transform_8, window_bounds = array<i64: 1, 32>}, {pipeline_mode = #tpu.pipeline_mode<synchronous>, transform_indices = @transform_9, window_bounds = array<i64: 1, 32>}, {pipeline_mode = #tpu.pipeline_mode<synchronous>, transform_indices = @transform_10, window_bounds = array<i64: 1, 32>}, {pipeline_mode = #tpu.pipeline_mode<synchronous>, transform_indices = @transform_11, window_bounds = array<i64: 32, 16>}, {pipeline_mode = #tpu.pipeline_mode<synchronous>, transform_indices = @transform_12, window_bounds = array<i64: 1, 16>}, {pipeline_mode = #tpu.pipeline_mode<synchronous>, transform_indices = @transform_13, window_bounds = array<i64: 32, 16>}, {pipeline_mode = #tpu.pipeline_mode<synchronous>, transform_indices = @transform_14, window_bounds = array<i64: 1, 16>}, {pipeline_mode = #tpu.pipeline_mode<synchronous>, transform_indices = @transform_15, window_bounds = array<i64: 16, 2>}, {pipeline_mode = #tpu.pipeline_mode<synchronous>, transform_indices = @transform_16, window_bounds = array<i64: 1, 2>}, {transform_indices = @transform_17, window_bounds = array<i64: 8, 2>}]} {
    %0 = tpu.iota {dimensions = array<i32: 0>} : vector<8x8xi32>
    %1 = tpu.iota {dimensions = array<i32: 1>} : vector<8x8xi32>
    %2 = tpu.iota {dimensions = array<i32: 0>} : vector<8x1xi32>
    %c8_i32 = arith.constant 8 : i32
    %3 = arith.muli %arg0, %c8_i32 : i32
    %c0_i32 = arith.constant 0 : i32
    %4 = arith.addi %3, %c0_i32 : i32
    %5 = arith.index_cast %4 : i32 to index
    %c0 = arith.constant 0 : index
    %6 = memref.load %arg1[%5, %c0] : memref<16x5xi32, #tpu.memory_space<smem>>
    %7 = arith.index_cast %4 : i32 to index
    %c1 = arith.constant 1 : index
    %8 = memref.load %arg1[%7, %c1] : memref<16x5xi32, #tpu.memory_space<smem>>
    %9 = arith.index_cast %4 : i32 to index
    %c2 = arith.constant 2 : index
    %10 = memref.load %arg1[%9, %c2] : memref<16x5xi32, #tpu.memory_space<smem>>
    %11 = arith.index_cast %4 : i32 to index
    %c3 = arith.constant 3 : index
    %12 = memref.load %arg1[%11, %c3] : memref<16x5xi32, #tpu.memory_space<smem>>
    %13 = arith.index_cast %4 : i32 to index
    %c4 = arith.constant 4 : index
    %14 = memref.load %arg1[%13, %c4] : memref<16x5xi32, #tpu.memory_space<smem>>
    %c0_i32_0 = arith.constant 0 : i32
    %15 = vector.broadcast %c0_i32_0 : i32 to vector<8x8xi32>
    %16 = arith.cmpi eq, %0, %15 : vector<8x8xi32>
    %17 = vector.broadcast %6 : i32 to vector<8x8xi32>
    %18 = arith.cmpi eq, %1, %17 : vector<8x8xi32>
    %19 = arith.andi %16, %18 : vector<8x8xi1>
    %c1_i32 = arith.constant 1 : i32
    %20 = arith.subi %8, %c1_i32 : i32
    %c1_i32_1 = arith.constant 1 : i32
    %21 = vector.broadcast %c1_i32_1 : i32 to vector<8x8xi32>
    %22 = arith.cmpi eq, %0, %21 : vector<8x8xi32>
    %23 = vector.broadcast %20 : i32 to vector<8x8xi32>
    %24 = arith.cmpi eq, %1, %23 : vector<8x8xi32>
    %25 = arith.andi %22, %24 : vector<8x8xi1>
    %26 = arith.ori %19, %25 : vector<8x8xi1>
    %c2_i32 = arith.constant 2 : i32
    %27 = vector.broadcast %c2_i32 : i32 to vector<8x8xi32>
    %28 = arith.cmpi eq, %0, %27 : vector<8x8xi32>
    %29 = vector.broadcast %6 : i32 to vector<8x8xi32>
    %30 = arith.cmpi sge, %1, %29 : vector<8x8xi32>
    %31 = vector.broadcast %8 : i32 to vector<8x8xi32>
    %32 = arith.cmpi slt, %1, %31 : vector<8x8xi32>
    %33 = arith.andi %30, %32 : vector<8x8xi1>
    %34 = arith.andi %28, %33 : vector<8x8xi1>
    %35 = arith.ori %26, %34 : vector<8x8xi1>
    %c3_i32 = arith.constant 3 : i32
    %36 = vector.broadcast %c3_i32 : i32 to vector<8x8xi32>
    %37 = arith.cmpi eq, %0, %36 : vector<8x8xi32>
    %38 = vector.broadcast %10 : i32 to vector<8x8xi32>
    %39 = arith.cmpi eq, %1, %38 : vector<8x8xi32>
    %40 = arith.andi %37, %39 : vector<8x8xi1>
    %41 = arith.ori %35, %40 : vector<8x8xi1>
    %c1_i32_2 = arith.constant 1 : i32
    %42 = arith.subi %12, %c1_i32_2 : i32
    %c4_i32 = arith.constant 4 : i32
    %43 = vector.broadcast %c4_i32 : i32 to vector<8x8xi32>
    %44 = arith.cmpi eq, %0, %43 : vector<8x8xi32>
    %45 = vector.broadcast %42 : i32 to vector<8x8xi32>
    %46 = arith.cmpi eq, %1, %45 : vector<8x8xi32>
    %47 = arith.andi %44, %46 : vector<8x8xi1>
    %48 = arith.ori %41, %47 : vector<8x8xi1>
    %c5_i32 = arith.constant 5 : i32
    %49 = vector.broadcast %c5_i32 : i32 to vector<8x8xi32>
    %50 = arith.cmpi eq, %0, %49 : vector<8x8xi32>
    %51 = vector.broadcast %10 : i32 to vector<8x8xi32>
    %52 = arith.cmpi sge, %1, %51 : vector<8x8xi32>
    %53 = vector.broadcast %12 : i32 to vector<8x8xi32>
    %54 = arith.cmpi slt, %1, %53 : vector<8x8xi32>
    %55 = arith.andi %52, %54 : vector<8x8xi1>
    %56 = arith.andi %50, %55 : vector<8x8xi1>
    %57 = arith.ori %48, %56 : vector<8x8xi1>
    %c6_i32 = arith.constant 6 : i32
    %58 = vector.broadcast %c6_i32 : i32 to vector<8x8xi32>
    %59 = arith.cmpi eq, %0, %58 : vector<8x8xi32>
    %60 = vector.broadcast %14 : i32 to vector<8x8xi32>
    %61 = arith.cmpi eq, %1, %60 : vector<8x8xi32>
    %62 = arith.andi %59, %61 : vector<8x8xi1>
    %63 = arith.ori %57, %62 : vector<8x8xi1>
    %64 = arith.extui %63 : vector<8x8xi1> to vector<8x8xi32>
    %65 = arith.sitofp %64 : vector<8x8xi32> to vector<8x8xf32>
    %66 = arith.truncf %65 : vector<8x8xf32> to vector<8x8xbf16>
    %c0_3 = arith.constant 0 : index
    %c0_4 = arith.constant 0 : index
    %c0_5 = arith.constant 0 : index
    %67 = vector.load %arg2[%c0_3, %c0_4, %c0_5] : memref<8x8x32xbf16, #tpu.memory_space<vmem>>, vector<1x8x32xbf16>
    %68 = vector.shape_cast %67 : vector<1x8x32xbf16> to vector<8x32xbf16>
    %cst = arith.constant dense<0.000000e+00> : vector<8x32xf32>
    %69 = tpu.matmul %66, %68, %cst {dimension_numbers = #tpu.dot_dimension_numbers<[1], [0], [0], [1], [0, 0, 1, 1], [], []>} : vector<8x8xbf16>, vector<8x32xbf16>, vector<8x32xf32> -> vector<8x32xf32>
    %70 = arith.subi %8, %6 : i32
    %71 = arith.sitofp %70 : i32 to f32
    %cst_6 = arith.constant 1.000000e+00 : f32
    %72 = arith.divf %cst_6, %71 : f32
    %73 = arith.subi %12, %10 : i32
    %74 = arith.sitofp %73 : i32 to f32
    %cst_7 = arith.constant 1.000000e+00 : f32
    %75 = arith.divf %cst_7, %74 : f32
    %c2_i32_8 = arith.constant 2 : i32
    %76 = vector.broadcast %c2_i32_8 : i32 to vector<8x1xi32>
    %77 = arith.cmpi eq, %2, %76 : vector<8x1xi32>
    %c5_i32_9 = arith.constant 5 : i32
    %78 = vector.broadcast %c5_i32_9 : i32 to vector<8x1xi32>
    %79 = arith.cmpi eq, %2, %78 : vector<8x1xi32>
    %cst_10 = arith.constant 1.000000e+00 : f32
    %80 = vector.broadcast %75 : f32 to vector<8x1xf32>
    %81 = vector.broadcast %cst_10 : f32 to vector<8x1xf32>
    %82 = arith.select %79, %80, %81 : vector<8x1xi1>, vector<8x1xf32>
    %83 = vector.broadcast %72 : f32 to vector<8x1xf32>
    %84 = arith.select %77, %83, %82 : vector<8x1xi1>, vector<8x1xf32>
    %85 = vector.broadcast %84 : vector<8x1xf32> to vector<8x32xf32>
    %86 = arith.mulf %69, %85 : vector<8x32xf32>
    %c0_11 = arith.constant 0 : index
    %c0_12 = arith.constant 0 : index
    %87 = vector.load %arg20[%c0_11, %c0_12] : memref<64x32xf32, #tpu.memory_space<vmem>>, vector<8x32xf32>
    tpu.vector_store %arg20[%c0_11, %c0_12], %86 {strides = array<i32>} : memref<64x32xf32, #tpu.memory_space<vmem>>, vector<8x32xf32>,
    %c8_i32_13 = arith.constant 8 : i32
    %88 = arith.muli %arg0, %c8_i32_13 : i32
    %c1_i32_14 = arith.constant 1 : i32
    %89 = arith.addi %88, %c1_i32_14 : i32
    %90 = arith.index_cast %89 : i32 to index
    %c0_15 = arith.constant 0 : index
    %91 = memref.load %arg1[%90, %c0_15] : memref<16x5xi32, #tpu.memory_space<smem>>
    %92 = arith.index_cast %89 : i32 to index
    %c1_16 = arith.constant 1 : index
    %93 = memref.load %arg1[%92, %c1_16] : memref<16x5xi32, #tpu.memory_space<smem>>
    %94 = arith.index_cast %89 : i32 to index
    %c2_17 = arith.constant 2 : index
    %95 = memref.load %arg1[%94, %c2_17] : memref<16x5xi32, #tpu.memory_space<smem>>
    %96 = arith.index_cast %89 : i32 to index
    %c3_18 = arith.constant 3 : index
    %97 = memref.load %arg1[%96, %c3_18] : memref<16x5xi32, #tpu.memory_space<smem>>
    %98 = arith.index_cast %89 : i32 to index
    %c4_19 = arith.constant 4 : index
    %99 = memref.load %arg1[%98, %c4_19] : memref<16x5xi32, #tpu.memory_space<smem>>
    %c0_i32_20 = arith.constant 0 : i32
    %100 = vector.broadcast %c0_i32_20 : i32 to vector<8x8xi32>
    %101 = arith.cmpi eq, %0, %100 : vector<8x8xi32>
    %102 = vector.broadcast %91 : i32 to vector<8x8xi32>
    %103 = arith.cmpi eq, %1, %102 : vector<8x8xi32>
    %104 = arith.andi %101, %103 : vector<8x8xi1>
    %c1_i32_21 = arith.constant 1 : i32
    %105 = arith.subi %93, %c1_i32_21 : i32
    %c1_i32_22 = arith.constant 1 : i32
    %106 = vector.broadcast %c1_i32_22 : i32 to vector<8x8xi32>
    %107 = arith.cmpi eq, %0, %106 : vector<8x8xi32>
    %108 = vector.broadcast %105 : i32 to vector<8x8xi32>
    %109 = arith.cmpi eq, %1, %108 : vector<8x8xi32>
    %110 = arith.andi %107, %109 : vector<8x8xi1>
    %111 = arith.ori %104, %110 : vector<8x8xi1>
    %c2_i32_23 = arith.constant 2 : i32
    %112 = vector.broadcast %c2_i32_23 : i32 to vector<8x8xi32>
    %113 = arith.cmpi eq, %0, %112 : vector<8x8xi32>
    %114 = vector.broadcast %91 : i32 to vector<8x8xi32>
    %115 = arith.cmpi sge, %1, %114 : vector<8x8xi32>
    %116 = vector.broadcast %93 : i32 to vector<8x8xi32>
    %117 = arith.cmpi slt, %1, %116 : vector<8x8xi32>
    %118 = arith.andi %115, %117 : vector<8x8xi1>
    %119 = arith.andi %113, %118 : vector<8x8xi1>
    %120 = arith.ori %111, %119 : vector<8x8xi1>
    %c3_i32_24 = arith.constant 3 : i32
    %121 = vector.broadcast %c3_i32_24 : i32 to vector<8x8xi32>
    %122 = arith.cmpi eq, %0, %121 : vector<8x8xi32>
    %123 = vector.broadcast %95 : i32 to vector<8x8xi32>
    %124 = arith.cmpi eq, %1, %123 : vector<8x8xi32>
    %125 = arith.andi %122, %124 : vector<8x8xi1>
    %126 = arith.ori %120, %125 : vector<8x8xi1>
    %c1_i32_25 = arith.constant 1 : i32
    %127 = arith.subi %97, %c1_i32_25 : i32
    %c4_i32_26 = arith.constant 4 : i32
    %128 = vector.broadcast %c4_i32_26 : i32 to vector<8x8xi32>
    %129 = arith.cmpi eq, %0, %128 : vector<8x8xi32>
    %130 = vector.broadcast %127 : i32 to vector<8x8xi32>
    %131 = arith.cmpi eq, %1, %130 : vector<8x8xi32>
    %132 = arith.andi %129, %131 : vector<8x8xi1>
    %133 = arith.ori %126, %132 : vector<8x8xi1>
    %c5_i32_27 = arith.constant 5 : i32
    %134 = vector.broadcast %c5_i32_27 : i32 to vector<8x8xi32>
    %135 = arith.cmpi eq, %0, %134 : vector<8x8xi32>
    %136 = vector.broadcast %95 : i32 to vector<8x8xi32>
    %137 = arith.cmpi sge, %1, %136 : vector<8x8xi32>
    %138 = vector.broadcast %97 : i32 to vector<8x8xi32>
    %139 = arith.cmpi slt, %1, %138 : vector<8x8xi32>
    %140 = arith.andi %137, %139 : vector<8x8xi1>
    %141 = arith.andi %135, %140 : vector<8x8xi1>
    %142 = arith.ori %133, %141 : vector<8x8xi1>
    %c6_i32_28 = arith.constant 6 : i32
    %143 = vector.broadcast %c6_i32_28 : i32 to vector<8x8xi32>
    %144 = arith.cmpi eq, %0, %143 : vector<8x8xi32>
    %145 = vector.broadcast %99 : i32 to vector<8x8xi32>
    %146 = arith.cmpi eq, %1, %145 : vector<8x8xi32>
    %147 = arith.andi %144, %146 : vector<8x8xi1>
    %148 = arith.ori %142, %147 : vector<8x8xi1>
    %149 = arith.extui %148 : vector<8x8xi1> to vector<8x8xi32>
    %150 = arith.sitofp %149 : vector<8x8xi32> to vector<8x8xf32>
    %151 = arith.truncf %150 : vector<8x8xf32> to vector<8x8xbf16>
    %c1_29 = arith.constant 1 : index
    %c0_30 = arith.constant 0 : index
    %c0_31 = arith.constant 0 : index
    %152 = vector.load %arg2[%c1_29, %c0_30, %c0_31] : memref<8x8x32xbf16, #tpu.memory_space<vmem>>, vector<1x8x32xbf16>
    %153 = vector.shape_cast %152 : vector<1x8x32xbf16> to vector<8x32xbf16>
    %cst_32 = arith.constant dense<0.000000e+00> : vector<8x32xf32>
    %154 = tpu.matmul %151, %153, %cst_32 {dimension_numbers = #tpu.dot_dimension_numbers<[1], [0], [0], [1], [0, 0, 1, 1], [], []>} : vector<8x8xbf16>, vector<8x32xbf16>, vector<8x32xf32> -> vector<8x32xf32>
    %155 = arith.subi %93, %91 : i32
    %156 = arith.sitofp %155 : i32 to f32
    %cst_33 = arith.constant 1.000000e+00 : f32
    %157 = arith.divf %cst_33, %156 : f32
    %158 = arith.subi %97, %95 : i32
    %159 = arith.sitofp %158 : i32 to f32
    %cst_34 = arith.constant 1.000000e+00 : f32
    %160 = arith.divf %cst_34, %159 : f32
    %c2_i32_35 = arith.constant 2 : i32
    %161 = vector.broadcast %c2_i32_35 : i32 to vector<8x1xi32>
    %162 = arith.cmpi eq, %2, %161 : vector<8x1xi32>
    %c5_i32_36 = arith.constant 5 : i32
    %163 = vector.broadcast %c5_i32_36 : i32 to vector<8x1xi32>
    %164 = arith.cmpi eq, %2, %163 : vector<8x1xi32>
    %cst_37 = arith.constant 1.000000e+00 : f32
    %165 = vector.broadcast %160 : f32 to vector<8x1xf32>
    %166 = vector.broadcast %cst_37 : f32 to vector<8x1xf32>
    %167 = arith.select %164, %165, %166 : vector<8x1xi1>, vector<8x1xf32>
    %168 = vector.broadcast %157 : f32 to vector<8x1xf32>
    %169 = arith.select %162, %168, %167 : vector<8x1xi1>, vector<8x1xf32>
    %170 = vector.broadcast %169 : vector<8x1xf32> to vector<8x32xf32>
    %171 = arith.mulf %154, %170 : vector<8x32xf32>
    %c8 = arith.constant 8 : index
    %c0_38 = arith.constant 0 : index
    %172 = vector.load %arg20[%c8, %c0_38] : memref<64x32xf32, #tpu.memory_space<vmem>>, vector<8x32xf32>
    tpu.vector_store %arg20[%c8, %c0_38], %171 {strides = array<i32>} : memref<64x32xf32, #tpu.memory_space<vmem>>, vector<8x32xf32>,
    %c8_i32_39 = arith.constant 8 : i32
    %173 = arith.muli %arg0, %c8_i32_39 : i32
    %c2_i32_40 = arith.constant 2 : i32
    %174 = arith.addi %173, %c2_i32_40 : i32
    %175 = arith.index_cast %174 : i32 to index
    %c0_41 = arith.constant 0 : index
    %176 = memref.load %arg1[%175, %c0_41] : memref<16x5xi32, #tpu.memory_space<smem>>
    %177 = arith.index_cast %174 : i32 to index
    %c1_42 = arith.constant 1 : index
    %178 = memref.load %arg1[%177, %c1_42] : memref<16x5xi32, #tpu.memory_space<smem>>
    %179 = arith.index_cast %174 : i32 to index
    %c2_43 = arith.constant 2 : index
    %180 = memref.load %arg1[%179, %c2_43] : memref<16x5xi32, #tpu.memory_space<smem>>
    %181 = arith.index_cast %174 : i32 to index
    %c3_44 = arith.constant 3 : index
    %182 = memref.load %arg1[%181, %c3_44] : memref<16x5xi32, #tpu.memory_space<smem>>
    %183 = arith.index_cast %174 : i32 to index
    %c4_45 = arith.constant 4 : index
    %184 = memref.load %arg1[%183, %c4_45] : memref<16x5xi32, #tpu.memory_space<smem>>
    %c0_i32_46 = arith.constant 0 : i32
    %185 = vector.broadcast %c0_i32_46 : i32 to vector<8x8xi32>
    %186 = arith.cmpi eq, %0, %185 : vector<8x8xi32>
    %187 = vector.broadcast %176 : i32 to vector<8x8xi32>
    %188 = arith.cmpi eq, %1, %187 : vector<8x8xi32>
    %189 = arith.andi %186, %188 : vector<8x8xi1>
    %c1_i32_47 = arith.constant 1 : i32
    %190 = arith.subi %178, %c1_i32_47 : i32
    %c1_i32_48 = arith.constant 1 : i32
    %191 = vector.broadcast %c1_i32_48 : i32 to vector<8x8xi32>
    %192 = arith.cmpi eq, %0, %191 : vector<8x8xi32>
    %193 = vector.broadcast %190 : i32 to vector<8x8xi32>
    %194 = arith.cmpi eq, %1, %193 : vector<8x8xi32>
    %195 = arith.andi %192, %194 : vector<8x8xi1>
    %196 = arith.ori %189, %195 : vector<8x8xi1>
    %c2_i32_49 = arith.constant 2 : i32
    %197 = vector.broadcast %c2_i32_49 : i32 to vector<8x8xi32>
    %198 = arith.cmpi eq, %0, %197 : vector<8x8xi32>
    %199 = vector.broadcast %176 : i32 to vector<8x8xi32>
    %200 = arith.cmpi sge, %1, %199 : vector<8x8xi32>
    %201 = vector.broadcast %178 : i32 to vector<8x8xi32>
    %202 = arith.cmpi slt, %1, %201 : vector<8x8xi32>
    %203 = arith.andi %200, %202 : vector<8x8xi1>
    %204 = arith.andi %198, %203 : vector<8x8xi1>
    %205 = arith.ori %196, %204 : vector<8x8xi1>
    %c3_i32_50 = arith.constant 3 : i32
    %206 = vector.broadcast %c3_i32_50 : i32 to vector<8x8xi32>
    %207 = arith.cmpi eq, %0, %206 : vector<8x8xi32>
    %208 = vector.broadcast %180 : i32 to vector<8x8xi32>
    %209 = arith.cmpi eq, %1, %208 : vector<8x8xi32>
    %210 = arith.andi %207, %209 : vector<8x8xi1>
    %211 = arith.ori %205, %210 : vector<8x8xi1>
    %c1_i32_51 = arith.constant 1 : i32
    %212 = arith.subi %182, %c1_i32_51 : i32
    %c4_i32_52 = arith.constant 4 : i32
    %213 = vector.broadcast %c4_i32_52 : i32 to vector<8x8xi32>
    %214 = arith.cmpi eq, %0, %213 : vector<8x8xi32>
    %215 = vector.broadcast %212 : i32 to vector<8x8xi32>
    %216 = arith.cmpi eq, %1, %215 : vector<8x8xi32>
    %217 = arith.andi %214, %216 : vector<8x8xi1>
    %218 = arith.ori %211, %217 : vector<8x8xi1>
    %c5_i32_53 = arith.constant 5 : i32
    %219 = vector.broadcast %c5_i32_53 : i32 to vector<8x8xi32>
    %220 = arith.cmpi eq, %0, %219 : vector<8x8xi32>
    %221 = vector.broadcast %180 : i32 to vector<8x8xi32>
    %222 = arith.cmpi sge, %1, %221 : vector<8x8xi32>
    %223 = vector.broadcast %182 : i32 to vector<8x8xi32>
    %224 = arith.cmpi slt, %1, %223 : vector<8x8xi32>
    %225 = arith.andi %222, %224 : vector<8x8xi1>
    %226 = arith.andi %220, %225 : vector<8x8xi1>
    %227 = arith.ori %218, %226 : vector<8x8xi1>
    %c6_i32_54 = arith.constant 6 : i32
    %228 = vector.broadcast %c6_i32_54 : i32 to vector<8x8xi32>
    %229 = arith.cmpi eq, %0, %228 : vector<8x8xi32>
    %230 = vector.broadcast %184 : i32 to vector<8x8xi32>
    %231 = arith.cmpi eq, %1, %230 : vector<8x8xi32>
    %232 = arith.andi %229, %231 : vector<8x8xi1>
    %233 = arith.ori %227, %232 : vector<8x8xi1>
    %234 = arith.extui %233 : vector<8x8xi1> to vector<8x8xi32>
    %235 = arith.sitofp %234 : vector<8x8xi32> to vector<8x8xf32>
    %236 = arith.truncf %235 : vector<8x8xf32> to vector<8x8xbf16>
    %c2_55 = arith.constant 2 : index
    %c0_56 = arith.constant 0 : index
    %c0_57 = arith.constant 0 : index
    %237 = vector.load %arg2[%c2_55, %c0_56, %c0_57] : memref<8x8x32xbf16, #tpu.memory_space<vmem>>, vector<1x8x32xbf16>
    %238 = vector.shape_cast %237 : vector<1x8x32xbf16> to vector<8x32xbf16>
    %cst_58 = arith.constant dense<0.000000e+00> : vector<8x32xf32>
    %239 = tpu.matmul %236, %238, %cst_58 {dimension_numbers = #tpu.dot_dimension_numbers<[1], [0], [0], [1], [0, 0, 1, 1], [], []>} : vector<8x8xbf16>, vector<8x32xbf16>, vector<8x32xf32> -> vector<8x32xf32>
    %240 = arith.subi %178, %176 : i32
    %241 = arith.sitofp %240 : i32 to f32
    %cst_59 = arith.constant 1.000000e+00 : f32
    %242 = arith.divf %cst_59, %241 : f32
    %243 = arith.subi %182, %180 : i32
    %244 = arith.sitofp %243 : i32 to f32
    %cst_60 = arith.constant 1.000000e+00 : f32
    %245 = arith.divf %cst_60, %244 : f32
    %c2_i32_61 = arith.constant 2 : i32
    %246 = vector.broadcast %c2_i32_61 : i32 to vector<8x1xi32>
    %247 = arith.cmpi eq, %2, %246 : vector<8x1xi32>
    %c5_i32_62 = arith.constant 5 : i32
    %248 = vector.broadcast %c5_i32_62 : i32 to vector<8x1xi32>
    %249 = arith.cmpi eq, %2, %248 : vector<8x1xi32>
    %cst_63 = arith.constant 1.000000e+00 : f32
    %250 = vector.broadcast %245 : f32 to vector<8x1xf32>
    %251 = vector.broadcast %cst_63 : f32 to vector<8x1xf32>
    %252 = arith.select %249, %250, %251 : vector<8x1xi1>, vector<8x1xf32>
    %253 = vector.broadcast %242 : f32 to vector<8x1xf32>
    %254 = arith.select %247, %253, %252 : vector<8x1xi1>, vector<8x1xf32>
    %255 = vector.broadcast %254 : vector<8x1xf32> to vector<8x32xf32>
    %256 = arith.mulf %239, %255 : vector<8x32xf32>
    %c16 = arith.constant 16 : index
    %c0_64 = arith.constant 0 : index
    %257 = vector.load %arg20[%c16, %c0_64] : memref<64x32xf32, #tpu.memory_space<vmem>>, vector<8x32xf32>
    tpu.vector_store %arg20[%c16, %c0_64], %256 {strides = array<i32>} : memref<64x32xf32, #tpu.memory_space<vmem>>, vector<8x32xf32>,
    %c8_i32_65 = arith.constant 8 : i32
    %258 = arith.muli %arg0, %c8_i32_65 : i32
    %c3_i32_66 = arith.constant 3 : i32
    %259 = arith.addi %258, %c3_i32_66 : i32
    %260 = arith.index_cast %259 : i32 to index
    %c0_67 = arith.constant 0 : index
    %261 = memref.load %arg1[%260, %c0_67] : memref<16x5xi32, #tpu.memory_space<smem>>
    %262 = arith.index_cast %259 : i32 to index
    %c1_68 = arith.constant 1 : index
    %263 = memref.load %arg1[%262, %c1_68] : memref<16x5xi32, #tpu.memory_space<smem>>
    %264 = arith.index_cast %259 : i32 to index
    %c2_69 = arith.constant 2 : index
    %265 = memref.load %arg1[%264, %c2_69] : memref<16x5xi32, #tpu.memory_space<smem>>
    %266 = arith.index_cast %259 : i32 to index
    %c3_70 = arith.constant 3 : index
    %267 = memref.load %arg1[%266, %c3_70] : memref<16x5xi32, #tpu.memory_space<smem>>
    %268 = arith.index_cast %259 : i32 to index
    %c4_71 = arith.constant 4 : index
    %269 = memref.load %arg1[%268, %c4_71] : memref<16x5xi32, #tpu.memory_space<smem>>
    %c0_i32_72 = arith.constant 0 : i32
    %270 = vector.broadcast %c0_i32_72 : i32 to vector<8x8xi32>
    %271 = arith.cmpi eq, %0, %270 : vector<8x8xi32>
    %272 = vector.broadcast %261 : i32 to vector<8x8xi32>
    %273 = arith.cmpi eq, %1, %272 : vector<8x8xi32>
    %274 = arith.andi %271, %273 : vector<8x8xi1>
    %c1_i32_73 = arith.constant 1 : i32
    %275 = arith.subi %263, %c1_i32_73 : i32
    %c1_i32_74 = arith.constant 1 : i32
    %276 = vector.broadcast %c1_i32_74 : i32 to vector<8x8xi32>
    %277 = arith.cmpi eq, %0, %276 : vector<8x8xi32>
    %278 = vector.broadcast %275 : i32 to vector<8x8xi32>
    %279 = arith.cmpi eq, %1, %278 : vector<8x8xi32>
    %280 = arith.andi %277, %279 : vector<8x8xi1>
    %281 = arith.ori %274, %280 : vector<8x8xi1>
    %c2_i32_75 = arith.constant 2 : i32
    %282 = vector.broadcast %c2_i32_75 : i32 to vector<8x8xi32>
    %283 = arith.cmpi eq, %0, %282 : vector<8x8xi32>
    %284 = vector.broadcast %261 : i32 to vector<8x8xi32>
    %285 = arith.cmpi sge, %1, %284 : vector<8x8xi32>
    %286 = vector.broadcast %263 : i32 to vector<8x8xi32>
    %287 = arith.cmpi slt, %1, %286 : vector<8x8xi32>
    %288 = arith.andi %285, %287 : vector<8x8xi1>
    %289 = arith.andi %283, %288 : vector<8x8xi1>
    %290 = arith.ori %281, %289 : vector<8x8xi1>
    %c3_i32_76 = arith.constant 3 : i32
    %291 = vector.broadcast %c3_i32_76 : i32 to vector<8x8xi32>
    %292 = arith.cmpi eq, %0, %291 : vector<8x8xi32>
    %293 = vector.broadcast %265 : i32 to vector<8x8xi32>
    %294 = arith.cmpi eq, %1, %293 : vector<8x8xi32>
    %295 = arith.andi %292, %294 : vector<8x8xi1>
    %296 = arith.ori %290, %295 : vector<8x8xi1>
    %c1_i32_77 = arith.constant 1 : i32
    %297 = arith.subi %267, %c1_i32_77 : i32
    %c4_i32_78 = arith.constant 4 : i32
    %298 = vector.broadcast %c4_i32_78 : i32 to vector<8x8xi32>
    %299 = arith.cmpi eq, %0, %298 : vector<8x8xi32>
    %300 = vector.broadcast %297 : i32 to vector<8x8xi32>
    %301 = arith.cmpi eq, %1, %300 : vector<8x8xi32>
    %302 = arith.andi %299, %301 : vector<8x8xi1>
    %303 = arith.ori %296, %302 : vector<8x8xi1>
    %c5_i32_79 = arith.constant 5 : i32
    %304 = vector.broadcast %c5_i32_79 : i32 to vector<8x8xi32>
    %305 = arith.cmpi eq, %0, %304 : vector<8x8xi32>
    %306 = vector.broadcast %265 : i32 to vector<8x8xi32>
    %307 = arith.cmpi sge, %1, %306 : vector<8x8xi32>
    %308 = vector.broadcast %267 : i32 to vector<8x8xi32>
    %309 = arith.cmpi slt, %1, %308 : vector<8x8xi32>
    %310 = arith.andi %307, %309 : vector<8x8xi1>
    %311 = arith.andi %305, %310 : vector<8x8xi1>
    %312 = arith.ori %303, %311 : vector<8x8xi1>
    %c6_i32_80 = arith.constant 6 : i32
    %313 = vector.broadcast %c6_i32_80 : i32 to vector<8x8xi32>
    %314 = arith.cmpi eq, %0, %313 : vector<8x8xi32>
    %315 = vector.broadcast %269 : i32 to vector<8x8xi32>
    %316 = arith.cmpi eq, %1, %315 : vector<8x8xi32>
    %317 = arith.andi %314, %316 : vector<8x8xi1>
    %318 = arith.ori %312, %317 : vector<8x8xi1>
    %319 = arith.extui %318 : vector<8x8xi1> to vector<8x8xi32>
    %320 = arith.sitofp %319 : vector<8x8xi32> to vector<8x8xf32>
    %321 = arith.truncf %320 : vector<8x8xf32> to vector<8x8xbf16>
    %c3_81 = arith.constant 3 : index
    %c0_82 = arith.constant 0 : index
    %c0_83 = arith.constant 0 : index
    %322 = vector.load %arg2[%c3_81, %c0_82, %c0_83] : memref<8x8x32xbf16, #tpu.memory_space<vmem>>, vector<1x8x32xbf16>
    %323 = vector.shape_cast %322 : vector<1x8x32xbf16> to vector<8x32xbf16>
    %cst_84 = arith.constant dense<0.000000e+00> : vector<8x32xf32>
    %324 = tpu.matmul %321, %323, %cst_84 {dimension_numbers = #tpu.dot_dimension_numbers<[1], [0], [0], [1], [0, 0, 1, 1], [], []>} : vector<8x8xbf16>, vector<8x32xbf16>, vector<8x32xf32> -> vector<8x32xf32>
    %325 = arith.subi %263, %261 : i32
    %326 = arith.sitofp %325 : i32 to f32
    %cst_85 = arith.constant 1.000000e+00 : f32
    %327 = arith.divf %cst_85, %326 : f32
    %328 = arith.subi %267, %265 : i32
    %329 = arith.sitofp %328 : i32 to f32
    %cst_86 = arith.constant 1.000000e+00 : f32
    %330 = arith.divf %cst_86, %329 : f32
    %c2_i32_87 = arith.constant 2 : i32
    %331 = vector.broadcast %c2_i32_87 : i32 to vector<8x1xi32>
    %332 = arith.cmpi eq, %2, %331 : vector<8x1xi32>
    %c5_i32_88 = arith.constant 5 : i32
    %333 = vector.broadcast %c5_i32_88 : i32 to vector<8x1xi32>
    %334 = arith.cmpi eq, %2, %333 : vector<8x1xi32>
    %cst_89 = arith.constant 1.000000e+00 : f32
    %335 = vector.broadcast %330 : f32 to vector<8x1xf32>
    %336 = vector.broadcast %cst_89 : f32 to vector<8x1xf32>
    %337 = arith.select %334, %335, %336 : vector<8x1xi1>, vector<8x1xf32>
    %338 = vector.broadcast %327 : f32 to vector<8x1xf32>
    %339 = arith.select %332, %338, %337 : vector<8x1xi1>, vector<8x1xf32>
    %340 = vector.broadcast %339 : vector<8x1xf32> to vector<8x32xf32>
    %341 = arith.mulf %324, %340 : vector<8x32xf32>
    %c24 = arith.constant 24 : index
    %c0_90 = arith.constant 0 : index
    %342 = vector.load %arg20[%c24, %c0_90] : memref<64x32xf32, #tpu.memory_space<vmem>>, vector<8x32xf32>
    tpu.vector_store %arg20[%c24, %c0_90], %341 {strides = array<i32>} : memref<64x32xf32, #tpu.memory_space<vmem>>, vector<8x32xf32>,
    %c8_i32_91 = arith.constant 8 : i32
    %343 = arith.muli %arg0, %c8_i32_91 : i32
    %c4_i32_92 = arith.constant 4 : i32
    %344 = arith.addi %343, %c4_i32_92 : i32
    %345 = arith.index_cast %344 : i32 to index
    %c0_93 = arith.constant 0 : index
    %346 = memref.load %arg1[%345, %c0_93] : memref<16x5xi32, #tpu.memory_space<smem>>
    %347 = arith.index_cast %344 : i32 to index
    %c1_94 = arith.constant 1 : index
    %348 = memref.load %arg1[%347, %c1_94] : memref<16x5xi32, #tpu.memory_space<smem>>
    %349 = arith.index_cast %344 : i32 to index
    %c2_95 = arith.constant 2 : index
    %350 = memref.load %arg1[%349, %c2_95] : memref<16x5xi32, #tpu.memory_space<smem>>
    %351 = arith.index_cast %344 : i32 to index
    %c3_96 = arith.constant 3 : index
    %352 = memref.load %arg1[%351, %c3_96] : memref<16x5xi32, #tpu.memory_space<smem>>
    %353 = arith.index_cast %344 : i32 to index
    %c4_97 = arith.constant 4 : index
    %354 = memref.load %arg1[%353, %c4_97] : memref<16x5xi32, #tpu.memory_space<smem>>
    %c0_i32_98 = arith.constant 0 : i32
    %355 = vector.broadcast %c0_i32_98 : i32 to vector<8x8xi32>
    %356 = arith.cmpi eq, %0, %355 : vector<8x8xi32>
    %357 = vector.broadcast %346 : i32 to vector<8x8xi32>
    %358 = arith.cmpi eq, %1, %357 : vector<8x8xi32>
    %359 = arith.andi %356, %358 : vector<8x8xi1>
    %c1_i32_99 = arith.constant 1 : i32
    %360 = arith.subi %348, %c1_i32_99 : i32
    %c1_i32_100 = arith.constant 1 : i32
    %361 = vector.broadcast %c1_i32_100 : i32 to vector<8x8xi32>
    %362 = arith.cmpi eq, %0, %361 : vector<8x8xi32>
    %363 = vector.broadcast %360 : i32 to vector<8x8xi32>
    %364 = arith.cmpi eq, %1, %363 : vector<8x8xi32>
    %365 = arith.andi %362, %364 : vector<8x8xi1>
    %366 = arith.ori %359, %365 : vector<8x8xi1>
    %c2_i32_101 = arith.constant 2 : i32
    %367 = vector.broadcast %c2_i32_101 : i32 to vector<8x8xi32>
    %368 = arith.cmpi eq, %0, %367 : vector<8x8xi32>
    %369 = vector.broadcast %346 : i32 to vector<8x8xi32>
    %370 = arith.cmpi sge, %1, %369 : vector<8x8xi32>
    %371 = vector.broadcast %348 : i32 to vector<8x8xi32>
    %372 = arith.cmpi slt, %1, %371 : vector<8x8xi32>
    %373 = arith.andi %370, %372 : vector<8x8xi1>
    %374 = arith.andi %368, %373 : vector<8x8xi1>
    %375 = arith.ori %366, %374 : vector<8x8xi1>
    %c3_i32_102 = arith.constant 3 : i32
    %376 = vector.broadcast %c3_i32_102 : i32 to vector<8x8xi32>
    %377 = arith.cmpi eq, %0, %376 : vector<8x8xi32>
    %378 = vector.broadcast %350 : i32 to vector<8x8xi32>
    %379 = arith.cmpi eq, %1, %378 : vector<8x8xi32>
    %380 = arith.andi %377, %379 : vector<8x8xi1>
    %381 = arith.ori %375, %380 : vector<8x8xi1>
    %c1_i32_103 = arith.constant 1 : i32
    %382 = arith.subi %352, %c1_i32_103 : i32
    %c4_i32_104 = arith.constant 4 : i32
    %383 = vector.broadcast %c4_i32_104 : i32 to vector<8x8xi32>
    %384 = arith.cmpi eq, %0, %383 : vector<8x8xi32>
    %385 = vector.broadcast %382 : i32 to vector<8x8xi32>
    %386 = arith.cmpi eq, %1, %385 : vector<8x8xi32>
    %387 = arith.andi %384, %386 : vector<8x8xi1>
    %388 = arith.ori %381, %387 : vector<8x8xi1>
    %c5_i32_105 = arith.constant 5 : i32
    %389 = vector.broadcast %c5_i32_105 : i32 to vector<8x8xi32>
    %390 = arith.cmpi eq, %0, %389 : vector<8x8xi32>
    %391 = vector.broadcast %350 : i32 to vector<8x8xi32>
    %392 = arith.cmpi sge, %1, %391 : vector<8x8xi32>
    %393 = vector.broadcast %352 : i32 to vector<8x8xi32>
    %394 = arith.cmpi slt, %1, %393 : vector<8x8xi32>
    %395 = arith.andi %392, %394 : vector<8x8xi1>
    %396 = arith.andi %390, %395 : vector<8x8xi1>
    %397 = arith.ori %388, %396 : vector<8x8xi1>
    %c6_i32_106 = arith.constant 6 : i32
    %398 = vector.broadcast %c6_i32_106 : i32 to vector<8x8xi32>
    %399 = arith.cmpi eq, %0, %398 : vector<8x8xi32>
    %400 = vector.broadcast %354 : i32 to vector<8x8xi32>
    %401 = arith.cmpi eq, %1, %400 : vector<8x8xi32>
    %402 = arith.andi %399, %401 : vector<8x8xi1>
    %403 = arith.ori %397, %402 : vector<8x8xi1>
    %404 = arith.extui %403 : vector<8x8xi1> to vector<8x8xi32>
    %405 = arith.sitofp %404 : vector<8x8xi32> to vector<8x8xf32>
    %406 = arith.truncf %405 : vector<8x8xf32> to vector<8x8xbf16>
    %c4_107 = arith.constant 4 : index
    %c0_108 = arith.constant 0 : index
    %c0_109 = arith.constant 0 : index
    %407 = vector.load %arg2[%c4_107, %c0_108, %c0_109] : memref<8x8x32xbf16, #tpu.memory_space<vmem>>, vector<1x8x32xbf16>
    %408 = vector.shape_cast %407 : vector<1x8x32xbf16> to vector<8x32xbf16>
    %cst_110 = arith.constant dense<0.000000e+00> : vector<8x32xf32>
    %409 = tpu.matmul %406, %408, %cst_110 {dimension_numbers = #tpu.dot_dimension_numbers<[1], [0], [0], [1], [0, 0, 1, 1], [], []>} : vector<8x8xbf16>, vector<8x32xbf16>, vector<8x32xf32> -> vector<8x32xf32>
    %410 = arith.subi %348, %346 : i32
    %411 = arith.sitofp %410 : i32 to f32
    %cst_111 = arith.constant 1.000000e+00 : f32
    %412 = arith.divf %cst_111, %411 : f32
    %413 = arith.subi %352, %350 : i32
    %414 = arith.sitofp %413 : i32 to f32
    %cst_112 = arith.constant 1.000000e+00 : f32
    %415 = arith.divf %cst_112, %414 : f32
    %c2_i32_113 = arith.constant 2 : i32
    %416 = vector.broadcast %c2_i32_113 : i32 to vector<8x1xi32>
    %417 = arith.cmpi eq, %2, %416 : vector<8x1xi32>
    %c5_i32_114 = arith.constant 5 : i32
    %418 = vector.broadcast %c5_i32_114 : i32 to vector<8x1xi32>
    %419 = arith.cmpi eq, %2, %418 : vector<8x1xi32>
    %cst_115 = arith.constant 1.000000e+00 : f32
    %420 = vector.broadcast %415 : f32 to vector<8x1xf32>
    %421 = vector.broadcast %cst_115 : f32 to vector<8x1xf32>
    %422 = arith.select %419, %420, %421 : vector<8x1xi1>, vector<8x1xf32>
    %423 = vector.broadcast %412 : f32 to vector<8x1xf32>
    %424 = arith.select %417, %423, %422 : vector<8x1xi1>, vector<8x1xf32>
    %425 = vector.broadcast %424 : vector<8x1xf32> to vector<8x32xf32>
    %426 = arith.mulf %409, %425 : vector<8x32xf32>
    %c32 = arith.constant 32 : index
    %c0_116 = arith.constant 0 : index
    %427 = vector.load %arg20[%c32, %c0_116] : memref<64x32xf32, #tpu.memory_space<vmem>>, vector<8x32xf32>
    tpu.vector_store %arg20[%c32, %c0_116], %426 {strides = array<i32>} : memref<64x32xf32, #tpu.memory_space<vmem>>, vector<8x32xf32>,
    %c8_i32_117 = arith.constant 8 : i32
    %428 = arith.muli %arg0, %c8_i32_117 : i32
    %c5_i32_118 = arith.constant 5 : i32
    %429 = arith.addi %428, %c5_i32_118 : i32
    %430 = arith.index_cast %429 : i32 to index
    %c0_119 = arith.constant 0 : index
    %431 = memref.load %arg1[%430, %c0_119] : memref<16x5xi32, #tpu.memory_space<smem>>
    %432 = arith.index_cast %429 : i32 to index
    %c1_120 = arith.constant 1 : index
    %433 = memref.load %arg1[%432, %c1_120] : memref<16x5xi32, #tpu.memory_space<smem>>
    %434 = arith.index_cast %429 : i32 to index
    %c2_121 = arith.constant 2 : index
    %435 = memref.load %arg1[%434, %c2_121] : memref<16x5xi32, #tpu.memory_space<smem>>
    %436 = arith.index_cast %429 : i32 to index
    %c3_122 = arith.constant 3 : index
    %437 = memref.load %arg1[%436, %c3_122] : memref<16x5xi32, #tpu.memory_space<smem>>
    %438 = arith.index_cast %429 : i32 to index
    %c4_123 = arith.constant 4 : index
    %439 = memref.load %arg1[%438, %c4_123] : memref<16x5xi32, #tpu.memory_space<smem>>
    %c0_i32_124 = arith.constant 0 : i32
    %440 = vector.broadcast %c0_i32_124 : i32 to vector<8x8xi32>
    %441 = arith.cmpi eq, %0, %440 : vector<8x8xi32>
    %442 = vector.broadcast %431 : i32 to vector<8x8xi32>
    %443 = arith.cmpi eq, %1, %442 : vector<8x8xi32>
    %444 = arith.andi %441, %443 : vector<8x8xi1>
    %c1_i32_125 = arith.constant 1 : i32
    %445 = arith.subi %433, %c1_i32_125 : i32
    %c1_i32_126 = arith.constant 1 : i32
    %446 = vector.broadcast %c1_i32_126 : i32 to vector<8x8xi32>
    %447 = arith.cmpi eq, %0, %446 : vector<8x8xi32>
    %448 = vector.broadcast %445 : i32 to vector<8x8xi32>
    %449 = arith.cmpi eq, %1, %448 : vector<8x8xi32>
    %450 = arith.andi %447, %449 : vector<8x8xi1>
    %451 = arith.ori %444, %450 : vector<8x8xi1>
    %c2_i32_127 = arith.constant 2 : i32
    %452 = vector.broadcast %c2_i32_127 : i32 to vector<8x8xi32>
    %453 = arith.cmpi eq, %0, %452 : vector<8x8xi32>
    %454 = vector.broadcast %431 : i32 to vector<8x8xi32>
    %455 = arith.cmpi sge, %1, %454 : vector<8x8xi32>
    %456 = vector.broadcast %433 : i32 to vector<8x8xi32>
    %457 = arith.cmpi slt, %1, %456 : vector<8x8xi32>
    %458 = arith.andi %455, %457 : vector<8x8xi1>
    %459 = arith.andi %453, %458 : vector<8x8xi1>
    %460 = arith.ori %451, %459 : vector<8x8xi1>
    %c3_i32_128 = arith.constant 3 : i32
    %461 = vector.broadcast %c3_i32_128 : i32 to vector<8x8xi32>
    %462 = arith.cmpi eq, %0, %461 : vector<8x8xi32>
    %463 = vector.broadcast %435 : i32 to vector<8x8xi32>
    %464 = arith.cmpi eq, %1, %463 : vector<8x8xi32>
    %465 = arith.andi %462, %464 : vector<8x8xi1>
    %466 = arith.ori %460, %465 : vector<8x8xi1>
    %c1_i32_129 = arith.constant 1 : i32
    %467 = arith.subi %437, %c1_i32_129 : i32
    %c4_i32_130 = arith.constant 4 : i32
    %468 = vector.broadcast %c4_i32_130 : i32 to vector<8x8xi32>
    %469 = arith.cmpi eq, %0, %468 : vector<8x8xi32>
    %470 = vector.broadcast %467 : i32 to vector<8x8xi32>
    %471 = arith.cmpi eq, %1, %470 : vector<8x8xi32>
    %472 = arith.andi %469, %471 : vector<8x8xi1>
    %473 = arith.ori %466, %472 : vector<8x8xi1>
    %c5_i32_131 = arith.constant 5 : i32
    %474 = vector.broadcast %c5_i32_131 : i32 to vector<8x8xi32>
    %475 = arith.cmpi eq, %0, %474 : vector<8x8xi32>
    %476 = vector.broadcast %435 : i32 to vector<8x8xi32>
    %477 = arith.cmpi sge, %1, %476 : vector<8x8xi32>
    %478 = vector.broadcast %437 : i32 to vector<8x8xi32>
    %479 = arith.cmpi slt, %1, %478 : vector<8x8xi32>
    %480 = arith.andi %477, %479 : vector<8x8xi1>
    %481 = arith.andi %475, %480 : vector<8x8xi1>
    %482 = arith.ori %473, %481 : vector<8x8xi1>
    %c6_i32_132 = arith.constant 6 : i32
    %483 = vector.broadcast %c6_i32_132 : i32 to vector<8x8xi32>
    %484 = arith.cmpi eq, %0, %483 : vector<8x8xi32>
    %485 = vector.broadcast %439 : i32 to vector<8x8xi32>
    %486 = arith.cmpi eq, %1, %485 : vector<8x8xi32>
    %487 = arith.andi %484, %486 : vector<8x8xi1>
    %488 = arith.ori %482, %487 : vector<8x8xi1>
    %489 = arith.extui %488 : vector<8x8xi1> to vector<8x8xi32>
    %490 = arith.sitofp %489 : vector<8x8xi32> to vector<8x8xf32>
    %491 = arith.truncf %490 : vector<8x8xf32> to vector<8x8xbf16>
    %c5 = arith.constant 5 : index
    %c0_133 = arith.constant 0 : index
    %c0_134 = arith.constant 0 : index
    %492 = vector.load %arg2[%c5, %c0_133, %c0_134] : memref<8x8x32xbf16, #tpu.memory_space<vmem>>, vector<1x8x32xbf16>
    %493 = vector.shape_cast %492 : vector<1x8x32xbf16> to vector<8x32xbf16>
    %cst_135 = arith.constant dense<0.000000e+00> : vector<8x32xf32>
    %494 = tpu.matmul %491, %493, %cst_135 {dimension_numbers = #tpu.dot_dimension_numbers<[1], [0], [0], [1], [0, 0, 1, 1], [], []>} : vector<8x8xbf16>, vector<8x32xbf16>, vector<8x32xf32> -> vector<8x32xf32>
    %495 = arith.subi %433, %431 : i32
    %496 = arith.sitofp %495 : i32 to f32
    %cst_136 = arith.constant 1.000000e+00 : f32
    %497 = arith.divf %cst_136, %496 : f32
    %498 = arith.subi %437, %435 : i32
    %499 = arith.sitofp %498 : i32 to f32
    %cst_137 = arith.constant 1.000000e+00 : f32
    %500 = arith.divf %cst_137, %499 : f32
    %c2_i32_138 = arith.constant 2 : i32
    %501 = vector.broadcast %c2_i32_138 : i32 to vector<8x1xi32>
    %502 = arith.cmpi eq, %2, %501 : vector<8x1xi32>
    %c5_i32_139 = arith.constant 5 : i32
    %503 = vector.broadcast %c5_i32_139 : i32 to vector<8x1xi32>
    %504 = arith.cmpi eq, %2, %503 : vector<8x1xi32>
    %cst_140 = arith.constant 1.000000e+00 : f32
    %505 = vector.broadcast %500 : f32 to vector<8x1xf32>
    %506 = vector.broadcast %cst_140 : f32 to vector<8x1xf32>
    %507 = arith.select %504, %505, %506 : vector<8x1xi1>, vector<8x1xf32>
    %508 = vector.broadcast %497 : f32 to vector<8x1xf32>
    %509 = arith.select %502, %508, %507 : vector<8x1xi1>, vector<8x1xf32>
    %510 = vector.broadcast %509 : vector<8x1xf32> to vector<8x32xf32>
    %511 = arith.mulf %494, %510 : vector<8x32xf32>
    %c40 = arith.constant 40 : index
    %c0_141 = arith.constant 0 : index
    %512 = vector.load %arg20[%c40, %c0_141] : memref<64x32xf32, #tpu.memory_space<vmem>>, vector<8x32xf32>
    tpu.vector_store %arg20[%c40, %c0_141], %511 {strides = array<i32>} : memref<64x32xf32, #tpu.memory_space<vmem>>, vector<8x32xf32>,
    %c8_i32_142 = arith.constant 8 : i32
    %513 = arith.muli %arg0, %c8_i32_142 : i32
    %c6_i32_143 = arith.constant 6 : i32
    %514 = arith.addi %513, %c6_i32_143 : i32
    %515 = arith.index_cast %514 : i32 to index
    %c0_144 = arith.constant 0 : index
    %516 = memref.load %arg1[%515, %c0_144] : memref<16x5xi32, #tpu.memory_space<smem>>
    %517 = arith.index_cast %514 : i32 to index
    %c1_145 = arith.constant 1 : index
    %518 = memref.load %arg1[%517, %c1_145] : memref<16x5xi32, #tpu.memory_space<smem>>
    %519 = arith.index_cast %514 : i32 to index
    %c2_146 = arith.constant 2 : index
    %520 = memref.load %arg1[%519, %c2_146] : memref<16x5xi32, #tpu.memory_space<smem>>
    %521 = arith.index_cast %514 : i32 to index
    %c3_147 = arith.constant 3 : index
    %522 = memref.load %arg1[%521, %c3_147] : memref<16x5xi32, #tpu.memory_space<smem>>
    %523 = arith.index_cast %514 : i32 to index
    %c4_148 = arith.constant 4 : index
    %524 = memref.load %arg1[%523, %c4_148] : memref<16x5xi32, #tpu.memory_space<smem>>
    %c0_i32_149 = arith.constant 0 : i32
    %525 = vector.broadcast %c0_i32_149 : i32 to vector<8x8xi32>
    %526 = arith.cmpi eq, %0, %525 : vector<8x8xi32>
    %527 = vector.broadcast %516 : i32 to vector<8x8xi32>
    %528 = arith.cmpi eq, %1, %527 : vector<8x8xi32>
    %529 = arith.andi %526, %528 : vector<8x8xi1>
    %c1_i32_150 = arith.constant 1 : i32
    %530 = arith.subi %518, %c1_i32_150 : i32
    %c1_i32_151 = arith.constant 1 : i32
    %531 = vector.broadcast %c1_i32_151 : i32 to vector<8x8xi32>
    %532 = arith.cmpi eq, %0, %531 : vector<8x8xi32>
    %533 = vector.broadcast %530 : i32 to vector<8x8xi32>
    %534 = arith.cmpi eq, %1, %533 : vector<8x8xi32>
    %535 = arith.andi %532, %534 : vector<8x8xi1>
    %536 = arith.ori %529, %535 : vector<8x8xi1>
    %c2_i32_152 = arith.constant 2 : i32
    %537 = vector.broadcast %c2_i32_152 : i32 to vector<8x8xi32>
    %538 = arith.cmpi eq, %0, %537 : vector<8x8xi32>
    %539 = vector.broadcast %516 : i32 to vector<8x8xi32>
    %540 = arith.cmpi sge, %1, %539 : vector<8x8xi32>
    %541 = vector.broadcast %518 : i32 to vector<8x8xi32>
    %542 = arith.cmpi slt, %1, %541 : vector<8x8xi32>
    %543 = arith.andi %540, %542 : vector<8x8xi1>
    %544 = arith.andi %538, %543 : vector<8x8xi1>
    %545 = arith.ori %536, %544 : vector<8x8xi1>
    %c3_i32_153 = arith.constant 3 : i32
    %546 = vector.broadcast %c3_i32_153 : i32 to vector<8x8xi32>
    %547 = arith.cmpi eq, %0, %546 : vector<8x8xi32>
    %548 = vector.broadcast %520 : i32 to vector<8x8xi32>
    %549 = arith.cmpi eq, %1, %548 : vector<8x8xi32>
    %550 = arith.andi %547, %549 : vector<8x8xi1>
    %551 = arith.ori %545, %550 : vector<8x8xi1>
    %c1_i32_154 = arith.constant 1 : i32
    %552 = arith.subi %522, %c1_i32_154 : i32
    %c4_i32_155 = arith.constant 4 : i32
    %553 = vector.broadcast %c4_i32_155 : i32 to vector<8x8xi32>
    %554 = arith.cmpi eq, %0, %553 : vector<8x8xi32>
    %555 = vector.broadcast %552 : i32 to vector<8x8xi32>
    %556 = arith.cmpi eq, %1, %555 : vector<8x8xi32>
    %557 = arith.andi %554, %556 : vector<8x8xi1>
    %558 = arith.ori %551, %557 : vector<8x8xi1>
    %c5_i32_156 = arith.constant 5 : i32
    %559 = vector.broadcast %c5_i32_156 : i32 to vector<8x8xi32>
    %560 = arith.cmpi eq, %0, %559 : vector<8x8xi32>
    %561 = vector.broadcast %520 : i32 to vector<8x8xi32>
    %562 = arith.cmpi sge, %1, %561 : vector<8x8xi32>
    %563 = vector.broadcast %522 : i32 to vector<8x8xi32>
    %564 = arith.cmpi slt, %1, %563 : vector<8x8xi32>
    %565 = arith.andi %562, %564 : vector<8x8xi1>
    %566 = arith.andi %560, %565 : vector<8x8xi1>
    %567 = arith.ori %558, %566 : vector<8x8xi1>
    %c6_i32_157 = arith.constant 6 : i32
    %568 = vector.broadcast %c6_i32_157 : i32 to vector<8x8xi32>
    %569 = arith.cmpi eq, %0, %568 : vector<8x8xi32>
    %570 = vector.broadcast %524 : i32 to vector<8x8xi32>
    %571 = arith.cmpi eq, %1, %570 : vector<8x8xi32>
    %572 = arith.andi %569, %571 : vector<8x8xi1>
    %573 = arith.ori %567, %572 : vector<8x8xi1>
    %574 = arith.extui %573 : vector<8x8xi1> to vector<8x8xi32>
    %575 = arith.sitofp %574 : vector<8x8xi32> to vector<8x8xf32>
    %576 = arith.truncf %575 : vector<8x8xf32> to vector<8x8xbf16>
    %c6 = arith.constant 6 : index
    %c0_158 = arith.constant 0 : index
    %c0_159 = arith.constant 0 : index
    %577 = vector.load %arg2[%c6, %c0_158, %c0_159] : memref<8x8x32xbf16, #tpu.memory_space<vmem>>, vector<1x8x32xbf16>
    %578 = vector.shape_cast %577 : vector<1x8x32xbf16> to vector<8x32xbf16>
    %cst_160 = arith.constant dense<0.000000e+00> : vector<8x32xf32>
    %579 = tpu.matmul %576, %578, %cst_160 {dimension_numbers = #tpu.dot_dimension_numbers<[1], [0], [0], [1], [0, 0, 1, 1], [], []>} : vector<8x8xbf16>, vector<8x32xbf16>, vector<8x32xf32> -> vector<8x32xf32>
    %580 = arith.subi %518, %516 : i32
    %581 = arith.sitofp %580 : i32 to f32
    %cst_161 = arith.constant 1.000000e+00 : f32
    %582 = arith.divf %cst_161, %581 : f32
    %583 = arith.subi %522, %520 : i32
    %584 = arith.sitofp %583 : i32 to f32
    %cst_162 = arith.constant 1.000000e+00 : f32
    %585 = arith.divf %cst_162, %584 : f32
    %c2_i32_163 = arith.constant 2 : i32
    %586 = vector.broadcast %c2_i32_163 : i32 to vector<8x1xi32>
    %587 = arith.cmpi eq, %2, %586 : vector<8x1xi32>
    %c5_i32_164 = arith.constant 5 : i32
    %588 = vector.broadcast %c5_i32_164 : i32 to vector<8x1xi32>
    %589 = arith.cmpi eq, %2, %588 : vector<8x1xi32>
    %cst_165 = arith.constant 1.000000e+00 : f32
    %590 = vector.broadcast %585 : f32 to vector<8x1xf32>
    %591 = vector.broadcast %cst_165 : f32 to vector<8x1xf32>
    %592 = arith.select %589, %590, %591 : vector<8x1xi1>, vector<8x1xf32>
    %593 = vector.broadcast %582 : f32 to vector<8x1xf32>
    %594 = arith.select %587, %593, %592 : vector<8x1xi1>, vector<8x1xf32>
    %595 = vector.broadcast %594 : vector<8x1xf32> to vector<8x32xf32>
    %596 = arith.mulf %579, %595 : vector<8x32xf32>
    %c48 = arith.constant 48 : index
    %c0_166 = arith.constant 0 : index
    %597 = vector.load %arg20[%c48, %c0_166] : memref<64x32xf32, #tpu.memory_space<vmem>>, vector<8x32xf32>
    tpu.vector_store %arg20[%c48, %c0_166], %596 {strides = array<i32>} : memref<64x32xf32, #tpu.memory_space<vmem>>, vector<8x32xf32>,
    %c8_i32_167 = arith.constant 8 : i32
    %598 = arith.muli %arg0, %c8_i32_167 : i32
    %c7_i32 = arith.constant 7 : i32
    %599 = arith.addi %598, %c7_i32 : i32
    %600 = arith.index_cast %599 : i32 to index
    %c0_168 = arith.constant 0 : index
    %601 = memref.load %arg1[%600, %c0_168] : memref<16x5xi32, #tpu.memory_space<smem>>
    %602 = arith.index_cast %599 : i32 to index
    %c1_169 = arith.constant 1 : index
    %603 = memref.load %arg1[%602, %c1_169] : memref<16x5xi32, #tpu.memory_space<smem>>
    %604 = arith.index_cast %599 : i32 to index
    %c2_170 = arith.constant 2 : index
    %605 = memref.load %arg1[%604, %c2_170] : memref<16x5xi32, #tpu.memory_space<smem>>
    %606 = arith.index_cast %599 : i32 to index
    %c3_171 = arith.constant 3 : index
    %607 = memref.load %arg1[%606, %c3_171] : memref<16x5xi32, #tpu.memory_space<smem>>
    %608 = arith.index_cast %599 : i32 to index
    %c4_172 = arith.constant 4 : index
    %609 = memref.load %arg1[%608, %c4_172] : memref<16x5xi32, #tpu.memory_space<smem>>
    %c0_i32_173 = arith.constant 0 : i32
    %610 = vector.broadcast %c0_i32_173 : i32 to vector<8x8xi32>
    %611 = arith.cmpi eq, %0, %610 : vector<8x8xi32>
    %612 = vector.broadcast %601 : i32 to vector<8x8xi32>
    %613 = arith.cmpi eq, %1, %612 : vector<8x8xi32>
    %614 = arith.andi %611, %613 : vector<8x8xi1>
    %c1_i32_174 = arith.constant 1 : i32
    %615 = arith.subi %603, %c1_i32_174 : i32
    %c1_i32_175 = arith.constant 1 : i32
    %616 = vector.broadcast %c1_i32_175 : i32 to vector<8x8xi32>
    %617 = arith.cmpi eq, %0, %616 : vector<8x8xi32>
    %618 = vector.broadcast %615 : i32 to vector<8x8xi32>
    %619 = arith.cmpi eq, %1, %618 : vector<8x8xi32>
    %620 = arith.andi %617, %619 : vector<8x8xi1>
    %621 = arith.ori %614, %620 : vector<8x8xi1>
    %c2_i32_176 = arith.constant 2 : i32
    %622 = vector.broadcast %c2_i32_176 : i32 to vector<8x8xi32>
    %623 = arith.cmpi eq, %0, %622 : vector<8x8xi32>
    %624 = vector.broadcast %601 : i32 to vector<8x8xi32>
    %625 = arith.cmpi sge, %1, %624 : vector<8x8xi32>
    %626 = vector.broadcast %603 : i32 to vector<8x8xi32>
    %627 = arith.cmpi slt, %1, %626 : vector<8x8xi32>
    %628 = arith.andi %625, %627 : vector<8x8xi1>
    %629 = arith.andi %623, %628 : vector<8x8xi1>
    %630 = arith.ori %621, %629 : vector<8x8xi1>
    %c3_i32_177 = arith.constant 3 : i32
    %631 = vector.broadcast %c3_i32_177 : i32 to vector<8x8xi32>
    %632 = arith.cmpi eq, %0, %631 : vector<8x8xi32>
    %633 = vector.broadcast %605 : i32 to vector<8x8xi32>
    %634 = arith.cmpi eq, %1, %633 : vector<8x8xi32>
    %635 = arith.andi %632, %634 : vector<8x8xi1>
    %636 = arith.ori %630, %635 : vector<8x8xi1>
    %c1_i32_178 = arith.constant 1 : i32
    %637 = arith.subi %607, %c1_i32_178 : i32
    %c4_i32_179 = arith.constant 4 : i32
    %638 = vector.broadcast %c4_i32_179 : i32 to vector<8x8xi32>
    %639 = arith.cmpi eq, %0, %638 : vector<8x8xi32>
    %640 = vector.broadcast %637 : i32 to vector<8x8xi32>
    %641 = arith.cmpi eq, %1, %640 : vector<8x8xi32>
    %642 = arith.andi %639, %641 : vector<8x8xi1>
    %643 = arith.ori %636, %642 : vector<8x8xi1>
    %c5_i32_180 = arith.constant 5 : i32
    %644 = vector.broadcast %c5_i32_180 : i32 to vector<8x8xi32>
    %645 = arith.cmpi eq, %0, %644 : vector<8x8xi32>
    %646 = vector.broadcast %605 : i32 to vector<8x8xi32>
    %647 = arith.cmpi sge, %1, %646 : vector<8x8xi32>
    %648 = vector.broadcast %607 : i32 to vector<8x8xi32>
    %649 = arith.cmpi slt, %1, %648 : vector<8x8xi32>
    %650 = arith.andi %647, %649 : vector<8x8xi1>
    %651 = arith.andi %645, %650 : vector<8x8xi1>
    %652 = arith.ori %643, %651 : vector<8x8xi1>
    %c6_i32_181 = arith.constant 6 : i32
    %653 = vector.broadcast %c6_i32_181 : i32 to vector<8x8xi32>
    %654 = arith.cmpi eq, %0, %653 : vector<8x8xi32>
    %655 = vector.broadcast %609 : i32 to vector<8x8xi32>
    %656 = arith.cmpi eq, %1, %655 : vector<8x8xi32>
    %657 = arith.andi %654, %656 : vector<8x8xi1>
    %658 = arith.ori %652, %657 : vector<8x8xi1>
    %659 = arith.extui %658 : vector<8x8xi1> to vector<8x8xi32>
    %660 = arith.sitofp %659 : vector<8x8xi32> to vector<8x8xf32>
    %661 = arith.truncf %660 : vector<8x8xf32> to vector<8x8xbf16>
    %c7 = arith.constant 7 : index
    %c0_182 = arith.constant 0 : index
    %c0_183 = arith.constant 0 : index
    %662 = vector.load %arg2[%c7, %c0_182, %c0_183] : memref<8x8x32xbf16, #tpu.memory_space<vmem>>, vector<1x8x32xbf16>
    %663 = vector.shape_cast %662 : vector<1x8x32xbf16> to vector<8x32xbf16>
    %cst_184 = arith.constant dense<0.000000e+00> : vector<8x32xf32>
    %664 = tpu.matmul %661, %663, %cst_184 {dimension_numbers = #tpu.dot_dimension_numbers<[1], [0], [0], [1], [0, 0, 1, 1], [], []>} : vector<8x8xbf16>, vector<8x32xbf16>, vector<8x32xf32> -> vector<8x32xf32>
    %665 = arith.subi %603, %601 : i32
    %666 = arith.sitofp %665 : i32 to f32
    %cst_185 = arith.constant 1.000000e+00 : f32
    %667 = arith.divf %cst_185, %666 : f32
    %668 = arith.subi %607, %605 : i32
    %669 = arith.sitofp %668 : i32 to f32
    %cst_186 = arith.constant 1.000000e+00 : f32
    %670 = arith.divf %cst_186, %669 : f32
    %c2_i32_187 = arith.constant 2 : i32
    %671 = vector.broadcast %c2_i32_187 : i32 to vector<8x1xi32>
    %672 = arith.cmpi eq, %2, %671 : vector<8x1xi32>
    %c5_i32_188 = arith.constant 5 : i32
    %673 = vector.broadcast %c5_i32_188 : i32 to vector<8x1xi32>
    %674 = arith.cmpi eq, %2, %673 : vector<8x1xi32>
    %cst_189 = arith.constant 1.000000e+00 : f32
    %675 = vector.broadcast %670 : f32 to vector<8x1xf32>
    %676 = vector.broadcast %cst_189 : f32 to vector<8x1xf32>
    %677 = arith.select %674, %675, %676 : vector<8x1xi1>, vector<8x1xf32>
    %678 = vector.broadcast %667 : f32 to vector<8x1xf32>
    %679 = arith.select %672, %678, %677 : vector<8x1xi1>, vector<8x1xf32>
    %680 = vector.broadcast %679 : vector<8x1xf32> to vector<8x32xf32>
    %681 = arith.mulf %664, %680 : vector<8x32xf32>
    %c56 = arith.constant 56 : index
    %c0_190 = arith.constant 0 : index
    %682 = vector.load %arg20[%c56, %c0_190] : memref<64x32xf32, #tpu.memory_space<vmem>>, vector<8x32xf32>
    tpu.vector_store %arg20[%c56, %c0_190], %681 {strides = array<i32>} : memref<64x32xf32, #tpu.memory_space<vmem>>, vector<8x32xf32>,
    %c0_191 = arith.constant 0 : index
    %c0_192 = arith.constant 0 : index
    %683 = vector.load %arg20[%c0_191, %c0_192] : memref<64x32xf32, #tpu.memory_space<vmem>>, vector<64x32xf32>
    %684 = tpu.iota {dimensions = array<i32: 0>} : vector<8x64xi32>
    %c8_i32_193 = arith.constant 8 : i32
    %685 = vector.broadcast %c8_i32_193 : i32 to vector<8x64xi32>
    %686 = arith.muli %684, %685 : vector<8x64xi32>
    %687 = tpu.iota {dimensions = array<i32: 1>} : vector<8x64xi32>
    %c6_i32_194 = arith.constant 6 : i32
    %688 = vector.broadcast %c6_i32_194 : i32 to vector<8x64xi32>
    %689 = arith.addi %686, %688 : vector<8x64xi32>
    %690 = arith.cmpi eq, %687, %689 : vector<8x64xi32>
    %691 = arith.extui %690 : vector<8x64xi1> to vector<8x64xi32>
    %692 = arith.sitofp %691 : vector<8x64xi32> to vector<8x64xf32>
    %cst_195 = arith.constant dense<0.000000e+00> : vector<8x32xf32>
    %693 = tpu.matmul %692, %683, %cst_195 {dimension_numbers = #tpu.dot_dimension_numbers<[1], [0], [0], [1], [0, 0, 1, 1], [], []>} : vector<8x64xf32>, vector<64x32xf32>, vector<8x32xf32> -> vector<8x32xf32>
    %c0_196 = arith.constant 0 : index
    %c0_197 = arith.constant 0 : index
    %694 = vector.load %arg3[%c0_196, %c0_197] : memref<32x32xbf16, #tpu.memory_space<vmem>>, vector<32x32xbf16>
    %695 = arith.truncf %693 : vector<8x32xf32> to vector<8x32xbf16>
    %cst_198 = arith.constant dense<0.000000e+00> : vector<8x32xf32>
    %696 = tpu.matmul %695, %694, %cst_198 {dimension_numbers = #tpu.dot_dimension_numbers<[1], [0], [0], [1], [0, 0, 1, 1], [], []>} : vector<8x32xbf16>, vector<32x32xbf16>, vector<8x32xf32> -> vector<8x32xf32>
    %c0_199 = arith.constant 0 : index
    %c0_200 = arith.constant 0 : index
    %697 = vector.load %arg4[%c0_199, %c0_200] : memref<1x32xf32, #tpu.memory_space<vmem>>, vector<1x32xf32>
    %698 = vector.broadcast %697 : vector<1x32xf32> to vector<8x32xf32>
    %699 = arith.addf %696, %698 : vector<8x32xf32>
    %c0_201 = arith.constant 0 : index
    %c0_202 = arith.constant 0 : index
    %700 = vector.load %arg5[%c0_201, %c0_202] : memref<1x32xf32, #tpu.memory_space<vmem>>, vector<1x32xf32>
    %c0_203 = arith.constant 0 : index
    %c0_204 = arith.constant 0 : index
    %701 = vector.load %arg6[%c0_203, %c0_204] : memref<1x32xf32, #tpu.memory_space<vmem>>, vector<1x32xf32>
    %cst_205 = arith.constant dense<0.000000e+00> : vector<8xf32>
    %702 = vector.multi_reduction <add>, %699, %cst_205 [1] : vector<8x32xf32> to vector<8xf32>
    %703 = vector.shape_cast %702 : vector<8xf32> to vector<8x1xf32>
    %cst_206 = arith.constant 3.200000e+01 : f32
    %704 = vector.broadcast %cst_206 : f32 to vector<8x1xf32>
    %705 = arith.divf %703, %704 : vector<8x1xf32>
    %706 = vector.broadcast %705 : vector<8x1xf32> to vector<8x32xf32>
    %707 = arith.subf %699, %706 : vector<8x32xf32>
    %708 = arith.mulf %707, %707 : vector<8x32xf32>
    %cst_207 = arith.constant dense<0.000000e+00> : vector<8xf32>
    %709 = vector.multi_reduction <add>, %708, %cst_207 [1] : vector<8x32xf32> to vector<8xf32>
    %710 = vector.shape_cast %709 : vector<8xf32> to vector<8x1xf32>
    %cst_208 = arith.constant 3.200000e+01 : f32
    %711 = vector.broadcast %cst_208 : f32 to vector<8x1xf32>
    %712 = arith.divf %710, %711 : vector<8x1xf32>
    %713 = vector.broadcast %705 : vector<8x1xf32> to vector<8x32xf32>
    %714 = arith.subf %699, %713 : vector<8x32xf32>
    %cst_209 = arith.constant 9.99999974E-6 : f32
    %715 = vector.broadcast %cst_209 : f32 to vector<8x1xf32>
    %716 = arith.addf %712, %715 : vector<8x1xf32>
    %717 = math.rsqrt %716 : vector<8x1xf32>
    %718 = vector.broadcast %717 : vector<8x1xf32> to vector<8x32xf32>
    %719 = arith.mulf %714, %718 : vector<8x32xf32>
    %720 = vector.broadcast %700 : vector<1x32xf32> to vector<8x32xf32>
    %721 = arith.mulf %719, %720 : vector<8x32xf32>
    %722 = vector.broadcast %701 : vector<1x32xf32> to vector<8x32xf32>
    %723 = arith.addf %721, %722 : vector<8x32xf32>
    %cst_210 = arith.constant 5.000000e-01 : f32
    %724 = vector.broadcast %cst_210 : f32 to vector<8x32xf32>
    %725 = arith.mulf %724, %723 : vector<8x32xf32>
    %cst_211 = arith.constant 0.707106769 : f32
    %726 = vector.broadcast %cst_211 : f32 to vector<8x32xf32>
    %727 = arith.mulf %723, %726 : vector<8x32xf32>
    %728 = math.erf %727 : vector<8x32xf32>
    %cst_212 = arith.constant 1.000000e+00 : f32
    %729 = vector.broadcast %cst_212 : f32 to vector<8x32xf32>
    %730 = arith.addf %729, %728 : vector<8x32xf32>
    %731 = arith.mulf %725, %730 : vector<8x32xf32>
    %c0_213 = arith.constant 0 : index
    %c0_214 = arith.constant 0 : index
    %732 = vector.load %arg7[%c0_213, %c0_214] : memref<32x16xbf16, #tpu.memory_space<vmem>>, vector<32x16xbf16>
    %733 = arith.truncf %731 : vector<8x32xf32> to vector<8x32xbf16>
    %cst_215 = arith.constant dense<0.000000e+00> : vector<8x16xf32>
    %734 = tpu.matmul %733, %732, %cst_215 {dimension_numbers = #tpu.dot_dimension_numbers<[1], [0], [0], [1], [0, 0, 1, 1], [], []>} : vector<8x32xbf16>, vector<32x16xbf16>, vector<8x16xf32> -> vector<8x16xf32>
    %c0_216 = arith.constant 0 : index
    %c0_217 = arith.constant 0 : index
    %735 = vector.load %arg8[%c0_216, %c0_217] : memref<1x16xf32, #tpu.memory_space<vmem>>, vector<1x16xf32>
    %736 = vector.broadcast %735 : vector<1x16xf32> to vector<8x16xf32>
    %737 = arith.addf %734, %736 : vector<8x16xf32>
    %c0_i32_218 = arith.constant 0 : i32
    %738 = vector.broadcast %c0_i32_218 : i32 to vector<8x64xi32>
    %739 = arith.addi %686, %738 : vector<8x64xi32>
    %740 = arith.cmpi eq, %687, %739 : vector<8x64xi32>
    %741 = arith.extui %740 : vector<8x64xi1> to vector<8x64xi32>
    %742 = arith.sitofp %741 : vector<8x64xi32> to vector<8x64xf32>
    %cst_219 = arith.constant dense<0.000000e+00> : vector<8x32xf32>
    %743 = tpu.matmul %742, %683, %cst_219 {dimension_numbers = #tpu.dot_dimension_numbers<[1], [0], [0], [1], [0, 0, 1, 1], [], []>} : vector<8x64xf32>, vector<64x32xf32>, vector<8x32xf32> -> vector<8x32xf32>
    %c0_220 = arith.constant 0 : index
    %c0_221 = arith.constant 0 : index
    %744 = vector.load %arg9[%c0_220, %c0_221] : memref<192x32xbf16, #tpu.memory_space<vmem>>, vector<32x32xbf16>
    %745 = arith.truncf %743 : vector<8x32xf32> to vector<8x32xbf16>
    %cst_222 = arith.constant dense<0.000000e+00> : vector<8x32xf32>
    %746 = tpu.matmul %745, %744, %cst_222 {dimension_numbers = #tpu.dot_dimension_numbers<[1], [0], [0], [1], [0, 0, 1, 1], [], []>} : vector<8x32xbf16>, vector<32x32xbf16>, vector<8x32xf32> -> vector<8x32xf32>
    %c1_i32_223 = arith.constant 1 : i32
    %747 = vector.broadcast %c1_i32_223 : i32 to vector<8x64xi32>
    %748 = arith.addi %686, %747 : vector<8x64xi32>
    %749 = arith.cmpi eq, %687, %748 : vector<8x64xi32>
    %750 = arith.extui %749 : vector<8x64xi1> to vector<8x64xi32>
    %751 = arith.sitofp %750 : vector<8x64xi32> to vector<8x64xf32>
    %cst_224 = arith.constant dense<0.000000e+00> : vector<8x32xf32>
    %752 = tpu.matmul %751, %683, %cst_224 {dimension_numbers = #tpu.dot_dimension_numbers<[1], [0], [0], [1], [0, 0, 1, 1], [], []>} : vector<8x64xf32>, vector<64x32xf32>, vector<8x32xf32> -> vector<8x32xf32>
    %c32_225 = arith.constant 32 : index
    %c0_226 = arith.constant 0 : index
    %753 = vector.load %arg9[%c32_225, %c0_226] : memref<192x32xbf16, #tpu.memory_space<vmem>>, vector<32x32xbf16>
    %754 = arith.truncf %752 : vector<8x32xf32> to vector<8x32xbf16>
    %cst_227 = arith.constant dense<0.000000e+00> : vector<8x32xf32>
    %755 = tpu.matmul %754, %753, %cst_227 {dimension_numbers = #tpu.dot_dimension_numbers<[1], [0], [0], [1], [0, 0, 1, 1], [], []>} : vector<8x32xbf16>, vector<32x32xbf16>, vector<8x32xf32> -> vector<8x32xf32>
    %756 = arith.addf %746, %755 : vector<8x32xf32>
    %c2_i32_228 = arith.constant 2 : i32
    %757 = vector.broadcast %c2_i32_228 : i32 to vector<8x64xi32>
    %758 = arith.addi %686, %757 : vector<8x64xi32>
    %759 = arith.cmpi eq, %687, %758 : vector<8x64xi32>
    %760 = arith.extui %759 : vector<8x64xi1> to vector<8x64xi32>
    %761 = arith.sitofp %760 : vector<8x64xi32> to vector<8x64xf32>
    %cst_229 = arith.constant dense<0.000000e+00> : vector<8x32xf32>
    %762 = tpu.matmul %761, %683, %cst_229 {dimension_numbers = #tpu.dot_dimension_numbers<[1], [0], [0], [1], [0, 0, 1, 1], [], []>} : vector<8x64xf32>, vector<64x32xf32>, vector<8x32xf32> -> vector<8x32xf32>
    %c64 = arith.constant 64 : index
    %c0_230 = arith.constant 0 : index
    %763 = vector.load %arg9[%c64, %c0_230] : memref<192x32xbf16, #tpu.memory_space<vmem>>, vector<32x32xbf16>
    %764 = arith.truncf %762 : vector<8x32xf32> to vector<8x32xbf16>
    %cst_231 = arith.constant dense<0.000000e+00> : vector<8x32xf32>
    %765 = tpu.matmul %764, %763, %cst_231 {dimension_numbers = #tpu.dot_dimension_numbers<[1], [0], [0], [1], [0, 0, 1, 1], [], []>} : vector<8x32xbf16>, vector<32x32xbf16>, vector<8x32xf32> -> vector<8x32xf32>
    %766 = arith.addf %756, %765 : vector<8x32xf32>
    %c3_i32_232 = arith.constant 3 : i32
    %767 = vector.broadcast %c3_i32_232 : i32 to vector<8x64xi32>
    %768 = arith.addi %686, %767 : vector<8x64xi32>
    %769 = arith.cmpi eq, %687, %768 : vector<8x64xi32>
    %770 = arith.extui %769 : vector<8x64xi1> to vector<8x64xi32>
    %771 = arith.sitofp %770 : vector<8x64xi32> to vector<8x64xf32>
    %cst_233 = arith.constant dense<0.000000e+00> : vector<8x32xf32>
    %772 = tpu.matmul %771, %683, %cst_233 {dimension_numbers = #tpu.dot_dimension_numbers<[1], [0], [0], [1], [0, 0, 1, 1], [], []>} : vector<8x64xf32>, vector<64x32xf32>, vector<8x32xf32> -> vector<8x32xf32>
    %c96 = arith.constant 96 : index
    %c0_234 = arith.constant 0 : index
    %773 = vector.load %arg9[%c96, %c0_234] : memref<192x32xbf16, #tpu.memory_space<vmem>>, vector<32x32xbf16>
    %774 = arith.truncf %772 : vector<8x32xf32> to vector<8x32xbf16>
    %cst_235 = arith.constant dense<0.000000e+00> : vector<8x32xf32>
    %775 = tpu.matmul %774, %773, %cst_235 {dimension_numbers = #tpu.dot_dimension_numbers<[1], [0], [0], [1], [0, 0, 1, 1], [], []>} : vector<8x32xbf16>, vector<32x32xbf16>, vector<8x32xf32> -> vector<8x32xf32>
    %776 = arith.addf %766, %775 : vector<8x32xf32>
    %c4_i32_236 = arith.constant 4 : i32
    %777 = vector.broadcast %c4_i32_236 : i32 to vector<8x64xi32>
    %778 = arith.addi %686, %777 : vector<8x64xi32>
    %779 = arith.cmpi eq, %687, %778 : vector<8x64xi32>
    %780 = arith.extui %779 : vector<8x64xi1> to vector<8x64xi32>
    %781 = arith.sitofp %780 : vector<8x64xi32> to vector<8x64xf32>
    %cst_237 = arith.constant dense<0.000000e+00> : vector<8x32xf32>
    %782 = tpu.matmul %781, %683, %cst_237 {dimension_numbers = #tpu.dot_dimension_numbers<[1], [0], [0], [1], [0, 0, 1, 1], [], []>} : vector<8x64xf32>, vector<64x32xf32>, vector<8x32xf32> -> vector<8x32xf32>
    %c128 = arith.constant 128 : index
    %c0_238 = arith.constant 0 : index
    %783 = vector.load %arg9[%c128, %c0_238] : memref<192x32xbf16, #tpu.memory_space<vmem>>, vector<32x32xbf16>
    %784 = arith.truncf %782 : vector<8x32xf32> to vector<8x32xbf16>
    %cst_239 = arith.constant dense<0.000000e+00> : vector<8x32xf32>
    %785 = tpu.matmul %784, %783, %cst_239 {dimension_numbers = #tpu.dot_dimension_numbers<[1], [0], [0], [1], [0, 0, 1, 1], [], []>} : vector<8x32xbf16>, vector<32x32xbf16>, vector<8x32xf32> -> vector<8x32xf32>
    %786 = arith.addf %776, %785 : vector<8x32xf32>
    %c5_i32_240 = arith.constant 5 : i32
    %787 = vector.broadcast %c5_i32_240 : i32 to vector<8x64xi32>
    %788 = arith.addi %686, %787 : vector<8x64xi32>
    %789 = arith.cmpi eq, %687, %788 : vector<8x64xi32>
    %790 = arith.extui %789 : vector<8x64xi1> to vector<8x64xi32>
    %791 = arith.sitofp %790 : vector<8x64xi32> to vector<8x64xf32>
    %cst_241 = arith.constant dense<0.000000e+00> : vector<8x32xf32>
    %792 = tpu.matmul %791, %683, %cst_241 {dimension_numbers = #tpu.dot_dimension_numbers<[1], [0], [0], [1], [0, 0, 1, 1], [], []>} : vector<8x64xf32>, vector<64x32xf32>, vector<8x32xf32> -> vector<8x32xf32>
    %c160 = arith.constant 160 : index
    %c0_242 = arith.constant 0 : index
    %793 = vector.load %arg9[%c160, %c0_242] : memref<192x32xbf16, #tpu.memory_space<vmem>>, vector<32x32xbf16>
    %794 = arith.truncf %792 : vector<8x32xf32> to vector<8x32xbf16>
    %cst_243 = arith.constant dense<0.000000e+00> : vector<8x32xf32>
    %795 = tpu.matmul %794, %793, %cst_243 {dimension_numbers = #tpu.dot_dimension_numbers<[1], [0], [0], [1], [0, 0, 1, 1], [], []>} : vector<8x32xbf16>, vector<32x32xbf16>, vector<8x32xf32> -> vector<8x32xf32>
    %796 = arith.addf %786, %795 : vector<8x32xf32>
    %c0_244 = arith.constant 0 : index
    %c0_245 = arith.constant 0 : index
    %797 = vector.load %arg10[%c0_244, %c0_245] : memref<1x32xf32, #tpu.memory_space<vmem>>, vector<1x32xf32>
    %798 = vector.broadcast %797 : vector<1x32xf32> to vector<8x32xf32>
    %799 = arith.addf %796, %798 : vector<8x32xf32>
    %c0_246 = arith.constant 0 : index
    %c0_247 = arith.constant 0 : index
    %800 = vector.load %arg11[%c0_246, %c0_247] : memref<1x32xf32, #tpu.memory_space<vmem>>, vector<1x32xf32>
    %c0_248 = arith.constant 0 : index
    %c0_249 = arith.constant 0 : index
    %801 = vector.load %arg12[%c0_248, %c0_249] : memref<1x32xf32, #tpu.memory_space<vmem>>, vector<1x32xf32>
    %cst_250 = arith.constant dense<0.000000e+00> : vector<8xf32>
    %802 = vector.multi_reduction <add>, %799, %cst_250 [1] : vector<8x32xf32> to vector<8xf32>
    %803 = vector.shape_cast %802 : vector<8xf32> to vector<8x1xf32>
    %cst_251 = arith.constant 3.200000e+01 : f32
    %804 = vector.broadcast %cst_251 : f32 to vector<8x1xf32>
    %805 = arith.divf %803, %804 : vector<8x1xf32>
    %806 = vector.broadcast %805 : vector<8x1xf32> to vector<8x32xf32>
    %807 = arith.subf %799, %806 : vector<8x32xf32>
    %808 = arith.mulf %807, %807 : vector<8x32xf32>
    %cst_252 = arith.constant dense<0.000000e+00> : vector<8xf32>
    %809 = vector.multi_reduction <add>, %808, %cst_252 [1] : vector<8x32xf32> to vector<8xf32>
    %810 = vector.shape_cast %809 : vector<8xf32> to vector<8x1xf32>
    %cst_253 = arith.constant 3.200000e+01 : f32
    %811 = vector.broadcast %cst_253 : f32 to vector<8x1xf32>
    %812 = arith.divf %810, %811 : vector<8x1xf32>
    %813 = vector.broadcast %805 : vector<8x1xf32> to vector<8x32xf32>
    %814 = arith.subf %799, %813 : vector<8x32xf32>
    %cst_254 = arith.constant 9.99999974E-6 : f32
    %815 = vector.broadcast %cst_254 : f32 to vector<8x1xf32>
    %816 = arith.addf %812, %815 : vector<8x1xf32>
    %817 = math.rsqrt %816 : vector<8x1xf32>
    %818 = vector.broadcast %817 : vector<8x1xf32> to vector<8x32xf32>
    %819 = arith.mulf %814, %818 : vector<8x32xf32>
    %820 = vector.broadcast %800 : vector<1x32xf32> to vector<8x32xf32>
    %821 = arith.mulf %819, %820 : vector<8x32xf32>
    %822 = vector.broadcast %801 : vector<1x32xf32> to vector<8x32xf32>
    %823 = arith.addf %821, %822 : vector<8x32xf32>
    %cst_255 = arith.constant 5.000000e-01 : f32
    %824 = vector.broadcast %cst_255 : f32 to vector<8x32xf32>
    %825 = arith.mulf %824, %823 : vector<8x32xf32>
    %cst_256 = arith.constant 0.707106769 : f32
    %826 = vector.broadcast %cst_256 : f32 to vector<8x32xf32>
    %827 = arith.mulf %823, %826 : vector<8x32xf32>
    %828 = math.erf %827 : vector<8x32xf32>
    %cst_257 = arith.constant 1.000000e+00 : f32
    %829 = vector.broadcast %cst_257 : f32 to vector<8x32xf32>
    %830 = arith.addf %829, %828 : vector<8x32xf32>
    %831 = arith.mulf %825, %830 : vector<8x32xf32>
    %c0_258 = arith.constant 0 : index
    %c0_259 = arith.constant 0 : index
    %832 = vector.load %arg13[%c0_258, %c0_259] : memref<32x16xbf16, #tpu.memory_space<vmem>>, vector<32x16xbf16>
    %833 = arith.truncf %831 : vector<8x32xf32> to vector<8x32xbf16>
    %cst_260 = arith.constant dense<0.000000e+00> : vector<8x16xf32>
    %834 = tpu.matmul %833, %832, %cst_260 {dimension_numbers = #tpu.dot_dimension_numbers<[1], [0], [0], [1], [0, 0, 1, 1], [], []>} : vector<8x32xbf16>, vector<32x16xbf16>, vector<8x16xf32> -> vector<8x16xf32>
    %c0_261 = arith.constant 0 : index
    %c0_262 = arith.constant 0 : index
    %835 = vector.load %arg14[%c0_261, %c0_262] : memref<1x16xf32, #tpu.memory_space<vmem>>, vector<1x16xf32>
    %836 = vector.broadcast %835 : vector<1x16xf32> to vector<8x16xf32>
    %837 = arith.addf %834, %836 : vector<8x16xf32>
    %c0_263 = arith.constant 0 : index
    %c0_264 = arith.constant 0 : index
    %838 = vector.load %arg15[%c0_263, %c0_264] : memref<32x16xbf16, #tpu.memory_space<vmem>>, vector<16x16xbf16>
    %839 = arith.truncf %737 : vector<8x16xf32> to vector<8x16xbf16>
    %cst_265 = arith.constant dense<0.000000e+00> : vector<8x16xf32>
    %840 = tpu.matmul %839, %838, %cst_265 {dimension_numbers = #tpu.dot_dimension_numbers<[1], [0], [0], [1], [0, 0, 1, 1], [], []>} : vector<8x16xbf16>, vector<16x16xbf16>, vector<8x16xf32> -> vector<8x16xf32>
    %c16_266 = arith.constant 16 : index
    %c0_267 = arith.constant 0 : index
    %841 = vector.load %arg15[%c16_266, %c0_267] : memref<32x16xbf16, #tpu.memory_space<vmem>>, vector<16x16xbf16>
    %842 = arith.truncf %837 : vector<8x16xf32> to vector<8x16xbf16>
    %cst_268 = arith.constant dense<0.000000e+00> : vector<8x16xf32>
    %843 = tpu.matmul %842, %841, %cst_268 {dimension_numbers = #tpu.dot_dimension_numbers<[1], [0], [0], [1], [0, 0, 1, 1], [], []>} : vector<8x16xbf16>, vector<16x16xbf16>, vector<8x16xf32> -> vector<8x16xf32>
    %844 = arith.addf %840, %843 : vector<8x16xf32>
    %c0_269 = arith.constant 0 : index
    %c0_270 = arith.constant 0 : index
    %845 = vector.load %arg16[%c0_269, %c0_270] : memref<1x16xf32, #tpu.memory_space<vmem>>, vector<1x16xf32>
    %846 = vector.broadcast %845 : vector<1x16xf32> to vector<8x16xf32>
    %847 = arith.addf %844, %846 : vector<8x16xf32>
    %cst_271 = arith.constant 5.000000e-01 : f32
    %848 = vector.broadcast %cst_271 : f32 to vector<8x16xf32>
    %849 = arith.mulf %848, %847 : vector<8x16xf32>
    %cst_272 = arith.constant 0.707106769 : f32
    %850 = vector.broadcast %cst_272 : f32 to vector<8x16xf32>
    %851 = arith.mulf %847, %850 : vector<8x16xf32>
    %852 = math.erf %851 : vector<8x16xf32>
    %cst_273 = arith.constant 1.000000e+00 : f32
    %853 = vector.broadcast %cst_273 : f32 to vector<8x16xf32>
    %854 = arith.addf %853, %852 : vector<8x16xf32>
    %855 = arith.mulf %849, %854 : vector<8x16xf32>
    %c0_274 = arith.constant 0 : index
    %c0_275 = arith.constant 0 : index
    %856 = vector.load %arg17[%c0_274, %c0_275] : memref<16x2xbf16, #tpu.memory_space<vmem>>, vector<16x2xbf16>
    %857 = arith.truncf %855 : vector<8x16xf32> to vector<8x16xbf16>
    %cst_276 = arith.constant dense<0.000000e+00> : vector<8x2xf32>
    %858 = tpu.matmul %857, %856, %cst_276 {dimension_numbers = #tpu.dot_dimension_numbers<[1], [0], [0], [1], [0, 0, 1, 1], [], []>} : vector<8x16xbf16>, vector<16x2xbf16>, vector<8x2xf32> -> vector<8x2xf32>
    %c0_277 = arith.constant 0 : index
    %c0_278 = arith.constant 0 : index
    %859 = vector.load %arg18[%c0_277, %c0_278] : memref<1x2xf32, #tpu.memory_space<vmem>>, vector<1x2xf32>
    %860 = vector.broadcast %859 : vector<1x2xf32> to vector<8x2xf32>
    %861 = arith.addf %858, %860 : vector<8x2xf32>
    %c0_279 = arith.constant 0 : index
    %c0_280 = arith.constant 0 : index
    %862 = vector.load %arg19[%c0_279, %c0_280] : memref<8x2xf32, #tpu.memory_space<vmem>>, vector<8x2xf32>
    tpu.vector_store %arg19[%c0_279, %c0_280], %861 {strides = array<i32>} : memref<8x2xf32, #tpu.memory_space<vmem>>, vector<8x2xf32>,
    return
  }
  func.func @transform_0(%arg0: i32, %arg1: memref<16x5xi32, #tpu.memory_space<smem>>) -> (i32, i32, i32) {
    %c0_i32 = arith.constant 0 : i32
    %c0_i32_0 = arith.constant 0 : i32
    %c0_i32_1 = arith.constant 0 : i32
    return %arg0, %c0_i32, %c0_i32_0 : i32, i32, i32
  }
  func.func @transform_1(%arg0: i32, %arg1: memref<16x5xi32, #tpu.memory_space<smem>>) -> (i32, i32) {
    %c0_i32 = arith.constant 0 : i32
    %c0_i32_0 = arith.constant 0 : i32
    %c0_i32_1 = arith.constant 0 : i32
    return %c0_i32, %c0_i32_0 : i32, i32
  }
  func.func @transform_2(%arg0: i32, %arg1: memref<16x5xi32, #tpu.memory_space<smem>>) -> (i32, i32) {
    %c0_i32 = arith.constant 0 : i32
    %c0_i32_0 = arith.constant 0 : i32
    %c0_i32_1 = arith.constant 0 : i32
    return %c0_i32, %c0_i32_0 : i32, i32
  }
  func.func @transform_3(%arg0: i32, %arg1: memref<16x5xi32, #tpu.memory_space<smem>>) -> (i32, i32) {
    %c0_i32 = arith.constant 0 : i32
    %c0_i32_0 = arith.constant 0 : i32
    %c0_i32_1 = arith.constant 0 : i32
    return %c0_i32, %c0_i32_0 : i32, i32
  }
  func.func @transform_4(%arg0: i32, %arg1: memref<16x5xi32, #tpu.memory_space<smem>>) -> (i32, i32) {
    %c0_i32 = arith.constant 0 : i32
    %c0_i32_0 = arith.constant 0 : i32
    %c0_i32_1 = arith.constant 0 : i32
    return %c0_i32, %c0_i32_0 : i32, i32
  }
  func.func @transform_5(%arg0: i32, %arg1: memref<16x5xi32, #tpu.memory_space<smem>>) -> (i32, i32) {
    %c0_i32 = arith.constant 0 : i32
    %c0_i32_0 = arith.constant 0 : i32
    %c0_i32_1 = arith.constant 0 : i32
    return %c0_i32, %c0_i32_0 : i32, i32
  }
  func.func @transform_6(%arg0: i32, %arg1: memref<16x5xi32, #tpu.memory_space<smem>>) -> (i32, i32) {
    %c0_i32 = arith.constant 0 : i32
    %c0_i32_0 = arith.constant 0 : i32
    %c0_i32_1 = arith.constant 0 : i32
    return %c0_i32, %c0_i32_0 : i32, i32
  }
  func.func @transform_7(%arg0: i32, %arg1: memref<16x5xi32, #tpu.memory_space<smem>>) -> (i32, i32) {
    %c0_i32 = arith.constant 0 : i32
    %c0_i32_0 = arith.constant 0 : i32
    %c0_i32_1 = arith.constant 0 : i32
    return %c0_i32, %c0_i32_0 : i32, i32
  }
  func.func @transform_8(%arg0: i32, %arg1: memref<16x5xi32, #tpu.memory_space<smem>>) -> (i32, i32) {
    %c0_i32 = arith.constant 0 : i32
    %c0_i32_0 = arith.constant 0 : i32
    %c0_i32_1 = arith.constant 0 : i32
    return %c0_i32, %c0_i32_0 : i32, i32
  }
  func.func @transform_9(%arg0: i32, %arg1: memref<16x5xi32, #tpu.memory_space<smem>>) -> (i32, i32) {
    %c0_i32 = arith.constant 0 : i32
    %c0_i32_0 = arith.constant 0 : i32
    %c0_i32_1 = arith.constant 0 : i32
    return %c0_i32, %c0_i32_0 : i32, i32
  }
  func.func @transform_10(%arg0: i32, %arg1: memref<16x5xi32, #tpu.memory_space<smem>>) -> (i32, i32) {
    %c0_i32 = arith.constant 0 : i32
    %c0_i32_0 = arith.constant 0 : i32
    %c0_i32_1 = arith.constant 0 : i32
    return %c0_i32, %c0_i32_0 : i32, i32
  }
  func.func @transform_11(%arg0: i32, %arg1: memref<16x5xi32, #tpu.memory_space<smem>>) -> (i32, i32) {
    %c0_i32 = arith.constant 0 : i32
    %c0_i32_0 = arith.constant 0 : i32
    %c0_i32_1 = arith.constant 0 : i32
    return %c0_i32, %c0_i32_0 : i32, i32
  }
  func.func @transform_12(%arg0: i32, %arg1: memref<16x5xi32, #tpu.memory_space<smem>>) -> (i32, i32) {
    %c0_i32 = arith.constant 0 : i32
    %c0_i32_0 = arith.constant 0 : i32
    %c0_i32_1 = arith.constant 0 : i32
    return %c0_i32, %c0_i32_0 : i32, i32
  }
  func.func @transform_13(%arg0: i32, %arg1: memref<16x5xi32, #tpu.memory_space<smem>>) -> (i32, i32) {
    %c0_i32 = arith.constant 0 : i32
    %c0_i32_0 = arith.constant 0 : i32
    %c0_i32_1 = arith.constant 0 : i32
    return %c0_i32, %c0_i32_0 : i32, i32
  }
  func.func @transform_14(%arg0: i32, %arg1: memref<16x5xi32, #tpu.memory_space<smem>>) -> (i32, i32) {
    %c0_i32 = arith.constant 0 : i32
    %c0_i32_0 = arith.constant 0 : i32
    %c0_i32_1 = arith.constant 0 : i32
    return %c0_i32, %c0_i32_0 : i32, i32
  }
  func.func @transform_15(%arg0: i32, %arg1: memref<16x5xi32, #tpu.memory_space<smem>>) -> (i32, i32) {
    %c0_i32 = arith.constant 0 : i32
    %c0_i32_0 = arith.constant 0 : i32
    %c0_i32_1 = arith.constant 0 : i32
    return %c0_i32, %c0_i32_0 : i32, i32
  }
  func.func @transform_16(%arg0: i32, %arg1: memref<16x5xi32, #tpu.memory_space<smem>>) -> (i32, i32) {
    %c0_i32 = arith.constant 0 : i32
    %c0_i32_0 = arith.constant 0 : i32
    %c0_i32_1 = arith.constant 0 : i32
    return %c0_i32, %c0_i32_0 : i32, i32
  }
  func.func @transform_17(%arg0: i32, %arg1: memref<16x5xi32, #tpu.memory_space<smem>>) -> (i32, i32) {
    %c0_i32 = arith.constant 0 : i32
    %c0_i32_0 = arith.constant 0 : i32
    return %arg0, %c0_i32 : i32, i32
  }
}

</mosaic_0001>

<llo_original>
// kernel: tpu_custom_call.1
$region0: #{tpu_custom_call.1}
  #allocation0 [shape = 'u32[]', space=smem, size = 0x4, offset = 0x4, fixed_abs, tag = 'smem constant byte address 0x4 - core index']
  #allocation1 [shape = 'u32[144,128]{1,0:T(1,128)}', space=vmem, size = 0x12000, scoped, tag = 'internal scratch']
  #allocation2 [shape = 'f32[64,32]{1,0:T(8,128)}', space=vmem, size = 0x8000, scoped, tag = 'scratch operand']
  #allocation3 [shape = 's32[1]{0}', space=sflag, size = 0x4, scoped, tag = 'scoped memory for tpu_custom_call.1']
  #allocation4 [shape = 'u8[8192]{0}', space=smem, size = 0x2000, scoped, tag = 'prefetched SMEM operand 0']
  %s0 = inlined_call_operand.vmem [shape: s32[16,5], index: 0, kind: input, shape index: {}]
  %s1 = inlined_call_operand.vmem [shape: bf16[16,8,32], index: 1, kind: input, shape index: {}]
  %s2 = inlined_call_operand.vmem [shape: bf16[32,32], index: 2, kind: input, shape index: {}]
  %s3 = inlined_call_operand.vmem [shape: f32[1,32], index: 3, kind: input, shape index: {}]
  %s4 = inlined_call_operand.vmem [shape: f32[1,32], index: 4, kind: input, shape index: {}]
  %s5 = inlined_call_operand.vmem [shape: f32[1,32], index: 5, kind: input, shape index: {}]
  %s6 = inlined_call_operand.vmem [shape: bf16[32,16], index: 6, kind: input, shape index: {}]
  %s7 = inlined_call_operand.vmem [shape: f32[1,16], index: 7, kind: input, shape index: {}]
  %s8 = inlined_call_operand.vmem [shape: bf16[192,32], index: 8, kind: input, shape index: {}]
  %s9 = inlined_call_operand.vmem [shape: f32[1,32], index: 9, kind: input, shape index: {}]
  %s10 = inlined_call_operand.vmem [shape: f32[1,32], index: 10, kind: input, shape index: {}]
  %s11 = inlined_call_operand.vmem [shape: f32[1,32], index: 11, kind: input, shape index: {}]
  %s12 = inlined_call_operand.vmem [shape: bf16[32,16], index: 12, kind: input, shape index: {}]
  %s13 = inlined_call_operand.vmem [shape: f32[1,16], index: 13, kind: input, shape index: {}]
  %s14 = inlined_call_operand.vmem [shape: bf16[32,16], index: 14, kind: input, shape index: {}]
  %s15 = inlined_call_operand.vmem [shape: f32[1,16], index: 15, kind: input, shape index: {}]
  %s16 = inlined_call_operand.vmem [shape: bf16[16,2], index: 16, kind: input, shape index: {}]
  %s17 = inlined_call_operand.vmem [shape: f32[1,2], index: 17, kind: input, shape index: {}]
  %s18 = inlined_call_operand.vmem [shape: f32[16,2], index: 18, kind: output, shape index: {}]
  %s19 = sld [smem:[#allocation0]]
  $region101: #{tpu_custom_call.1} parent=0
    _
  %s21 = ssub.s32 1, %s19
  %s22 = scalar_select 0, %s21, %s19
  %s23 = sshll.u32 %s0, 4
  %s24 = int_to_ptr.vmem [resolvable:$true] %s23
  %26 = dma.vmem_to_smem %s24, 256, [#allocation4], [#allocation3]
  %27 = dma.done [#allocation3], 256
  %28 = sfence
  loop: start=0, step=1, limit=4
  $region2: #{tpu_custom_call.1} parent=0 // loop_pre_header
    _
  $region3: #{tpu_custom_call.1} parent=0 // loop_header
    %s30 = sphi 0, %s34
    %p31 = scmp.ge.s32.totalorder %s30, 4
    %s40 = sphi 0, %s42
    %s43 = sphi 0, %s40
    %s44 = sphi 0, %s43
    %s60 = sphi 0, %s44
    %s64 = sphi 0, %s64
    %s66 = sphi 0, %s64
    %s67 = sphi 0, %s66
    %s81 = sphi 0, %s67
    %s85 = sphi 0, %s85
    %s87 = sphi 0, %s85
    %s88 = sphi 0, %s87
    %s102 = sphi 0, %s88
    %s106 = sphi 0, %s106
    %s108 = sphi 0, %s106
    %s109 = sphi 0, %s108
    %s123 = sphi 0, %s109
    %s127 = sphi 0, %s127
    %s129 = sphi 0, %s127
    %s130 = sphi 0, %s129
    %s144 = sphi 0, %s130
    %s148 = sphi 0, %s148
    %s150 = sphi 0, %s148
    %s151 = sphi 0, %s150
    %s165 = sphi 0, %s151
    %s169 = sphi 0, %s169
    %s171 = sphi 0, %s169
    %s172 = sphi 0, %s171
    %s186 = sphi 0, %s172
    %s190 = sphi 0, %s190
    %s192 = sphi 0, %s190
    %s193 = sphi 0, %s192
    %s207 = sphi 0, %s193
    %s211 = sphi 0, %s211
    %s213 = sphi 0, %s211
    %s214 = sphi 0, %s213
    %s228 = sphi 0, %s214
    %s232 = sphi 0, %s232
    %s234 = sphi 0, %s232
    %s235 = sphi 0, %s234
    %s249 = sphi 0, %s235
    %s253 = sphi 0, %s253
    %s255 = sphi 0, %s253
    %s256 = sphi 0, %s255
    %s270 = sphi 0, %s256
    %s274 = sphi 0, %s274
    %s276 = sphi 0, %s274
    %s277 = sphi 0, %s276
    %s291 = sphi 0, %s277
    %s295 = sphi 0, %s295
    %s297 = sphi 0, %s295
    %s298 = sphi 0, %s297
    %s312 = sphi 0, %s298
    %s316 = sphi 0, %s316
    %s318 = sphi 0, %s316
    %s319 = sphi 0, %s318
    %s333 = sphi 0, %s319
    %s337 = sphi 0, %s337
    %s339 = sphi 0, %s337
    %s340 = sphi 0, %s339
    %s354 = sphi 0, %s340
    %s358 = sphi 0, %s358
    %s360 = sphi 0, %s358
    %s361 = sphi 0, %s360
    %s375 = sphi 0, %s361
    %s379 = sphi 0, %s379
    %s381 = sphi 0, %s379
    %s382 = sphi 0, %s381
    %s396 = sphi 0, %s382
    %s402 = sphi 0, %s404
    %s405 = sphi 0, %s402
    %s406 = sphi 0, %s405
    %s422 = sphi 0, %s406
  $region4: #{tpu_custom_call.1} parent=0 // loop_header_branch
    %33 = sbr.rel (%p31) target = $region8
  $region5: #{tpu_custom_call.1} parent=0 // loop_body
    %s35 = ssub.s32 %s30, 1
    %s36 = ssub.s32 %s30, 2
    %s37 = sadd.s32 %s30, 1
    %s38 = ssub.s32 %s30, %s37
    %p39 = scmp.eq.s32.totalorder %s38, 0
    %s41 = sadd.s32 %s40, 1
    %s42 = scalar_select %p39, %s40, %s41
    %p45 = pneg %p39
    %p46 = scmp.eq.s32.totalorder %s30, 1
    %p47 = por %p45, %p46
    %p48 = scmp.ne.s32.totalorder %s40, %s43
    %p49 = scmp.eq.s32.totalorder %s30, 0
    %p50 = por %p48, %p49
    %p51 = scmp.ne.s32.totalorder %s40, %s43
    %p52 = scmp.eq.s32.totalorder %s35, 1
    %p53 = por %p51, %p52
    %p54 = scmp.ne.s32.totalorder %s43, %s44
    %p55 = scmp.eq.s32.totalorder %s35, 0
    %p56 = por %p54, %p55
    %p57 = scmp.ne.s32.totalorder %s43, %s44
    %p58 = scmp.eq.s32.totalorder %s36, 1
    %p59 = por %p57, %p58
    %p61 = scmp.ne.s32.totalorder %s44, %s60
    %p62 = scmp.eq.s32.totalorder %s36, 0
    %p63 = por %p61, %p62
    %s65 = sadd.s32 %s64, 1
    %p68 = scmp.eq.s32.totalorder %s30, 1
    %p69 = scmp.ne.s32.totalorder %s64, %s66
    %p70 = scmp.eq.s32.totalorder %s30, 0
    %p71 = por %p69, %p70
    %p72 = scmp.ne.s32.totalorder %s64, %s66
    %p73 = scmp.eq.s32.totalorder %s35, 1
    %p74 = por %p72, %p73
    %p75 = scmp.ne.s32.totalorder %s66, %s67
    %p76 = scmp.eq.s32.totalorder %s35, 0
    %p77 = por %p75, %p76
    %p78 = scmp.ne.s32.totalorder %s66, %s67
    %p79 = scmp.eq.s32.totalorder %s36, 1
    %p80 = por %p78, %p79
    %p82 = scmp.ne.s32.totalorder %s67, %s81
    %p83 = scmp.eq.s32.totalorder %s36, 0
    %p84 = por %p82, %p83
    %s86 = sadd.s32 %s85, 1
    %p89 = scmp.eq.s32.totalorder %s30, 1
    %p90 = scmp.ne.s32.totalorder %s85, %s87
    %p91 = scmp.eq.s32.totalorder %s30, 0
    %p92 = por %p90, %p91
    %p93 = scmp.ne.s32.totalorder %s85, %s87
    %p94 = scmp.eq.s32.totalorder %s35, 1
    %p95 = por %p93, %p94
    %p96 = scmp.ne.s32.totalorder %s87, %s88
    %p97 = scmp.eq.s32.totalorder %s35, 0
    %p98 = por %p96, %p97
    %p99 = scmp.ne.s32.totalorder %s87, %s88
    %p100 = scmp.eq.s32.totalorder %s36, 1
    %p101 = por %p99, %p100
    %p103 = scmp.ne.s32.totalorder %s88, %s102
    %p104 = scmp.eq.s32.totalorder %s36, 0
    %p105 = por %p103, %p104
    %s107 = sadd.s32 %s106, 1
    %p110 = scmp.eq.s32.totalorder %s30, 1
    %p111 = scmp.ne.s32.totalorder %s106, %s108
    %p112 = scmp.eq.s32.totalorder %s30, 0
    %p113 = por %p111, %p112
    %p114 = scmp.ne.s32.totalorder %s106, %s108
    %p115 = scmp.eq.s32.totalorder %s35, 1
    %p116 = por %p114, %p115
    %p117 = scmp.ne.s32.totalorder %s108, %s109
    %p118 = scmp.eq.s32.totalorder %s35, 0
    %p119 = por %p117, %p118
    %p120 = scmp.ne.s32.totalorder %s108, %s109
    %p121 = scmp.eq.s32.totalorder %s36, 1
    %p122 = por %p120, %p121
    %p124 = scmp.ne.s32.totalorder %s109, %s123
    %p125 = scmp.eq.s32.totalorder %s36, 0
    %p126 = por %p124, %p125
    %s128 = sadd.s32 %s127, 1
    %p131 = scmp.eq.s32.totalorder %s30, 1
    %p132 = scmp.ne.s32.totalorder %s127, %s129
    %p133 = scmp.eq.s32.totalorder %s30, 0
    %p134 = por %p132, %p133
    %p135 = scmp.ne.s32.totalorder %s127, %s129
    %p136 = scmp.eq.s32.totalorder %s35, 1
    %p137 = por %p135, %p136
    %p138 = scmp.ne.s32.totalorder %s129, %s130
    %p139 = scmp.eq.s32.totalorder %s35, 0
    %p140 = por %p138, %p139
    %p141 = scmp.ne.s32.totalorder %s129, %s130
    %p142 = scmp.eq.s32.totalorder %s36, 1
    %p143 = por %p141, %p142
    %p145 = scmp.ne.s32.totalorder %s130, %s144
    %p146 = scmp.eq.s32.totalorder %s36, 0
    %p147 = por %p145, %p146
    %s149 = sadd.s32 %s148, 1
    %p152 = scmp.eq.s32.totalorder %s30, 1
    %p153 = scmp.ne.s32.totalorder %s148, %s150
    %p154 = scmp.eq.s32.totalorder %s30, 0
    %p155 = por %p153, %p154
    %p156 = scmp.ne.s32.totalorder %s148, %s150
    %p157 = scmp.eq.s32.totalorder %s35, 1
    %p158 = por %p156, %p157
    %p159 = scmp.ne.s32.totalorder %s150, %s151
    %p160 = scmp.eq.s32.totalorder %s35, 0
    %p161 = por %p159, %p160
    %p162 = scmp.ne.s32.totalorder %s150, %s151
    %p163 = scmp.eq.s32.totalorder %s36, 1
    %p164 = por %p162, %p163
    %p166 = scmp.ne.s32.totalorder %s151, %s165
    %p167 = scmp.eq.s32.totalorder %s36, 0
    %p168 = por %p166, %p167
    %s170 = sadd.s32 %s169, 1
    %p173 = scmp.eq.s32.totalorder %s30, 1
    %p174 = scmp.ne.s32.totalorder %s169, %s171
    %p175 = scmp.eq.s32.totalorder %s30, 0
    %p176 = por %p174, %p175
    %p177 = scmp.ne.s32.totalorder %s169, %s171
    %p178 = scmp.eq.s32.totalorder %s35, 1
    %p179 = por %p177, %p178
    %p180 = scmp.ne.s32.totalorder %s171, %s172
    %p181 = scmp.eq.s32.totalorder %s35, 0
    %p182 = por %p180, %p181
    %p183 = scmp.ne.s32.totalorder %s171, %s172
    %p184 = scmp.eq.s32.totalorder %s36, 1
    %p185 = por %p183, %p184
    %p187 = scmp.ne.s32.totalorder %s172, %s186
    %p188 = scmp.eq.s32.totalorder %s36, 0
    %p189 = por %p187, %p188
    %s191 = sadd.s32 %s190, 1
    %p194 = scmp.eq.s32.totalorder %s30, 1
    %p195 = scmp.ne.s32.totalorder %s190, %s192
    %p196 = scmp.eq.s32.totalorder %s30, 0
    %p197 = por %p195, %p196
    %p198 = scmp.ne.s32.totalorder %s190, %s192
    %p199 = scmp.eq.s32.totalorder %s35, 1
    %p200 = por %p198, %p199
    %p201 = scmp.ne.s32.totalorder %s192, %s193
    %p202 = scmp.eq.s32.totalorder %s35, 0
    %p203 = por %p201, %p202
    %p204 = scmp.ne.s32.totalorder %s192, %s193
    %p205 = scmp.eq.s32.totalorder %s36, 1
    %p206 = por %p204, %p205
    %p208 = scmp.ne.s32.totalorder %s193, %s207
    %p209 = scmp.eq.s32.totalorder %s36, 0
    %p210 = por %p208, %p209
    %s212 = sadd.s32 %s211, 1
    %p215 = scmp.eq.s32.totalorder %s30, 1
    %p216 = scmp.ne.s32.totalorder %s211, %s213
    %p217 = scmp.eq.s32.totalorder %s30, 0
    %p218 = por %p216, %p217
    %p219 = scmp.ne.s32.totalorder %s211, %s213
    %p220 = scmp.eq.s32.totalorder %s35, 1
    %p221 = por %p219, %p220
    %p222 = scmp.ne.s32.totalorder %s213, %s214
    %p223 = scmp.eq.s32.totalorder %s35, 0
    %p224 = por %p222, %p223
    %p225 = scmp.ne.s32.totalorder %s213, %s214
    %p226 = scmp.eq.s32.totalorder %s36, 1
    %p227 = por %p225, %p226
    %p229 = scmp.ne.s32.totalorder %s214, %s228
    %p230 = scmp.eq.s32.totalorder %s36, 0
    %p231 = por %p229, %p230
    %s233 = sadd.s32 %s232, 1
    %p236 = scmp.eq.s32.totalorder %s30, 1
    %p237 = scmp.ne.s32.totalorder %s232, %s234
    %p238 = scmp.eq.s32.totalorder %s30, 0
    %p239 = por %p237, %p238
    %p240 = scmp.ne.s32.totalorder %s232, %s234
    %p241 = scmp.eq.s32.totalorder %s35, 1
    %p242 = por %p240, %p241
    %p243 = scmp.ne.s32.totalorder %s234, %s235
    %p244 = scmp.eq.s32.totalorder %s35, 0
    %p245 = por %p243, %p244
    %p246 = scmp.ne.s32.totalorder %s234, %s235
    %p247 = scmp.eq.s32.totalorder %s36, 1
    %p248 = por %p246, %p247
    %p250 = scmp.ne.s32.totalorder %s235, %s249
    %p251 = scmp.eq.s32.totalorder %s36, 0
    %p252 = por %p250, %p251
    %s254 = sadd.s32 %s253, 1
    %p257 = scmp.eq.s32.totalorder %s30, 1
    %p258 = scmp.ne.s32.totalorder %s253, %s255
    %p259 = scmp.eq.s32.totalorder %s30, 0
    %p260 = por %p258, %p259
    %p261 = scmp.ne.s32.totalorder %s253, %s255
    %p262 = scmp.eq.s32.totalorder %s35, 1
    %p263 = por %p261, %p262
    %p264 = scmp.ne.s32.totalorder %s255, %s256
    %p265 = scmp.eq.s32.totalorder %s35, 0
    %p266 = por %p264, %p265
    %p267 = scmp.ne.s32.totalorder %s255, %s256
    %p268 = scmp.eq.s32.totalorder %s36, 1
    %p269 = por %p267, %p268
    %p271 = scmp.ne.s32.totalorder %s256, %s270
    %p272 = scmp.eq.s32.totalorder %s36, 0
    %p273 = por %p271, %p272
    %s275 = sadd.s32 %s274, 1
    %p278 = scmp.eq.s32.totalorder %s30, 1
    %p279 = scmp.ne.s32.totalorder %s274, %s276
    %p280 = scmp.eq.s32.totalorder %s30, 0
    %p281 = por %p279, %p280
    %p282 = scmp.ne.s32.totalorder %s274, %s276
    %p283 = scmp.eq.s32.totalorder %s35, 1
    %p284 = por %p282, %p283
    %p285 = scmp.ne.s32.totalorder %s276, %s277
    %p286 = scmp.eq.s32.totalorder %s35, 0
    %p287 = por %p285, %p286
    %p288 = scmp.ne.s32.totalorder %s276, %s277
    %p289 = scmp.eq.s32.totalorder %s36, 1
    %p290 = por %p288, %p289
    %p292 = scmp.ne.s32.totalorder %s277, %s291
    %p293 = scmp.eq.s32.totalorder %s36, 0
    %p294 = por %p292, %p293
    %s296 = sadd.s32 %s295, 1
    %p299 = scmp.eq.s32.totalorder %s30, 1
    %p300 = scmp.ne.s32.totalorder %s295, %s297
    %p301 = scmp.eq.s32.totalorder %s30, 0
    %p302 = por %p300, %p301
    %p303 = scmp.ne.s32.totalorder %s295, %s297
    %p304 = scmp.eq.s32.totalorder %s35, 1
    %p305 = por %p303, %p304
    %p306 = scmp.ne.s32.totalorder %s297, %s298
    %p307 = scmp.eq.s32.totalorder %s35, 0
    %p308 = por %p306, %p307
    %p309 = scmp.ne.s32.totalorder %s297, %s298
    %p310 = scmp.eq.s32.totalorder %s36, 1
    %p311 = por %p309, %p310
    %p313 = scmp.ne.s32.totalorder %s298, %s312
    %p314 = scmp.eq.s32.totalorder %s36, 0
    %p315 = por %p313, %p314
    %s317 = sadd.s32 %s316, 1
    %p320 = scmp.eq.s32.totalorder %s30, 1
    %p321 = scmp.ne.s32.totalorder %s316, %s318
    %p322 = scmp.eq.s32.totalorder %s30, 0
    %p323 = por %p321, %p322
    %p324 = scmp.ne.s32.totalorder %s316, %s318
    %p325 = scmp.eq.s32.totalorder %s35, 1
    %p326 = por %p324, %p325
    %p327 = scmp.ne.s32.totalorder %s318, %s319
    %p328 = scmp.eq.s32.totalorder %s35, 0
    %p329 = por %p327, %p328
    %p330 = scmp.ne.s32.totalorder %s318, %s319
    %p331 = scmp.eq.s32.totalorder %s36, 1
    %p332 = por %p330, %p331
    %p334 = scmp.ne.s32.totalorder %s319, %s333
    %p335 = scmp.eq.s32.totalorder %s36, 0
    %p336 = por %p334, %p335
    %s338 = sadd.s32 %s337, 1
    %p341 = scmp.eq.s32.totalorder %s30, 1
    %p342 = scmp.ne.s32.totalorder %s337, %s339
    %p343 = scmp.eq.s32.totalorder %s30, 0
    %p344 = por %p342, %p343
    %p345 = scmp.ne.s32.totalorder %s337, %s339
    %p346 = scmp.eq.s32.totalorder %s35, 1
    %p347 = por %p345, %p346
    %p348 = scmp.ne.s32.totalorder %s339, %s340
    %p349 = scmp.eq.s32.totalorder %s35, 0
    %p350 = por %p348, %p349
    %p351 = scmp.ne.s32.totalorder %s339, %s340
    %p352 = scmp.eq.s32.totalorder %s36, 1
    %p353 = por %p351, %p352
    %p355 = scmp.ne.s32.totalorder %s340, %s354
    %p356 = scmp.eq.s32.totalorder %s36, 0
    %p357 = por %p355, %p356
    %s359 = sadd.s32 %s358, 1
    %p362 = scmp.eq.s32.totalorder %s30, 1
    %p363 = scmp.ne.s32.totalorder %s358, %s360
    %p364 = scmp.eq.s32.totalorder %s30, 0
    %p365 = por %p363, %p364
    %p366 = scmp.ne.s32.totalorder %s358, %s360
    %p367 = scmp.eq.s32.totalorder %s35, 1
    %p368 = por %p366, %p367
    %p369 = scmp.ne.s32.totalorder %s360, %s361
    %p370 = scmp.eq.s32.totalorder %s35, 0
    %p371 = por %p369, %p370
    %p372 = scmp.ne.s32.totalorder %s360, %s361
    %p373 = scmp.eq.s32.totalorder %s36, 1
    %p374 = por %p372, %p373
    %p376 = scmp.ne.s32.totalorder %s361, %s375
    %p377 = scmp.eq.s32.totalorder %s36, 0
    %p378 = por %p376, %p377
    %s380 = sadd.s32 %s379, 1
    %p383 = scmp.eq.s32.totalorder %s30, 1
    %p384 = scmp.ne.s32.totalorder %s379, %s381
    %p385 = scmp.eq.s32.totalorder %s30, 0
    %p386 = por %p384, %p385
    %p387 = scmp.ne.s32.totalorder %s379, %s381
    %p388 = scmp.eq.s32.totalorder %s35, 1
    %p389 = por %p387, %p388
    %p390 = scmp.ne.s32.totalorder %s381, %s382
    %p391 = scmp.eq.s32.totalorder %s35, 0
    %p392 = por %p390, %p391
    %p393 = scmp.ne.s32.totalorder %s381, %s382
    %p394 = scmp.eq.s32.totalorder %s36, 1
    %p395 = por %p393, %p394
    %p397 = scmp.ne.s32.totalorder %s382, %s396
    %p398 = scmp.eq.s32.totalorder %s36, 0
    %p399 = por %p397, %p398
    %s400 = ssub.s32 %s30, %s37
    %p401 = scmp.eq.s32.totalorder %s400, 0
    %s403 = sadd.s32 %s402, 1
    %s404 = scalar_select %p401, %s402, %s403
    %p407 = pneg %p401
    %p408 = scmp.eq.s32.totalorder %s30, 1
    %p409 = por %p407, %p408
    %p410 = scmp.ne.s32.totalorder %s402, %s405
    %p411 = scmp.eq.s32.totalorder %s30, 0
    %p412 = por %p410, %p411
    %p413 = scmp.ne.s32.totalorder %s402, %s405
    %p414 = scmp.eq.s32.totalorder %s35, 1
    %p415 = por %p413, %p414
    %p416 = scmp.ne.s32.totalorder %s405, %s406
    %p417 = scmp.eq.s32.totalorder %s35, 0
    %p418 = por %p416, %p417
    %p419 = scmp.ne.s32.totalorder %s405, %s406
    %p420 = scmp.eq.s32.totalorder %s36, 1
    %p421 = por %p419, %p420
    %p423 = scmp.ne.s32.totalorder %s406, %s422
    %p424 = scmp.eq.s32.totalorder %s36, 0
    %p425 = por %p423, %p424
    %p426 = scmp.le.s32.totalorder 1, %s30
    %p427 = scmp.lt.s32.totalorder %s30, 3
    %p428 = pnand %p426, %p427
    %p429 = pneg %p428
    // Predicated region
    $region9: #{tpu_custom_call.1} parent=5 // pred_check
      _
    $region10: #{tpu_custom_call.1} parent=5 // pred_check_branch
      %431 = sbr.rel (%p428) target = $region12
    $region11: #{tpu_custom_call.1} parent=5 // pred_region
      %s432 = ssub.s32 %s30, 1
      // Predicated region
      $region13: #{tpu_custom_call.1} parent=11 // pred_check
        %p433 = pneg %p77
      $region14: #{tpu_custom_call.1} parent=11 // pred_check_branch
        %435 = sbr.rel (%p433) target = $region16
      $region15: #{tpu_custom_call.1} parent=11 // pred_region
        _
      $region16: #{tpu_custom_call.1} parent=11 // pred_fallthru
        _
      // Predicated region
      $region17: #{tpu_custom_call.1} parent=11 // pred_check
        %p436 = pneg %p98
      $region18: #{tpu_custom_call.1} parent=11 // pred_check_branch
        %438 = sbr.rel (%p436) target = $region20
      $region19: #{tpu_custom_call.1} parent=11 // pred_region
        _
      $region20: #{tpu_custom_call.1} parent=11 // pred_fallthru
        _
      // Predicated region
      $region21: #{tpu_custom_call.1} parent=11 // pred_check
        %p439 = pneg %p119
      $region22: #{tpu_custom_call.1} parent=11 // pred_check_branch
        %441 = sbr.rel (%p439) target = $region24
      $region23: #{tpu_custom_call.1} parent=11 // pred_region
        _
      $region24: #{tpu_custom_call.1} parent=11 // pred_fallthru
        _
      // Predicated region
      $region25: #{tpu_custom_call.1} parent=11 // pred_check
        %p442 = pneg %p140
      $region26: #{tpu_custom_call.1} parent=11 // pred_check_branch
        %444 = sbr.rel (%p442) target = $region28
      $region27: #{tpu_custom_call.1} parent=11 // pred_region
        _
      $region28: #{tpu_custom_call.1} parent=11 // pred_fallthru
        _
      // Predicated region
      $region29: #{tpu_custom_call.1} parent=11 // pred_check
        %p445 = pneg %p161
      $region30: #{tpu_custom_call.1} parent=11 // pred_check_branch
        %447 = sbr.rel (%p445) target = $region32
      $region31: #{tpu_custom_call.1} parent=11 // pred_region
        _
      $region32: #{tpu_custom_call.1} parent=11 // pred_fallthru
        _
      // Predicated region
      $region33: #{tpu_custom_call.1} parent=11 // pred_check
        %p448 = pneg %p182
      $region34: #{tpu_custom_call.1} parent=11 // pred_check_branch
        %450 = sbr.rel (%p448) target = $region36
      $region35: #{tpu_custom_call.1} parent=11 // pred_region
        _
      $region36: #{tpu_custom_call.1} parent=11 // pred_fallthru
        _
      // Predicated region
      $region37: #{tpu_custom_call.1} parent=11 // pred_check
        %p451 = pneg %p203
      $region38: #{tpu_custom_call.1} parent=11 // pred_check_branch
        %453 = sbr.rel (%p451) target = $region40
      $region39: #{tpu_custom_call.1} parent=11 // pred_region
        _
      $region40: #{tpu_custom_call.1} parent=11 // pred_fallthru
        _
      // Predicated region
      $region41: #{tpu_custom_call.1} parent=11 // pred_check
        %p454 = pneg %p224
      $region42: #{tpu_custom_call.1} parent=11 // pred_check_branch
        %456 = sbr.rel (%p454) target = $region44
      $region43: #{tpu_custom_call.1} parent=11 // pred_region
        _
      $region44: #{tpu_custom_call.1} parent=11 // pred_fallthru
        _
      // Predicated region
      $region45: #{tpu_custom_call.1} parent=11 // pred_check
        %p457 = pneg %p245
      $region46: #{tpu_custom_call.1} parent=11 // pred_check_branch
        %459 = sbr.rel (%p457) target = $region48
      $region47: #{tpu_custom_call.1} parent=11 // pred_region
        _
      $region48: #{tpu_custom_call.1} parent=11 // pred_fallthru
        _
      // Predicated region
      $region49: #{tpu_custom_call.1} parent=11 // pred_check
        %p460 = pneg %p266
      $region50: #{tpu_custom_call.1} parent=11 // pred_check_branch
        %462 = sbr.rel (%p460) target = $region52
      $region51: #{tpu_custom_call.1} parent=11 // pred_region
        _
      $region52: #{tpu_custom_call.1} parent=11 // pred_fallthru
        _
      // Predicated region
      $region53: #{tpu_custom_call.1} parent=11 // pred_check
        %p463 = pneg %p287
      $region54: #{tpu_custom_call.1} parent=11 // pred_check_branch
        %465 = sbr.rel (%p463) target = $region56
      $region55: #{tpu_custom_call.1} parent=11 // pred_region
        _
      $region56: #{tpu_custom_call.1} parent=11 // pred_fallthru
        _
      // Predicated region
      $region57: #{tpu_custom_call.1} parent=11 // pred_check
        %p466 = pneg %p308
      $region58: #{tpu_custom_call.1} parent=11 // pred_check_branch
        %468 = sbr.rel (%p466) target = $region60
      $region59: #{tpu_custom_call.1} parent=11 // pred_region
        _
      $region60: #{tpu_custom_call.1} parent=11 // pred_fallthru
        _
      // Predicated region
      $region61: #{tpu_custom_call.1} parent=11 // pred_check
        %p469 = pneg %p329
      $region62: #{tpu_custom_call.1} parent=11 // pred_check_branch
        %471 = sbr.rel (%p469) target = $region64
      $region63: #{tpu_custom_call.1} parent=11 // pred_region
        _
      $region64: #{tpu_custom_call.1} parent=11 // pred_fallthru
        _
      // Predicated region
      $region65: #{tpu_custom_call.1} parent=11 // pred_check
        %p472 = pneg %p350
      $region66: #{tpu_custom_call.1} parent=11 // pred_check_branch
        %474 = sbr.rel (%p472) target = $region68
      $region67: #{tpu_custom_call.1} parent=11 // pred_region
        _
      $region68: #{tpu_custom_call.1} parent=11 // pred_fallthru
        _
      // Predicated region
      $region69: #{tpu_custom_call.1} parent=11 // pred_check
        %p475 = pneg %p371
      $region70: #{tpu_custom_call.1} parent=11 // pred_check_branch
        %477 = sbr.rel (%p475) target = $region72
      $region71: #{tpu_custom_call.1} parent=11 // pred_region
        _
      $region72: #{tpu_custom_call.1} parent=11 // pred_fallthru
        _
      // Predicated region
      $region73: #{tpu_custom_call.1} parent=11 // pred_check
        %p478 = pneg %p392
      $region74: #{tpu_custom_call.1} parent=11 // pred_check_branch
        %480 = sbr.rel (%p478) target = $region76
      $region75: #{tpu_custom_call.1} parent=11 // pred_region
        _
      $region76: #{tpu_custom_call.1} parent=11 // pred_fallthru
        _
    $region12: #{tpu_custom_call.1} parent=5 // pred_fallthru
      _
    %p481 = scmp.lt.s32.totalorder %s30, 2
    // Predicated region
    $region77: #{tpu_custom_call.1} parent=5 // pred_check
      %p482 = pneg %p481
    $region78: #{tpu_custom_call.1} parent=5 // pred_check_branch
      %484 = sbr.rel (%p482) target = $region80
    $region79: #{tpu_custom_call.1} parent=5 // pred_region
      // Predicated region
      $region81: #{tpu_custom_call.1} parent=79 // pred_check
        %p485 = pneg %p50
      $region82: #{tpu_custom_call.1} parent=79 // pred_check_branch
        %487 = sbr.rel (%p485) target = $region84
      $region83: #{tpu_custom_call.1} parent=79 // pred_region
        %s488 = smul.u32 8, %s30
        %p489 = scmp.lt.s32.totalorder %s488, 15
        %s490 = scalar_select %p489, %s488, 15
        %s491 = smul.addr %s490, 4
        %s492 = scalar_lea.vmem %s1, %s491
        %s493 = smul.u32 8, %s30
      $region84: #{tpu_custom_call.1} parent=79 // pred_fallthru
        _
    $region80: #{tpu_custom_call.1} parent=5 // pred_fallthru
      _
    %p494 = scmp.le.s32.totalorder 1, %s30
    %p495 = scmp.lt.s32.totalorder %s30, 3
    %p496 = pnand %p494, %p495
    %p497 = pneg %p496
    // Predicated region
    $region85: #{tpu_custom_call.1} parent=5 // pred_check
      _
    $region86: #{tpu_custom_call.1} parent=5 // pred_check_branch
      %499 = sbr.rel (%p496) target = $region88
    $region87: #{tpu_custom_call.1} parent=5 // pred_region
      %s500 = ssub.s32 %s30, 1
      %s501 = smul.u32 8, %s35
      %p502 = scmp.lt.s32.totalorder %s501, 15
      %s503 = scalar_select %p502, %s501, 15
      %s504 = smul.addr %s503, 4
      %s505 = scalar_lea.vmem %s1, %s504
      %p506 = pneg %p56
      %p507 = pneg %p53
      %p508 = pneg %p77
      %p509 = pneg %p74
      %p510 = pneg %p98
      %p511 = pneg %p95
      %p512 = pneg %p119
      %p513 = pneg %p116
      %p514 = pneg %p140
      %p515 = pneg %p137
      %p516 = pneg %p161
      %p517 = pneg %p158
      %p518 = pneg %p182
      %p519 = pneg %p179
      %p520 = pneg %p203
      %p521 = pneg %p200
      %p522 = pneg %p224
      %p523 = pneg %p221
      %p524 = pneg %p245
      %p525 = pneg %p242
      %p526 = pneg %p266
      %p527 = pneg %p263
      %p528 = pneg %p287
      %p529 = pneg %p284
      %p530 = pneg %p308
      %p531 = pneg %p305
      %p532 = pneg %p329
      %p533 = pneg %p326
      %p534 = pneg %p350
      %p535 = pneg %p347
      %p536 = pneg %p371
      %p537 = pneg %p368
      %p538 = pneg %p392
      %p539 = pneg %p389
      %p540 = pneg %p418
      %p541 = pneg %p415
      %p542 = scmp.lt.s32.totalorder %s35, 1
      %s543 = scalar_select %p542, %s35, 1
      %s544 = smul.addr %s543, 8
      %s545 = scalar_lea.vmem %s18, %s544
      %s546 = smul.u32 8, %s35
      %p547 = scmp.lt.s32.totalorder %s546, 15
      %s548 = scalar_select %p547, %s546, 15
      %s549 = smul.addr %s548, 4
      %s550 = scalar_lea.vmem %s1, %s549
      %s551 = smul.u32 8, %s35
      %p552 = scmp.lt.s32.totalorder %s35, 1
      %s553 = scalar_select %p552, %s35, 1
      %s554 = smul.addr %s553, 8
      %s555 = scalar_lea.vmem %s18, %s554
      %v557 = vlaneseq
      %v558 = vshrl.u32 %v557, 7
      %v559 = vlaneseq
      %v560 = vand.u32 %v559, 127
      %s561 = smul.u32 %s35, 8
      %s562 = smul.u32 %s561, 128
      %s563 = sld [smem:[#allocation4 + %s562]]
      %s564 = sadd.s32 %s562, 1
      %s565 = sld [smem:[#allocation4 + %s564]]
      %s566 = sadd.s32 %s562, 2
      %s567 = sld [smem:[#allocation4 + %s566]]
      %s568 = sadd.s32 %s562, 3
      %s569 = sld [smem:[#allocation4 + %s568]]
      %s570 = sadd.s32 %s562, 4
      %s571 = sld [smem:[#allocation4 + %s570]]
      %vm572 = vcmp.eq.s32.totalorder %v558, 0
      %v573 = vstv %s563
      %vm574 = vcmp.eq.s32.totalorder %v560, %v573
      %vm575 = vmand %vm572, %vm574
      %s576 = ssub.s32 %s565, 1
      %vm577 = vcmp.eq.s32.totalorder %v558, 1
      %v578 = vstv %s576
      %vm579 = vcmp.eq.s32.totalorder %v560, %v578
      %vm580 = vmand %vm577, %vm579
      %vm581 = vmor %vm575, %vm580
      %vm582 = vcmp.eq.s32.totalorder %v558, 2
      %vm583 = vcmp.ge.s32.totalorder %v560, %v573
      %v584 = vstv %s565
      %vm585 = vcmp.lt.s32.totalorder %v560, %v584
      %vm586 = vmand %vm583, %vm585
      %vm587 = vmand %vm582, %vm586
      %vm588 = vmor %vm581, %vm587
      %vm589 = vcmp.eq.s32.totalorder %v558, 3
      %v590 = vstv %s567
      %vm591 = vcmp.eq.s32.totalorder %v560, %v590
      %vm592 = vmand %vm589, %vm591
      %vm593 = vmor %vm588, %vm592
      %s594 = ssub.s32 %s569, 1
      %vm595 = vcmp.eq.s32.totalorder %v558, 4
      %v596 = vstv %s594
      %vm597 = vcmp.eq.s32.totalorder %v560, %v596
      %vm598 = vmand %vm595, %vm597
      %vm599 = vmor %vm593, %vm598
      %vm600 = vcmp.eq.s32.totalorder %v558, 5
      %vm601 = vcmp.ge.s32.totalorder %v560, %v590
      %v602 = vstv %s569
      %vm603 = vcmp.lt.s32.totalorder %v560, %v602
      %vm604 = vmand %vm601, %vm603
      %vm605 = vmand %vm600, %vm604
      %vm606 = vmor %vm599, %vm605
      %vm607 = vcmp.eq.s32.totalorder %v558, 6
      %v608 = vstv %s571
      %vm609 = vcmp.eq.s32.totalorder %v560, %v608
      %vm610 = vmand %vm607, %vm609
      %vm611 = vmor %vm606, %vm610
      %v612 = vsel %vm611, 1, 0
      %v613 = vcvt.s32.f32 %v612
      %v614 = vpack.c.bf16 %v613, %v613
      %v615 = vld [vmem:[%s550] sm:$0xf]
      %vm616 = vcmask 64512
      %v618 = vsel %vm616, %v614, 0
      %vm620 = vcmask 1043456
      %v622 = vsel %vm620, %v615, 0
      %624 = vmatprep.subr.bf16.mxu0 0
      %625 = vmatpush1.bf16.msra.mxu0 %v622
      %626 = vmatprep.subr.bf16.mxu0 0
      %627 = vmatpush1.bf16.msra.mxu0 0
      %628 = vmatprep.subr.bf16.mxu0 0
      %629 = vmatpush1.bf16.msra.mxu0 0
      %630 = vmatprep.subr.bf16.mxu0 0
      %631 = vmatpush1.bf16.msra.mxu0 0
      %632 = vmatprep.subr.bf16.mxu0 0
      %633 = vmatpush1.bf16.msra.mxu0 0
      %634 = vmatprep.subr.bf16.mxu0 0
      %635 = vmatpush1.bf16.msra.mxu0 0
      %636 = vmatprep.subr.bf16.mxu0 0
      %637 = vmatpush1.bf16.msra.mxu0 0
      %638 = vmatprep.subr.bf16.mxu0 0
      %639 = vmatpush1.bf16.msra.mxu0 0
      %640 = vmatprep.subr.bf16.mxu0 0
      %641 = vmatpush1.bf16.msra.mxu0 0
      %642 = vmatprep.subr.bf16.mxu0 0
      %643 = vmatpush1.bf16.msra.mxu0 0
      %644 = vmatprep.subr.bf16.mxu0 0
      %645 = vmatpush1.bf16.msra.mxu0 0
      %646 = vmatprep.subr.bf16.mxu0 0
      %647 = vmatpush1.bf16.msra.mxu0 0
      %648 = vmatprep.subr.bf16.mxu0 0
      %649 = vmatpush1.bf16.msra.mxu0 0
      %650 = vmatprep.subr.bf16.mxu0 0
      %651 = vmatpush1.bf16.msra.mxu0 0
      %652 = vmatprep.subr.bf16.mxu0 0
      %653 = vmatpush1.bf16.msra.mxu0 0
      %654 = vmatprep.subr.bf16.mxu0 0
      %655 = vmatpush1.bf16.msra.mxu0 0
      %656 = vmatprep.mubr.bf16.mxu0 0
      %657 = vmatmul.mubr.bf16.gmra.mrb[0].mxu0 %v618
      %v658 = vpop.f32.mrb[0].mxu0
      %v659 = vadd.f32 0.0, %v658
      %v660 = vpop.f32.mrb[0].mxu0
      %v661 = vpop.f32.mrb[0].mxu0
      %v662 = vpop.f32.mrb[0].mxu0
      %663 = vdwg.mxu0
      %s664 = ssub.s32 %s565, %s563
      %s665 = scvt.s32.f32 %s664
      %v666 = vstv %s665
      %v667 = vrcp.pop %v666
      %s668 = vtos %v667
      %s669 = ssub.s32 %s569, %s567
      %s670 = scvt.s32.f32 %s669
      %v671 = vstv %s670
      %v672 = vrcp.pop %v671
      %s673 = vtos %v672
      %v674 = vstv %s673
      %v675 = vsel %vm600, %v674, 1.0
      %v676 = vstv %s668
      %v677 = vsel %vm582, %v676, %v675
      %v678 = vmul.f32 %v659, %v677
      %vm679 = vcmask 261120
      %680 = vst.msk [vmem:[#allocation2] sm:$0xff] %vm679, %v678
      %s681 = sadd.s32 %s561, 1
      %s682 = smul.u32 %s681, 128
      %s683 = sld [smem:[#allocation4 + %s682]]
      %s684 = sadd.s32 %s682, 1
      %s685 = sld [smem:[#allocation4 + %s684]]
      %s686 = sadd.s32 %s682, 2
      %s687 = sld [smem:[#allocation4 + %s686]]
      %s688 = sadd.s32 %s682, 3
      %s689 = sld [smem:[#allocation4 + %s688]]
      %s690 = sadd.s32 %s682, 4
      %s691 = sld [smem:[#allocation4 + %s690]]
      %v692 = vstv %s683
      %vm693 = vcmp.eq.s32.totalorder %v560, %v692
      %vm694 = vmand %vm572, %vm693
      %s695 = ssub.s32 %s685, 1
      %v696 = vstv %s695
      %vm697 = vcmp.eq.s32.totalorder %v560, %v696
      %vm698 = vmand %vm577, %vm697
      %vm699 = vmor %vm694, %vm698
      %vm700 = vcmp.ge.s32.totalorder %v560, %v692
      %v701 = vstv %s685
      %vm702 = vcmp.lt.s32.totalorder %v560, %v701
      %vm703 = vmand %vm700, %vm702
      %vm704 = vmand %vm582, %vm703
      %vm705 = vmor %vm699, %vm704
      %v706 = vstv %s687
      %vm707 = vcmp.eq.s32.totalorder %v560, %v706
      %vm708 = vmand %vm589, %vm707
      %vm709 = vmor %vm705, %vm708
      %s710 = ssub.s32 %s689, 1
      %v711 = vstv %s710
      %vm712 = vcmp.eq.s32.totalorder %v560, %v711
      %vm713 = vmand %vm595, %vm712
      %vm714 = vmor %vm709, %vm713
      %vm715 = vcmp.ge.s32.totalorder %v560, %v706
      %v716 = vstv %s689
      %vm717 = vcmp.lt.s32.totalorder %v560, %v716
      %vm718 = vmand %vm715, %vm717
      %vm719 = vmand %vm600, %vm718
      %vm720 = vmor %vm714, %vm719
      %v721 = vstv %s691
      %vm722 = vcmp.eq.s32.totalorder %v560, %v721
      %vm723 = vmand %vm607, %vm722
      %vm724 = vmor %vm720, %vm723
      %v725 = vsel %vm724, 1, 0
      %v726 = vcvt.s32.f32 %v725
      %v727 = vpack.c.bf16 %v726, %v726
      %s728 = scalar_lea.vmem %s550, 4
      %v729 = vld [vmem:[%s728] sm:$0xf]
      %v731 = vsel %vm616, %v727, 0
      %v734 = vsel %vm620, %v729, 0
      %736 = vmatprep.subr.bf16.mxu0 0
      %737 = vmatpush1.bf16.msra.mxu0 %v734
      %738 = vmatprep.subr.bf16.mxu0 0
      %739 = vmatpush1.bf16.msra.mxu0 0
      %740 = vmatprep.subr.bf16.mxu0 0
      %741 = vmatpush1.bf16.msra.mxu0 0
      %742 = vmatprep.subr.bf16.mxu0 0
      %743 = vmatpush1.bf16.msra.mxu0 0
      %744 = vmatprep.subr.bf16.mxu0 0
      %745 = vmatpush1.bf16.msra.mxu0 0
      %746 = vmatprep.subr.bf16.mxu0 0
      %747 = vmatpush1.bf16.msra.mxu0 0
      %748 = vmatprep.subr.bf16.mxu0 0
      %749 = vmatpush1.bf16.msra.mxu0 0
      %750 = vmatprep.subr.bf16.mxu0 0
      %751 = vmatpush1.bf16.msra.mxu0 0
      %752 = vmatprep.subr.bf16.mxu0 0
      %753 = vmatpush1.bf16.msra.mxu0 0
      %754 = vmatprep.subr.bf16.mxu0 0
      %755 = vmatpush1.bf16.msra.mxu0 0
      %756 = vmatprep.subr.bf16.mxu0 0
      %757 = vmatpush1.bf16.msra.mxu0 0
      %758 = vmatprep.subr.bf16.mxu0 0
      %759 = vmatpush1.bf16.msra.mxu0 0
      %760 = vmatprep.subr.bf16.mxu0 0
      %761 = vmatpush1.bf16.msra.mxu0 0
      %762 = vmatprep.subr.bf16.mxu0 0
      %763 = vmatpush1.bf16.msra.mxu0 0
      %764 = vmatprep.subr.bf16.mxu0 0
      %765 = vmatpush1.bf16.msra.mxu0 0
      %766 = vmatprep.subr.bf16.mxu0 0
      %767 = vmatpush1.bf16.msra.mxu0 0
      %768 = vmatprep.mubr.bf16.mxu0 0
      %769 = vmatmul.mubr.bf16.gmra.mrb[0].mxu0 %v731
      %v770 = vpop.f32.mrb[0].mxu0
      %v771 = vadd.f32 0.0, %v770
      %v772 = vpop.f32.mrb[0].mxu0
      %v773 = vpop.f32.mrb[0].mxu0
      %v774 = vpop.f32.mrb[0].mxu0
      %775 = vdwg.mxu0
      %s776 = ssub.s32 %s685, %s683
      %s777 = scvt.s32.f32 %s776
      %v778 = vstv %s777
      %v779 = vrcp.pop %v778
      %s780 = vtos %v779
      %s781 = ssub.s32 %s689, %s687
      %s782 = scvt.s32.f32 %s781
      %v783 = vstv %s782
      %v784 = vrcp.pop %v783
      %s785 = vtos %v784
      %v786 = vstv %s785
      %v787 = vsel %vm600, %v786, 1.0
      %v788 = vstv %s780
      %v789 = vsel %vm582, %v788, %v787
      %v790 = vmul.f32 %v771, %v789
      %791 = vst.msk [vmem:[#allocation2 + $0x8] sm:$0xff] %vm679, %v790
      %s792 = sadd.s32 %s561, 2
      %s793 = smul.u32 %s792, 128
      %s794 = sld [smem:[#allocation4 + %s793]]
      %s795 = sadd.s32 %s793, 1
      %s796 = sld [smem:[#allocation4 + %s795]]
      %s797 = sadd.s32 %s793, 2
      %s798 = sld [smem:[#allocation4 + %s797]]
      %s799 = sadd.s32 %s793, 3
      %s800 = sld [smem:[#allocation4 + %s799]]
      %s801 = sadd.s32 %s793, 4
      %s802 = sld [smem:[#allocation4 + %s801]]
      %v803 = vstv %s794
      %vm804 = vcmp.eq.s32.totalorder %v560, %v803
      %vm805 = vmand %vm572, %vm804
      %s806 = ssub.s32 %s796, 1
      %v807 = vstv %s806
      %vm808 = vcmp.eq.s32.totalorder %v560, %v807
      %vm809 = vmand %vm577, %vm808
      %vm810 = vmor %vm805, %vm809
      %vm811 = vcmp.ge.s32.totalorder %v560, %v803
      %v812 = vstv %s796
      %vm813 = vcmp.lt.s32.totalorder %v560, %v812
      %vm814 = vmand %vm811, %vm813
      %vm815 = vmand %vm582, %vm814
      %vm816 = vmor %vm810, %vm815
      %v817 = vstv %s798
      %vm818 = vcmp.eq.s32.totalorder %v560, %v817
      %vm819 = vmand %vm589, %vm818
      %vm820 = vmor %vm816, %vm819
      %s821 = ssub.s32 %s800, 1
      %v822 = vstv %s821
      %vm823 = vcmp.eq.s32.totalorder %v560, %v822
      %vm824 = vmand %vm595, %vm823
      %vm825 = vmor %vm820, %vm824
      %vm826 = vcmp.ge.s32.totalorder %v560, %v817
      %v827 = vstv %s800
      %vm828 = vcmp.lt.s32.totalorder %v560, %v827
      %vm829 = vmand %vm826, %vm828
      %vm830 = vmand %vm600, %vm829
      %vm831 = vmor %vm825, %vm830
      %v832 = vstv %s802
      %vm833 = vcmp.eq.s32.totalorder %v560, %v832
      %vm834 = vmand %vm607, %vm833
      %vm835 = vmor %vm831, %vm834
      %v836 = vsel %vm835, 1, 0
      %v837 = vcvt.s32.f32 %v836
      %v838 = vpack.c.bf16 %v837, %v837
      %s839 = scalar_lea.vmem %s550, 8
      %v840 = vld [vmem:[%s839] sm:$0xf]
      %v842 = vsel %vm616, %v838, 0
      %v845 = vsel %vm620, %v840, 0
      %847 = vmatprep.subr.bf16.mxu0 0
      %848 = vmatpush1.bf16.msra.mxu0 %v845
      %849 = vmatprep.subr.bf16.mxu0 0
      %850 = vmatpush1.bf16.msra.mxu0 0
      %851 = vmatprep.subr.bf16.mxu0 0
      %852 = vmatpush1.bf16.msra.mxu0 0
      %853 = vmatprep.subr.bf16.mxu0 0
      %854 = vmatpush1.bf16.msra.mxu0 0
      %855 = vmatprep.subr.bf16.mxu0 0
      %856 = vmatpush1.bf16.msra.mxu0 0
      %857 = vmatprep.subr.bf16.mxu0 0
      %858 = vmatpush1.bf16.msra.mxu0 0
      %859 = vmatprep.subr.bf16.mxu0 0
      %860 = vmatpush1.bf16.msra.mxu0 0
      %861 = vmatprep.subr.bf16.mxu0 0
      %862 = vmatpush1.bf16.msra.mxu0 0
      %863 = vmatprep.subr.bf16.mxu0 0
      %864 = vmatpush1.bf16.msra.mxu0 0
      %865 = vmatprep.subr.bf16.mxu0 0
      %866 = vmatpush1.bf16.msra.mxu0 0
      %867 = vmatprep.subr.bf16.mxu0 0
      %868 = vmatpush1.bf16.msra.mxu0 0
      %869 = vmatprep.subr.bf16.mxu0 0
      %870 = vmatpush1.bf16.msra.mxu0 0
      %871 = vmatprep.subr.bf16.mxu0 0
      %872 = vmatpush1.bf16.msra.mxu0 0
      %873 = vmatprep.subr.bf16.mxu0 0
      %874 = vmatpush1.bf16.msra.mxu0 0
      %875 = vmatprep.subr.bf16.mxu0 0
      %876 = vmatpush1.bf16.msra.mxu0 0
      %877 = vmatprep.subr.bf16.mxu0 0
      %878 = vmatpush1.bf16.msra.mxu0 0
      %879 = vmatprep.mubr.bf16.mxu0 0
      %880 = vmatmul.mubr.bf16.gmra.mrb[0].mxu0 %v842
      %v881 = vpop.f32.mrb[0].mxu0
      %v882 = vadd.f32 0.0, %v881
      %v883 = vpop.f32.mrb[0].mxu0
      %v884 = vpop.f32.mrb[0].mxu0
      %v885 = vpop.f32.mrb[0].mxu0
      %886 = vdwg.mxu0
      %s887 = ssub.s32 %s796, %s794
      %s888 = scvt.s32.f32 %s887
      %v889 = vstv %s888
      %v890 = vrcp.pop %v889
      %s891 = vtos %v890
      %s892 = ssub.s32 %s800, %s798
      %s893 = scvt.s32.f32 %s892
      %v894 = vstv %s893
      %v895 = vrcp.pop %v894
      %s896 = vtos %v895
      %v897 = vstv %s896
      %v898 = vsel %vm600, %v897, 1.0
      %v899 = vstv %s891
      %v900 = vsel %vm582, %v899, %v898
      %v901 = vmul.f32 %v882, %v900
      %902 = vst.msk [vmem:[#allocation2 + $0x10] sm:$0xff] %vm679, %v901
      %s903 = sadd.s32 %s561, 3
      %s904 = smul.u32 %s903, 128
      %s905 = sld [smem:[#allocation4 + %s904]]
      %s906 = sadd.s32 %s904, 1
      %s907 = sld [smem:[#allocation4 + %s906]]
      %s908 = sadd.s32 %s904, 2
      %s909 = sld [smem:[#allocation4 + %s908]]
      %s910 = sadd.s32 %s904, 3
      %s911 = sld [smem:[#allocation4 + %s910]]
      %s912 = sadd.s32 %s904, 4
      %s913 = sld [smem:[#allocation4 + %s912]]
      %v914 = vstv %s905
      %vm915 = vcmp.eq.s32.totalorder %v560, %v914
      %vm916 = vmand %vm572, %vm915
      %s917 = ssub.s32 %s907, 1
      %v918 = vstv %s917
      %vm919 = vcmp.eq.s32.totalorder %v560, %v918
      %vm920 = vmand %vm577, %vm919
      %vm921 = vmor %vm916, %vm920
      %vm922 = vcmp.ge.s32.totalorder %v560, %v914
      %v923 = vstv %s907
      %vm924 = vcmp.lt.s32.totalorder %v560, %v923
      %vm925 = vmand %vm922, %vm924
      %vm926 = vmand %vm582, %vm925
      %vm927 = vmor %vm921, %vm926
      %v928 = vstv %s909
      %vm929 = vcmp.eq.s32.totalorder %v560, %v928
      %vm930 = vmand %vm589, %vm929
      %vm931 = vmor %vm927, %vm930
      %s932 = ssub.s32 %s911, 1
      %v933 = vstv %s932
      %vm934 = vcmp.eq.s32.totalorder %v560, %v933
      %vm935 = vmand %vm595, %vm934
      %vm936 = vmor %vm931, %vm935
      %vm937 = vcmp.ge.s32.totalorder %v560, %v928
      %v938 = vstv %s911
      %vm939 = vcmp.lt.s32.totalorder %v560, %v938
      %vm940 = vmand %vm937, %vm939
      %vm941 = vmand %vm600, %vm940
      %vm942 = vmor %vm936, %vm941
      %v943 = vstv %s913
      %vm944 = vcmp.eq.s32.totalorder %v560, %v943
      %vm945 = vmand %vm607, %vm944
      %vm946 = vmor %vm942, %vm945
      %v947 = vsel %vm946, 1, 0
      %v948 = vcvt.s32.f32 %v947
      %v949 = vpack.c.bf16 %v948, %v948
      %s950 = scalar_lea.vmem %s550, 12
      %v951 = vld [vmem:[%s950] sm:$0xf]
      %v953 = vsel %vm616, %v949, 0
      %v956 = vsel %vm620, %v951, 0
      %958 = vmatprep.subr.bf16.mxu0 0
      %959 = vmatpush1.bf16.msra.mxu0 %v956
      %960 = vmatprep.subr.bf16.mxu0 0
      %961 = vmatpush1.bf16.msra.mxu0 0
      %962 = vmatprep.subr.bf16.mxu0 0
      %963 = vmatpush1.bf16.msra.mxu0 0
      %964 = vmatprep.subr.bf16.mxu0 0
      %965 = vmatpush1.bf16.msra.mxu0 0
      %966 = vmatprep.subr.bf16.mxu0 0
      %967 = vmatpush1.bf16.msra.mxu0 0
      %968 = vmatprep.subr.bf16.mxu0 0
      %969 = vmatpush1.bf16.msra.mxu0 0
      %970 = vmatprep.subr.bf16.mxu0 0
      %971 = vmatpush1.bf16.msra.mxu0 0
      %972 = vmatprep.subr.bf16.mxu0 0
      %973 = vmatpush1.bf16.msra.mxu0 0
      %974 = vmatprep.subr.bf16.mxu0 0
      %975 = vmatpush1.bf16.msra.mxu0 0
      %976 = vmatprep.subr.bf16.mxu0 0
      %977 = vmatpush1.bf16.msra.mxu0 0
      %978 = vmatprep.subr.bf16.mxu0 0
      %979 = vmatpush1.bf16.msra.mxu0 0
      %980 = vmatprep.subr.bf16.mxu0 0
      %981 = vmatpush1.bf16.msra.mxu0 0
      %982 = vmatprep.subr.bf16.mxu0 0
      %983 = vmatpush1.bf16.msra.mxu0 0
      %984 = vmatprep.subr.bf16.mxu0 0
      %985 = vmatpush1.bf16.msra.mxu0 0
      %986 = vmatprep.subr.bf16.mxu0 0
      %987 = vmatpush1.bf16.msra.mxu0 0
      %988 = vmatprep.subr.bf16.mxu0 0
      %989 = vmatpush1.bf16.msra.mxu0 0
      %990 = vmatprep.mubr.bf16.mxu0 0
      %991 = vmatmul.mubr.bf16.gmra.mrb[0].mxu0 %v953
      %v992 = vpop.f32.mrb[0].mxu0
      %v993 = vadd.f32 0.0, %v992
      %v994 = vpop.f32.mrb[0].mxu0
      %v995 = vpop.f32.mrb[0].mxu0
      %v996 = vpop.f32.mrb[0].mxu0
      %997 = vdwg.mxu0
      %s998 = ssub.s32 %s907, %s905
      %s999 = scvt.s32.f32 %s998
      %v1000 = vstv %s999
      %v1001 = vrcp.pop %v1000
      %s1002 = vtos %v1001
      %s1003 = ssub.s32 %s911, %s909
      %s1004 = scvt.s32.f32 %s1003
      %v1005 = vstv %s1004
      %v1006 = vrcp.pop %v1005
      %s1007 = vtos %v1006
      %v1008 = vstv %s1007
      %v1009 = vsel %vm600, %v1008, 1.0
      %v1010 = vstv %s1002
      %v1011 = vsel %vm582, %v1010, %v1009
      %v1012 = vmul.f32 %v993, %v1011
      %1013 = vst.msk [vmem:[#allocation2 + $0x18] sm:$0xff] %vm679, %v1012
      %s1014 = sadd.s32 %s561, 4
      %s1015 = smul.u32 %s1014, 128
      %s1016 = sld [smem:[#allocation4 + %s1015]]
      %s1017 = sadd.s32 %s1015, 1
      %s1018 = sld [smem:[#allocation4 + %s1017]]
      %s1019 = sadd.s32 %s1015, 2
      %s1020 = sld [smem:[#allocation4 + %s1019]]
      %s1021 = sadd.s32 %s1015, 3
      %s1022 = sld [smem:[#allocation4 + %s1021]]
      %s1023 = sadd.s32 %s1015, 4
      %s1024 = sld [smem:[#allocation4 + %s1023]]
      %v1025 = vstv %s1016
      %vm1026 = vcmp.eq.s32.totalorder %v560, %v1025
      %vm1027 = vmand %vm572, %vm1026
      %s1028 = ssub.s32 %s1018, 1
      %v1029 = vstv %s1028
      %vm1030 = vcmp.eq.s32.totalorder %v560, %v1029
      %vm1031 = vmand %vm577, %vm1030
      %vm1032 = vmor %vm1027, %vm1031
      %vm1033 = vcmp.ge.s32.totalorder %v560, %v1025
      %v1034 = vstv %s1018
      %vm1035 = vcmp.lt.s32.totalorder %v560, %v1034
      %vm1036 = vmand %vm1033, %vm1035
      %vm1037 = vmand %vm582, %vm1036
      %vm1038 = vmor %vm1032, %vm1037
      %v1039 = vstv %s1020
      %vm1040 = vcmp.eq.s32.totalorder %v560, %v1039
      %vm1041 = vmand %vm589, %vm1040
      %vm1042 = vmor %vm1038, %vm1041
      %s1043 = ssub.s32 %s1022, 1
      %v1044 = vstv %s1043
      %vm1045 = vcmp.eq.s32.totalorder %v560, %v1044
      %vm1046 = vmand %vm595, %vm1045
      %vm1047 = vmor %vm1042, %vm1046
      %vm1048 = vcmp.ge.s32.totalorder %v560, %v1039
      %v1049 = vstv %s1022
      %vm1050 = vcmp.lt.s32.totalorder %v560, %v1049
      %vm1051 = vmand %vm1048, %vm1050
      %vm1052 = vmand %vm600, %vm1051
      %vm1053 = vmor %vm1047, %vm1052
      %v1054 = vstv %s1024
      %vm1055 = vcmp.eq.s32.totalorder %v560, %v1054
      %vm1056 = vmand %vm607, %vm1055
      %vm1057 = vmor %vm1053, %vm1056
      %v1058 = vsel %vm1057, 1, 0
      %v1059 = vcvt.s32.f32 %v1058
      %v1060 = vpack.c.bf16 %v1059, %v1059
      %s1061 = scalar_lea.vmem %s550, 16
      %v1062 = vld [vmem:[%s1061] sm:$0xf]
      %v1064 = vsel %vm616, %v1060, 0
      %v1067 = vsel %vm620, %v1062, 0
      %1069 = vmatprep.subr.bf16.mxu0 0
      %1070 = vmatpush1.bf16.msra.mxu0 %v1067
      %1071 = vmatprep.subr.bf16.mxu0 0
      %1072 = vmatpush1.bf16.msra.mxu0 0
      %1073 = vmatprep.subr.bf16.mxu0 0
      %1074 = vmatpush1.bf16.msra.mxu0 0
      %1075 = vmatprep.subr.bf16.mxu0 0
      %1076 = vmatpush1.bf16.msra.mxu0 0
      %1077 = vmatprep.subr.bf16.mxu0 0
      %1078 = vmatpush1.bf16.msra.mxu0 0
      %1079 = vmatprep.subr.bf16.mxu0 0
      %1080 = vmatpush1.bf16.msra.mxu0 0
      %1081 = vmatprep.subr.bf16.mxu0 0
      %1082 = vmatpush1.bf16.msra.mxu0 0
      %1083 = vmatprep.subr.bf16.mxu0 0
      %1084 = vmatpush1.bf16.msra.mxu0 0
      %1085 = vmatprep.subr.bf16.mxu0 0
      %1086 = vmatpush1.bf16.msra.mxu0 0
      %1087 = vmatprep.subr.bf16.mxu0 0
      %1088 = vmatpush1.bf16.msra.mxu0 0
      %1089 = vmatprep.subr.bf16.mxu0 0
      %1090 = vmatpush1.bf16.msra.mxu0 0
      %1091 = vmatprep.subr.bf16.mxu0 0
      %1092 = vmatpush1.bf16.msra.mxu0 0
      %1093 = vmatprep.subr.bf16.mxu0 0
      %1094 = vmatpush1.bf16.msra.mxu0 0
      %1095 = vmatprep.subr.bf16.mxu0 0
      %1096 = vmatpush1.bf16.msra.mxu0 0
      %1097 = vmatprep.subr.bf16.mxu0 0
      %1098 = vmatpush1.bf16.msra.mxu0 0
      %1099 = vmatprep.subr.bf16.mxu0 0
      %1100 = vmatpush1.bf16.msra.mxu0 0
      %1101 = vmatprep.mubr.bf16.mxu0 0
      %1102 = vmatmul.mubr.bf16.gmra.mrb[0].mxu0 %v1064
      %v1103 = vpop.f32.mrb[0].mxu0
      %v1104 = vadd.f32 0.0, %v1103
      %v1105 = vpop.f32.mrb[0].mxu0
      %v1106 = vpop.f32.mrb[0].mxu0
      %v1107 = vpop.f32.mrb[0].mxu0
      %1108 = vdwg.mxu0
      %s1109 = ssub.s32 %s1018, %s1016
      %s1110 = scvt.s32.f32 %s1109
      %v1111 = vstv %s1110
      %v1112 = vrcp.pop %v1111
      %s1113 = vtos %v1112
      %s1114 = ssub.s32 %s1022, %s1020
      %s1115 = scvt.s32.f32 %s1114
      %v1116 = vstv %s1115
      %v1117 = vrcp.pop %v1116
      %s1118 = vtos %v1117
      %v1119 = vstv %s1118
      %v1120 = vsel %vm600, %v1119, 1.0
      %v1121 = vstv %s1113
      %v1122 = vsel %vm582, %v1121, %v1120
      %v1123 = vmul.f32 %v1104, %v1122
      %1124 = vst.msk [vmem:[#allocation2 + $0x20] sm:$0xff] %vm679, %v1123
      %s1125 = sadd.s32 %s561, 5
      %s1126 = smul.u32 %s1125, 128
      %s1127 = sld [smem:[#allocation4 + %s1126]]
      %s1128 = sadd.s32 %s1126, 1
      %s1129 = sld [smem:[#allocation4 + %s1128]]
      %s1130 = sadd.s32 %s1126, 2
      %s1131 = sld [smem:[#allocation4 + %s1130]]
      %s1132 = sadd.s32 %s1126, 3
      %s1133 = sld [smem:[#allocation4 + %s1132]]
      %s1134 = sadd.s32 %s1126, 4
      %s1135 = sld [smem:[#allocation4 + %s1134]]
      %v1136 = vstv %s1127
      %vm1137 = vcmp.eq.s32.totalorder %v560, %v1136
      %vm1138 = vmand %vm572, %vm1137
      %s1139 = ssub.s32 %s1129, 1
      %v1140 = vstv %s1139
      %vm1141 = vcmp.eq.s32.totalorder %v560, %v1140
      %vm1142 = vmand %vm577, %vm1141
      %vm1143 = vmor %vm1138, %vm1142
      %vm1144 = vcmp.ge.s32.totalorder %v560, %v1136
      %v1145 = vstv %s1129
      %vm1146 = vcmp.lt.s32.totalorder %v560, %v1145
      %vm1147 = vmand %vm1144, %vm1146
      %vm1148 = vmand %vm582, %vm1147
      %vm1149 = vmor %vm1143, %vm1148
      %v1150 = vstv %s1131
      %vm1151 = vcmp.eq.s32.totalorder %v560, %v1150
      %vm1152 = vmand %vm589, %vm1151
      %vm1153 = vmor %vm1149, %vm1152
      %s1154 = ssub.s32 %s1133, 1
      %v1155 = vstv %s1154
      %vm1156 = vcmp.eq.s32.totalorder %v560, %v1155
      %vm1157 = vmand %vm595, %vm1156
      %vm1158 = vmor %vm1153, %vm1157
      %vm1159 = vcmp.ge.s32.totalorder %v560, %v1150
      %v1160 = vstv %s1133
      %vm1161 = vcmp.lt.s32.totalorder %v560, %v1160
      %vm1162 = vmand %vm1159, %vm1161
      %vm1163 = vmand %vm600, %vm1162
      %vm1164 = vmor %vm1158, %vm1163
      %v1165 = vstv %s1135
      %vm1166 = vcmp.eq.s32.totalorder %v560, %v1165
      %vm1167 = vmand %vm607, %vm1166
      %vm1168 = vmor %vm1164, %vm1167
      %v1169 = vsel %vm1168, 1, 0
      %v1170 = vcvt.s32.f32 %v1169
      %v1171 = vpack.c.bf16 %v1170, %v1170
      %s1172 = scalar_lea.vmem %s550, 20
      %v1173 = vld [vmem:[%s1172] sm:$0xf]
      %v1175 = vsel %vm616, %v1171, 0
      %v1178 = vsel %vm620, %v1173, 0
      %1180 = vmatprep.subr.bf16.mxu0 0
      %1181 = vmatpush1.bf16.msra.mxu0 %v1178
      %1182 = vmatprep.subr.bf16.mxu0 0
      %1183 = vmatpush1.bf16.msra.mxu0 0
      %1184 = vmatprep.subr.bf16.mxu0 0
      %1185 = vmatpush1.bf16.msra.mxu0 0
      %1186 = vmatprep.subr.bf16.mxu0 0
      %1187 = vmatpush1.bf16.msra.mxu0 0
      %1188 = vmatprep.subr.bf16.mxu0 0
      %1189 = vmatpush1.bf16.msra.mxu0 0
      %1190 = vmatprep.subr.bf16.mxu0 0
      %1191 = vmatpush1.bf16.msra.mxu0 0
      %1192 = vmatprep.subr.bf16.mxu0 0
      %1193 = vmatpush1.bf16.msra.mxu0 0
      %1194 = vmatprep.subr.bf16.mxu0 0
      %1195 = vmatpush1.bf16.msra.mxu0 0
      %1196 = vmatprep.subr.bf16.mxu0 0
      %1197 = vmatpush1.bf16.msra.mxu0 0
      %1198 = vmatprep.subr.bf16.mxu0 0
      %1199 = vmatpush1.bf16.msra.mxu0 0
      %1200 = vmatprep.subr.bf16.mxu0 0
      %1201 = vmatpush1.bf16.msra.mxu0 0
      %1202 = vmatprep.subr.bf16.mxu0 0
      %1203 = vmatpush1.bf16.msra.mxu0 0
      %1204 = vmatprep.subr.bf16.mxu0 0
      %1205 = vmatpush1.bf16.msra.mxu0 0
      %1206 = vmatprep.subr.bf16.mxu0 0
      %1207 = vmatpush1.bf16.msra.mxu0 0
      %1208 = vmatprep.subr.bf16.mxu0 0
      %1209 = vmatpush1.bf16.msra.mxu0 0
      %1210 = vmatprep.subr.bf16.mxu0 0
      %1211 = vmatpush1.bf16.msra.mxu0 0
      %1212 = vmatprep.mubr.bf16.mxu0 0
      %1213 = vmatmul.mubr.bf16.gmra.mrb[0].mxu0 %v1175
      %v1214 = vpop.f32.mrb[0].mxu0
      %v1215 = vadd.f32 0.0, %v1214
      %v1216 = vpop.f32.mrb[0].mxu0
      %v1217 = vpop.f32.mrb[0].mxu0
      %v1218 = vpop.f32.mrb[0].mxu0
      %1219 = vdwg.mxu0
      %s1220 = ssub.s32 %s1129, %s1127
      %s1221 = scvt.s32.f32 %s1220
      %v1222 = vstv %s1221
      %v1223 = vrcp.pop %v1222
      %s1224 = vtos %v1223
      %s1225 = ssub.s32 %s1133, %s1131
      %s1226 = scvt.s32.f32 %s1225
      %v1227 = vstv %s1226
      %v1228 = vrcp.pop %v1227
      %s1229 = vtos %v1228
      %v1230 = vstv %s1229
      %v1231 = vsel %vm600, %v1230, 1.0
      %v1232 = vstv %s1224
      %v1233 = vsel %vm582, %v1232, %v1231
      %v1234 = vmul.f32 %v1215, %v1233
      %1235 = vst.msk [vmem:[#allocation2 + $0x28] sm:$0xff] %vm679, %v1234
      %s1236 = sadd.s32 %s561, 6
      %s1237 = smul.u32 %s1236, 128
      %s1238 = sld [smem:[#allocation4 + %s1237]]
      %s1239 = sadd.s32 %s1237, 1
      %s1240 = sld [smem:[#allocation4 + %s1239]]
      %s1241 = sadd.s32 %s1237, 2
      %s1242 = sld [smem:[#allocation4 + %s1241]]
      %s1243 = sadd.s32 %s1237, 3
      %s1244 = sld [smem:[#allocation4 + %s1243]]
      %s1245 = sadd.s32 %s1237, 4
      %s1246 = sld [smem:[#allocation4 + %s1245]]
      %v1247 = vstv %s1238
      %vm1248 = vcmp.eq.s32.totalorder %v560, %v1247
      %vm1249 = vmand %vm572, %vm1248
      %s1250 = ssub.s32 %s1240, 1
      %v1251 = vstv %s1250
      %vm1252 = vcmp.eq.s32.totalorder %v560, %v1251
      %vm1253 = vmand %vm577, %vm1252
      %vm1254 = vmor %vm1249, %vm1253
      %vm1255 = vcmp.ge.s32.totalorder %v560, %v1247
      %v1256 = vstv %s1240
      %vm1257 = vcmp.lt.s32.totalorder %v560, %v1256
      %vm1258 = vmand %vm1255, %vm1257
      %vm1259 = vmand %vm582, %vm1258
      %vm1260 = vmor %vm1254, %vm1259
      %v1261 = vstv %s1242
      %vm1262 = vcmp.eq.s32.totalorder %v560, %v1261
      %vm1263 = vmand %vm589, %vm1262
      %vm1264 = vmor %vm1260, %vm1263
      %s1265 = ssub.s32 %s1244, 1
      %v1266 = vstv %s1265
      %vm1267 = vcmp.eq.s32.totalorder %v560, %v1266
      %vm1268 = vmand %vm595, %vm1267
      %vm1269 = vmor %vm1264, %vm1268
      %vm1270 = vcmp.ge.s32.totalorder %v560, %v1261
      %v1271 = vstv %s1244
      %vm1272 = vcmp.lt.s32.totalorder %v560, %v1271
      %vm1273 = vmand %vm1270, %vm1272
      %vm1274 = vmand %vm600, %vm1273
      %vm1275 = vmor %vm1269, %vm1274
      %v1276 = vstv %s1246
      %vm1277 = vcmp.eq.s32.totalorder %v560, %v1276
      %vm1278 = vmand %vm607, %vm1277
      %vm1279 = vmor %vm1275, %vm1278
      %v1280 = vsel %vm1279, 1, 0
      %v1281 = vcvt.s32.f32 %v1280
      %v1282 = vpack.c.bf16 %v1281, %v1281
      %s1283 = scalar_lea.vmem %s550, 24
      %v1284 = vld [vmem:[%s1283] sm:$0xf]
      %v1286 = vsel %vm616, %v1282, 0
      %v1289 = vsel %vm620, %v1284, 0
      %1291 = vmatprep.subr.bf16.mxu0 0
      %1292 = vmatpush1.bf16.msra.mxu0 %v1289
      %1293 = vmatprep.subr.bf16.mxu0 0
      %1294 = vmatpush1.bf16.msra.mxu0 0
      %1295 = vmatprep.subr.bf16.mxu0 0
      %1296 = vmatpush1.bf16.msra.mxu0 0
      %1297 = vmatprep.subr.bf16.mxu0 0
      %1298 = vmatpush1.bf16.msra.mxu0 0
      %1299 = vmatprep.subr.bf16.mxu0 0
      %1300 = vmatpush1.bf16.msra.mxu0 0
      %1301 = vmatprep.subr.bf16.mxu0 0
      %1302 = vmatpush1.bf16.msra.mxu0 0
      %1303 = vmatprep.subr.bf16.mxu0 0
      %1304 = vmatpush1.bf16.msra.mxu0 0
      %1305 = vmatprep.subr.bf16.mxu0 0
      %1306 = vmatpush1.bf16.msra.mxu0 0
      %1307 = vmatprep.subr.bf16.mxu0 0
      %1308 = vmatpush1.bf16.msra.mxu0 0
      %1309 = vmatprep.subr.bf16.mxu0 0
      %1310 = vmatpush1.bf16.msra.mxu0 0
      %1311 = vmatprep.subr.bf16.mxu0 0
      %1312 = vmatpush1.bf16.msra.mxu0 0
      %1313 = vmatprep.subr.bf16.mxu0 0
      %1314 = vmatpush1.bf16.msra.mxu0 0
      %1315 = vmatprep.subr.bf16.mxu0 0
      %1316 = vmatpush1.bf16.msra.mxu0 0
      %1317 = vmatprep.subr.bf16.mxu0 0
      %1318 = vmatpush1.bf16.msra.mxu0 0
      %1319 = vmatprep.subr.bf16.mxu0 0
      %1320 = vmatpush1.bf16.msra.mxu0 0
      %1321 = vmatprep.subr.bf16.mxu0 0
      %1322 = vmatpush1.bf16.msra.mxu0 0
      %1323 = vmatprep.mubr.bf16.mxu0 0
      %1324 = vmatmul.mubr.bf16.gmra.mrb[0].mxu0 %v1286
      %v1325 = vpop.f32.mrb[0].mxu0
      %v1326 = vadd.f32 0.0, %v1325
      %v1327 = vpop.f32.mrb[0].mxu0
      %v1328 = vpop.f32.mrb[0].mxu0
      %v1329 = vpop.f32.mrb[0].mxu0
      %1330 = vdwg.mxu0
      %s1331 = ssub.s32 %s1240, %s1238
      %s1332 = scvt.s32.f32 %s1331
      %v1333 = vstv %s1332
      %v1334 = vrcp.pop %v1333
      %s1335 = vtos %v1334
      %s1336 = ssub.s32 %s1244, %s1242
      %s1337 = scvt.s32.f32 %s1336
      %v1338 = vstv %s1337
      %v1339 = vrcp.pop %v1338
      %s1340 = vtos %v1339
      %v1341 = vstv %s1340
      %v1342 = vsel %vm600, %v1341, 1.0
      %v1343 = vstv %s1335
      %v1344 = vsel %vm582, %v1343, %v1342
      %v1345 = vmul.f32 %v1326, %v1344
      %1346 = vst.msk [vmem:[#allocation2 + $0x30] sm:$0xff] %vm679, %v1345
      %s1347 = sadd.s32 %s561, 7
      %s1348 = smul.u32 %s1347, 128
      %s1349 = sld [smem:[#allocation4 + %s1348]]
      %s1350 = sadd.s32 %s1348, 1
      %s1351 = sld [smem:[#allocation4 + %s1350]]
      %s1352 = sadd.s32 %s1348, 2
      %s1353 = sld [smem:[#allocation4 + %s1352]]
      %s1354 = sadd.s32 %s1348, 3
      %s1355 = sld [smem:[#allocation4 + %s1354]]
      %s1356 = sadd.s32 %s1348, 4
      %s1357 = sld [smem:[#allocation4 + %s1356]]
      %v1358 = vstv %s1349
      %vm1359 = vcmp.eq.s32.totalorder %v560, %v1358
      %vm1360 = vmand %vm572, %vm1359
      %s1361 = ssub.s32 %s1351, 1
      %v1362 = vstv %s1361
      %vm1363 = vcmp.eq.s32.totalorder %v560, %v1362
      %vm1364 = vmand %vm577, %vm1363
      %vm1365 = vmor %vm1360, %vm1364
      %vm1366 = vcmp.ge.s32.totalorder %v560, %v1358
      %v1367 = vstv %s1351
      %vm1368 = vcmp.lt.s32.totalorder %v560, %v1367
      %vm1369 = vmand %vm1366, %vm1368
      %vm1370 = vmand %vm582, %vm1369
      %vm1371 = vmor %vm1365, %vm1370
      %v1372 = vstv %s1353
      %vm1373 = vcmp.eq.s32.totalorder %v560, %v1372
      %vm1374 = vmand %vm589, %vm1373
      %vm1375 = vmor %vm1371, %vm1374
      %s1376 = ssub.s32 %s1355, 1
      %v1377 = vstv %s1376
      %vm1378 = vcmp.eq.s32.totalorder %v560, %v1377
      %vm1379 = vmand %vm595, %vm1378
      %vm1380 = vmor %vm1375, %vm1379
      %vm1381 = vcmp.ge.s32.totalorder %v560, %v1372
      %v1382 = vstv %s1355
      %vm1383 = vcmp.lt.s32.totalorder %v560, %v1382
      %vm1384 = vmand %vm1381, %vm1383
      %vm1385 = vmand %vm600, %vm1384
      %vm1386 = vmor %vm1380, %vm1385
      %v1387 = vstv %s1357
      %vm1388 = vcmp.eq.s32.totalorder %v560, %v1387
      %vm1389 = vmand %vm607, %vm1388
      %vm1390 = vmor %vm1386, %vm1389
      %v1391 = vsel %vm1390, 1, 0
      %v1392 = vcvt.s32.f32 %v1391
      %v1393 = vpack.c.bf16 %v1392, %v1392
      %s1394 = scalar_lea.vmem %s550, 28
      %v1395 = vld [vmem:[%s1394] sm:$0xf]
      %v1397 = vsel %vm616, %v1393, 0
      %v1400 = vsel %vm620, %v1395, 0
      %1402 = vmatprep.subr.bf16.mxu0 0
      %1403 = vmatpush1.bf16.msra.mxu0 %v1400
      %1404 = vmatprep.subr.bf16.mxu0 0
      %1405 = vmatpush1.bf16.msra.mxu0 0
      %1406 = vmatprep.subr.bf16.mxu0 0
      %1407 = vmatpush1.bf16.msra.mxu0 0
      %1408 = vmatprep.subr.bf16.mxu0 0
      %1409 = vmatpush1.bf16.msra.mxu0 0
      %1410 = vmatprep.subr.bf16.mxu0 0
      %1411 = vmatpush1.bf16.msra.mxu0 0
      %1412 = vmatprep.subr.bf16.mxu0 0
      %1413 = vmatpush1.bf16.msra.mxu0 0
      %1414 = vmatprep.subr.bf16.mxu0 0
      %1415 = vmatpush1.bf16.msra.mxu0 0
      %1416 = vmatprep.subr.bf16.mxu0 0
      %1417 = vmatpush1.bf16.msra.mxu0 0
      %1418 = vmatprep.subr.bf16.mxu0 0
      %1419 = vmatpush1.bf16.msra.mxu0 0
      %1420 = vmatprep.subr.bf16.mxu0 0
      %1421 = vmatpush1.bf16.msra.mxu0 0
      %1422 = vmatprep.subr.bf16.mxu0 0
      %1423 = vmatpush1.bf16.msra.mxu0 0
      %1424 = vmatprep.subr.bf16.mxu0 0
      %1425 = vmatpush1.bf16.msra.mxu0 0
      %1426 = vmatprep.subr.bf16.mxu0 0
      %1427 = vmatpush1.bf16.msra.mxu0 0
      %1428 = vmatprep.subr.bf16.mxu0 0
      %1429 = vmatpush1.bf16.msra.mxu0 0
      %1430 = vmatprep.subr.bf16.mxu0 0
      %1431 = vmatpush1.bf16.msra.mxu0 0
      %1432 = vmatprep.subr.bf16.mxu0 0
      %1433 = vmatpush1.bf16.msra.mxu0 0
      %1434 = vmatprep.mubr.bf16.mxu0 0
      %1435 = vmatmul.mubr.bf16.gmra.mrb[0].mxu0 %v1397
      %v1436 = vpop.f32.mrb[0].mxu0
      %v1437 = vadd.f32 0.0, %v1436
      %v1438 = vpop.f32.mrb[0].mxu0
      %v1439 = vpop.f32.mrb[0].mxu0
      %v1440 = vpop.f32.mrb[0].mxu0
      %1441 = vdwg.mxu0
      %s1442 = ssub.s32 %s1351, %s1349
      %s1443 = scvt.s32.f32 %s1442
      %v1444 = vstv %s1443
      %v1445 = vrcp.pop %v1444
      %s1446 = vtos %v1445
      %s1447 = ssub.s32 %s1355, %s1353
      %s1448 = scvt.s32.f32 %s1447
      %v1449 = vstv %s1448
      %v1450 = vrcp.pop %v1449
      %s1451 = vtos %v1450
      %v1452 = vstv %s1451
      %v1453 = vsel %vm600, %v1452, 1.0
      %v1454 = vstv %s1446
      %v1455 = vsel %vm582, %v1454, %v1453
      %v1456 = vmul.f32 %v1437, %v1455
      %1457 = vst.msk [vmem:[#allocation2 + $0x38] sm:$0xff] %vm679, %v1456
      %v1458 = vld [vmem:[#allocation2] sm:$0xff]
      %v1459 = vld [vmem:[#allocation2 + $0x8] sm:$0xff]
      %v1460 = vld [vmem:[#allocation2 + $0x10] sm:$0xff]
      %v1461 = vld [vmem:[#allocation2 + $0x18] sm:$0xff]
      %v1462 = vld [vmem:[#allocation2 + $0x20] sm:$0xff]
      %v1463 = vld [vmem:[#allocation2 + $0x28] sm:$0xff]
      %v1464 = vld [vmem:[#allocation2 + $0x30] sm:$0xff]
      %v1465 = vld [vmem:[#allocation2 + $0x38] sm:$0xff]
      %v1466 = vmul.u32 %v558, 8
      %v1467 = vadd.s32 %v1466, 6
      %vm1468 = vcmp.eq.s32.totalorder %v560, %v1467
      %v1469 = vsel %vm1468, 1, 0
      %v1470 = vcvt.s32.f32 %v1469
      %vm1471 = vcmask 523264
      %v1473 = vsel %vm1471, %v1470, 0
      %1475 = vmatprep.subr.mxu0 0.0
      %1476 = vmatpush1.msra.mxu0 %v1458
      %1477 = vmatprep.subr.mxu0 0.0
      %1478 = vmatpush1.msra.mxu0 %v1459
      %1479 = vmatprep.subr.mxu0 0.0
      %1480 = vmatpush1.msra.mxu0 %v1460
      %1481 = vmatprep.subr.mxu0 0.0
      %1482 = vmatpush1.msra.mxu0 %v1461
      %1483 = vmatprep.subr.mxu0 0.0
      %1484 = vmatpush1.msra.mxu0 %v1462
      %1485 = vmatprep.subr.mxu0 0.0
      %1486 = vmatpush1.msra.mxu0 %v1463
      %1487 = vmatprep.subr.mxu0 0.0
      %1488 = vmatpush1.msra.mxu0 %v1464
      %1489 = vmatprep.subr.mxu0 0.0
      %1490 = vmatpush1.msra.mxu0 %v1465
      %1491 = vmatprep.subr.mxu0 0.0
      %1492 = vmatpush1.msra.mxu0 0.0
      %1493 = vmatprep.subr.mxu0 0.0
      %1494 = vmatpush1.msra.mxu0 0.0
      %1495 = vmatprep.subr.mxu0 0.0
      %1496 = vmatpush1.msra.mxu0 0.0
      %1497 = vmatprep.subr.mxu0 0.0
      %1498 = vmatpush1.msra.mxu0 0.0
      %1499 = vmatprep.subr.mxu0 0.0
      %1500 = vmatpush1.msra.mxu0 0.0
      %1501 = vmatprep.subr.mxu0 0.0
      %1502 = vmatpush1.msra.mxu0 0.0
      %1503 = vmatprep.subr.mxu0 0.0
      %1504 = vmatpush1.msra.mxu0 0.0
      %1505 = vmatprep.subr.mxu0 0.0
      %1506 = vmatpush1.msra.mxu0 0.0
      %1507 = vmatprep.subr.mxu0 0.0
      %1508 = vmatpush1.msra.mxu0 0.0
      %1509 = vmatprep.subr.mxu0 0.0
      %1510 = vmatpush1.msra.mxu0 0.0
      %1511 = vmatprep.subr.mxu0 0.0
      %1512 = vmatpush1.msra.mxu0 0.0
      %1513 = vmatprep.subr.mxu0 0.0
      %1514 = vmatpush1.msra.mxu0 0.0
      %1515 = vmatprep.subr.mxu0 0.0
      %1516 = vmatpush1.msra.mxu0 0.0
      %1517 = vmatprep.subr.mxu0 0.0
      %1518 = vmatpush1.msra.mxu0 0.0
      %1519 = vmatprep.subr.mxu0 0.0
      %1520 = vmatpush1.msra.mxu0 0.0
      %1521 = vmatprep.subr.mxu0 0.0
      %1522 = vmatpush1.msra.mxu0 0.0
      %1523 = vmatprep.subr.mxu0 0.0
      %1524 = vmatpush1.msra.mxu0 0.0
      %1525 = vmatprep.subr.mxu0 0.0
      %1526 = vmatpush1.msra.mxu0 0.0
      %1527 = vmatprep.subr.mxu0 0.0
      %1528 = vmatpush1.msra.mxu0 0.0
      %1529 = vmatprep.subr.mxu0 0.0
      %1530 = vmatpush1.msra.mxu0 0.0
      %1531 = vmatprep.subr.mxu0 0.0
      %1532 = vmatpush1.msra.mxu0 0.0
      %1533 = vmatprep.subr.mxu0 0.0
      %1534 = vmatpush1.msra.mxu0 0.0
      %1535 = vmatprep.subr.mxu0 0.0
      %1536 = vmatpush1.msra.mxu0 0.0
      %1537 = vmatprep.subr.mxu0 0.0
      %1538 = vmatpush1.msra.mxu0 0.0
      %1539 = vmatprep.mubr.f32.mxu0 0.0
      %1540 = vmatmul.mubr.f32.gmra.mrb[0].mxu0 %v1473
      %v1541 = vpop.f32.mrb[0].mxu0
      %v1542 = vadd.f32 0.0, %v1541
      %v1543 = vpop.f32.mrb[0].mxu0
      %1544 = vdwg.mxu0
      %v1545 = vld [vmem:[%s2] sm:$0xf]
      %v1546 = vld [vmem:[%s2 + $0x4] sm:$0xf]
      %v1547 = vld [vmem:[%s2 + $0x8] sm:$0xf]
      %v1548 = vld [vmem:[%s2 + $0xc] sm:$0xf]
      %v1549 = vpack.c.bf16 %v1542, %v1542
      %v1550 = vld [vmem:[%s3] sm:$0x1]
      %v1552 = vlaneseq
      %v1553 = vshrl.u32 %v1552, 7
      %v1554 = vsub.s32 0, %v1553
      %v1555 = vrot.slane %v1550, %v1554
      %v1561 = vunpack.c.l.b16 %v1545
      %v1562 = vunpack.c.l.b16 %v1546
      %v1563 = vunpack.c.l.b16 %v1547
      %v1564 = vunpack.c.l.b16 %v1548
      %v1565 = vpack.c.b16 %v1562, %v1561
      %v1566 = vpack.c.b16 %v1564, %v1563
      %v1570 = vsel %vm679, %v1549, 0
      %1572 = vmatprep.subr.bf16.mxu0 0
      %1573 = vmatpush1.bf16.msra.mxu0 %v1565
      %1574 = vmatprep.subr.bf16.mxu0 0
      %1575 = vmatpush1.bf16.msra.mxu0 %v1566
      %1576 = vmatprep.subr.bf16.mxu0 0
      %1577 = vmatpush1.bf16.msra.mxu0 0
      %1578 = vmatprep.subr.bf16.mxu0 0
      %1579 = vmatpush1.bf16.msra.mxu0 0
      %1580 = vmatprep.subr.bf16.mxu0 0
      %1581 = vmatpush1.bf16.msra.mxu0 0
      %1582 = vmatprep.subr.bf16.mxu0 0
      %1583 = vmatpush1.bf16.msra.mxu0 0
      %1584 = vmatprep.subr.bf16.mxu0 0
      %1585 = vmatpush1.bf16.msra.mxu0 0
      %1586 = vmatprep.subr.bf16.mxu0 0
      %1587 = vmatpush1.bf16.msra.mxu0 0
      %1588 = vmatprep.subr.bf16.mxu0 0
      %1589 = vmatpush1.bf16.msra.mxu0 0
      %1590 = vmatprep.subr.bf16.mxu0 0
      %1591 = vmatpush1.bf16.msra.mxu0 0
      %1592 = vmatprep.subr.bf16.mxu0 0
      %1593 = vmatpush1.bf16.msra.mxu0 0
      %1594 = vmatprep.subr.bf16.mxu0 0
      %1595 = vmatpush1.bf16.msra.mxu0 0
      %1596 = vmatprep.subr.bf16.mxu0 0
      %1597 = vmatpush1.bf16.msra.mxu0 0
      %1598 = vmatprep.subr.bf16.mxu0 0
      %1599 = vmatpush1.bf16.msra.mxu0 0
      %1600 = vmatprep.subr.bf16.mxu0 0
      %1601 = vmatpush1.bf16.msra.mxu0 0
      %1602 = vmatprep.subr.bf16.mxu0 0
      %1603 = vmatpush1.bf16.msra.mxu0 0
      %1604 = vmatprep.mubr.bf16.mxu0 0
      %1605 = vmatmul.mubr.bf16.gmra.mrb[0].mxu0 %v1570
      %v1606 = vpop.f32.mrb[0].mxu0
      %v1607 = vadd.f32 %v1555, %v1606
      %v1608 = vpop.f32.mrb[0].mxu0
      %v1609 = vpop.f32.mrb[0].mxu0
      %v1610 = vpop.f32.mrb[0].mxu0
      %1611 = vdwg.mxu0
      %v1612 = vld [vmem:[%s4] sm:$0x1]
      %v1613 = vld [vmem:[%s5] sm:$0x1]
      %v1614 = vsel %vm679, %v1607, 0.0
      %1615 = vadd.xlane.f32.xlu0 %v1614
      %v1616 = vpop.xlane.xlu0 %1615
      %v1617 = vrcp.pop 32.0
      %v1618 = vmul.f32 %v1616, %v1617
      %v1619 = vsub.f32 %v1607, %v1618
      %v1620 = vmul.f32 %v1619, %v1619
      %v1621 = vsel %vm679, %v1620, 0.0
      %1622 = vadd.xlane.f32.xlu0 %v1621
      %v1623 = vpop.xlane.xlu0 %1622
      %v1624 = vmul.f32 %v1623, %v1617
      %v1625 = vadd.f32 %v1624, 1e-05
      %v1626 = vrsqrt.pop %v1625
      %v1627 = vmul.f32 %v1619, %v1626
      %v1629 = vlaneseq
      %v1630 = vshrl.u32 %v1629, 7
      %v1631 = vsub.s32 0, %v1630
      %v1632 = vrot.slane %v1612, %v1631
      %v1634 = vmul.f32 %v1627, %v1632
      %v1636 = vlaneseq
      %v1637 = vshrl.u32 %v1636, 7
      %v1638 = vsub.s32 0, %v1637
      %v1639 = vrot.slane %v1613, %v1638
      %v1641 = vadd.f32 %v1634, %v1639
      %v1642 = vmul.f32 %v1641, 0.5
      %v1643 = vmul.f32 %v1641, 0.70710677
      %v1644 = verf.f32.pop %v1643
      %v1645 = vadd.f32 %v1644, 1.0
      %v1646 = vmul.f32 %v1642, %v1645
      %v1647 = vld [vmem:[%s6] sm:$0xf]
      %v1648 = vld [vmem:[%s6 + $0x4] sm:$0xf]
      %v1649 = vld [vmem:[%s6 + $0x8] sm:$0xf]
      %v1650 = vld [vmem:[%s6 + $0xc] sm:$0xf]
      %v1651 = vpack.c.bf16 %v1646, %v1646
      %v1652 = vld [vmem:[%s7] sm:$0x1]
      %v1654 = vlaneseq
      %v1655 = vshrl.u32 %v1654, 7
      %v1656 = vsub.s32 0, %v1655
      %v1657 = vrot.slane %v1652, %v1656
      %v1663 = vunpack.c.l.b16 %v1647
      %v1664 = vunpack.c.l.b16 %v1648
      %v1665 = vunpack.c.l.b16 %v1649
      %v1666 = vunpack.c.l.b16 %v1650
      %v1667 = vpack.c.b16 %v1664, %v1663
      %v1668 = vpack.c.b16 %v1666, %v1665
      %v1672 = vsel %vm679, %v1651, 0
      %1674 = vmatprep.subr.bf16.mxu0 0
      %1675 = vmatpush1.bf16.msra.mxu0 %v1667
      %1676 = vmatprep.subr.bf16.mxu0 0
      %1677 = vmatpush1.bf16.msra.mxu0 %v1668
      %1678 = vmatprep.subr.bf16.mxu0 0
      %1679 = vmatpush1.bf16.msra.mxu0 0
      %1680 = vmatprep.subr.bf16.mxu0 0
      %1681 = vmatpush1.bf16.msra.mxu0 0
      %1682 = vmatprep.subr.bf16.mxu0 0
      %1683 = vmatpush1.bf16.msra.mxu0 0
      %1684 = vmatprep.subr.bf16.mxu0 0
      %1685 = vmatpush1.bf16.msra.mxu0 0
      %1686 = vmatprep.subr.bf16.mxu0 0
      %1687 = vmatpush1.bf16.msra.mxu0 0
      %1688 = vmatprep.subr.bf16.mxu0 0
      %1689 = vmatpush1.bf16.msra.mxu0 0
      %1690 = vmatprep.subr.bf16.mxu0 0
      %1691 = vmatpush1.bf16.msra.mxu0 0
      %1692 = vmatprep.subr.bf16.mxu0 0
      %1693 = vmatpush1.bf16.msra.mxu0 0
      %1694 = vmatprep.subr.bf16.mxu0 0
      %1695 = vmatpush1.bf16.msra.mxu0 0
      %1696 = vmatprep.subr.bf16.mxu0 0
      %1697 = vmatpush1.bf16.msra.mxu0 0
      %1698 = vmatprep.subr.bf16.mxu0 0
      %1699 = vmatpush1.bf16.msra.mxu0 0
      %1700 = vmatprep.subr.bf16.mxu0 0
      %1701 = vmatpush1.bf16.msra.mxu0 0
      %1702 = vmatprep.subr.bf16.mxu0 0
      %1703 = vmatpush1.bf16.msra.mxu0 0
      %1704 = vmatprep.subr.bf16.mxu0 0
      %1705 = vmatpush1.bf16.msra.mxu0 0
      %1706 = vmatprep.mubr.bf16.mxu0 0
      %1707 = vmatmul.mubr.bf16.gmra.mrb[0].mxu0 %v1672
      %v1708 = vpop.f32.mrb[0].mxu0
      %v1709 = vadd.f32 %v1657, %v1708
      %v1710 = vpop.f32.mrb[0].mxu0
      %v1711 = vpop.f32.mrb[0].mxu0
      %v1712 = vpop.f32.mrb[0].mxu0
      %1713 = vdwg.mxu0
      %vm1714 = vcmp.eq.s32.totalorder %v560, %v1466
      %v1715 = vsel %vm1714, 1, 0
      %v1716 = vcvt.s32.f32 %v1715
      %v1718 = vsel %vm1471, %v1716, 0
      %1720 = vmatprep.subr.mxu0 0.0
      %1721 = vmatpush1.msra.mxu0 %v1458
      %1722 = vmatprep.subr.mxu0 0.0
      %1723 = vmatpush1.msra.mxu0 %v1459
      %1724 = vmatprep.subr.mxu0 0.0
      %1725 = vmatpush1.msra.mxu0 %v1460
      %1726 = vmatprep.subr.mxu0 0.0
      %1727 = vmatpush1.msra.mxu0 %v1461
      %1728 = vmatprep.subr.mxu0 0.0
      %1729 = vmatpush1.msra.mxu0 %v1462
      %1730 = vmatprep.subr.mxu0 0.0
      %1731 = vmatpush1.msra.mxu0 %v1463
      %1732 = vmatprep.subr.mxu0 0.0
      %1733 = vmatpush1.msra.mxu0 %v1464
      %1734 = vmatprep.subr.mxu0 0.0
      %1735 = vmatpush1.msra.mxu0 %v1465
      %1736 = vmatprep.subr.mxu0 0.0
      %1737 = vmatpush1.msra.mxu0 0.0
      %1738 = vmatprep.subr.mxu0 0.0
      %1739 = vmatpush1.msra.mxu0 0.0
      %1740 = vmatprep.subr.mxu0 0.0
      %1741 = vmatpush1.msra.mxu0 0.0
      %1742 = vmatprep.subr.mxu0 0.0
      %1743 = vmatpush1.msra.mxu0 0.0
      %1744 = vmatprep.subr.mxu0 0.0
      %1745 = vmatpush1.msra.mxu0 0.0
      %1746 = vmatprep.subr.mxu0 0.0
      %1747 = vmatpush1.msra.mxu0 0.0
      %1748 = vmatprep.subr.mxu0 0.0
      %1749 = vmatpush1.msra.mxu0 0.0
      %1750 = vmatprep.subr.mxu0 0.0
      %1751 = vmatpush1.msra.mxu0 0.0
      %1752 = vmatprep.subr.mxu0 0.0
      %1753 = vmatpush1.msra.mxu0 0.0
      %1754 = vmatprep.subr.mxu0 0.0
      %1755 = vmatpush1.msra.mxu0 0.0
      %1756 = vmatprep.subr.mxu0 0.0
      %1757 = vmatpush1.msra.mxu0 0.0
      %1758 = vmatprep.subr.mxu0 0.0
      %1759 = vmatpush1.msra.mxu0 0.0
      %1760 = vmatprep.subr.mxu0 0.0
      %1761 = vmatpush1.msra.mxu0 0.0
      %1762 = vmatprep.subr.mxu0 0.0
      %1763 = vmatpush1.msra.mxu0 0.0
      %1764 = vmatprep.subr.mxu0 0.0
      %1765 = vmatpush1.msra.mxu0 0.0
      %1766 = vmatprep.subr.mxu0 0.0
      %1767 = vmatpush1.msra.mxu0 0.0
      %1768 = vmatprep.subr.mxu0 0.0
      %1769 = vmatpush1.msra.mxu0 0.0
      %1770 = vmatprep.subr.mxu0 0.0
      %1771 = vmatpush1.msra.mxu0 0.0
      %1772 = vmatprep.subr.mxu0 0.0
      %1773 = vmatpush1.msra.mxu0 0.0
      %1774 = vmatprep.subr.mxu0 0.0
      %1775 = vmatpush1.msra.mxu0 0.0
      %1776 = vmatprep.subr.mxu0 0.0
      %1777 = vmatpush1.msra.mxu0 0.0
      %1778 = vmatprep.subr.mxu0 0.0
      %1779 = vmatpush1.msra.mxu0 0.0
      %1780 = vmatprep.subr.mxu0 0.0
      %1781 = vmatpush1.msra.mxu0 0.0
      %1782 = vmatprep.subr.mxu0 0.0
      %1783 = vmatpush1.msra.mxu0 0.0
      %1784 = vmatprep.mubr.f32.mxu0 0.0
      %1785 = vmatmul.mubr.f32.gmra.mrb[0].mxu0 %v1718
      %v1786 = vpop.f32.mrb[0].mxu0
      %v1787 = vadd.f32 0.0, %v1786
      %v1788 = vpop.f32.mrb[0].mxu0
      %1789 = vdwg.mxu0
      %v1790 = vld [vmem:[%s8] sm:$0xf]
      %v1791 = vld [vmem:[%s8 + $0x4] sm:$0xf]
      %v1792 = vld [vmem:[%s8 + $0x8] sm:$0xf]
      %v1793 = vld [vmem:[%s8 + $0xc] sm:$0xf]
      %v1794 = vpack.c.bf16 %v1787, %v1787
      %v1795 = vadd.s32 %v1466, 1
      %vm1796 = vcmp.eq.s32.totalorder %v560, %v1795
      %v1797 = vsel %vm1796, 1, 0
      %v1798 = vcvt.s32.f32 %v1797
      %v1800 = vsel %vm1471, %v1798, 0
      %1802 = vmatprep.subr.mxu0 0.0
      %1803 = vmatpush1.msra.mxu0 %v1458
      %1804 = vmatprep.subr.mxu0 0.0
      %1805 = vmatpush1.msra.mxu0 %v1459
      %1806 = vmatprep.subr.mxu0 0.0
      %1807 = vmatpush1.msra.mxu0 %v1460
      %1808 = vmatprep.subr.mxu0 0.0
      %1809 = vmatpush1.msra.mxu0 %v1461
      %1810 = vmatprep.subr.mxu0 0.0
      %1811 = vmatpush1.msra.mxu0 %v1462
      %1812 = vmatprep.subr.mxu0 0.0
      %1813 = vmatpush1.msra.mxu0 %v1463
      %1814 = vmatprep.subr.mxu0 0.0
      %1815 = vmatpush1.msra.mxu0 %v1464
      %1816 = vmatprep.subr.mxu0 0.0
      %1817 = vmatpush1.msra.mxu0 %v1465
      %1818 = vmatprep.subr.mxu0 0.0
      %1819 = vmatpush1.msra.mxu0 0.0
      %1820 = vmatprep.subr.mxu0 0.0
      %1821 = vmatpush1.msra.mxu0 0.0
      %1822 = vmatprep.subr.mxu0 0.0
      %1823 = vmatpush1.msra.mxu0 0.0
      %1824 = vmatprep.subr.mxu0 0.0
      %1825 = vmatpush1.msra.mxu0 0.0
      %1826 = vmatprep.subr.mxu0 0.0
      %1827 = vmatpush1.msra.mxu0 0.0
      %1828 = vmatprep.subr.mxu0 0.0
      %1829 = vmatpush1.msra.mxu0 0.0
      %1830 = vmatprep.subr.mxu0 0.0
      %1831 = vmatpush1.msra.mxu0 0.0
      %1832 = vmatprep.subr.mxu0 0.0
      %1833 = vmatpush1.msra.mxu0 0.0
      %1834 = vmatprep.subr.mxu0 0.0
      %1835 = vmatpush1.msra.mxu0 0.0
      %1836 = vmatprep.subr.mxu0 0.0
      %1837 = vmatpush1.msra.mxu0 0.0
      %1838 = vmatprep.subr.mxu0 0.0
      %1839 = vmatpush1.msra.mxu0 0.0
      %1840 = vmatprep.subr.mxu0 0.0
      %1841 = vmatpush1.msra.mxu0 0.0
      %1842 = vmatprep.subr.mxu0 0.0
      %1843 = vmatpush1.msra.mxu0 0.0
      %1844 = vmatprep.subr.mxu0 0.0
      %1845 = vmatpush1.msra.mxu0 0.0
      %1846 = vmatprep.subr.mxu0 0.0
      %1847 = vmatpush1.msra.mxu0 0.0
      %1848 = vmatprep.subr.mxu0 0.0
      %1849 = vmatpush1.msra.mxu0 0.0
      %1850 = vmatprep.subr.mxu0 0.0
      %1851 = vmatpush1.msra.mxu0 0.0
      %1852 = vmatprep.subr.mxu0 0.0
      %1853 = vmatpush1.msra.mxu0 0.0
      %1854 = vmatprep.subr.mxu0 0.0
      %1855 = vmatpush1.msra.mxu0 0.0
      %1856 = vmatprep.subr.mxu0 0.0
      %1857 = vmatpush1.msra.mxu0 0.0
      %1858 = vmatprep.subr.mxu0 0.0
      %1859 = vmatpush1.msra.mxu0 0.0
      %1860 = vmatprep.subr.mxu0 0.0
      %1861 = vmatpush1.msra.mxu0 0.0
      %1862 = vmatprep.subr.mxu0 0.0
      %1863 = vmatpush1.msra.mxu0 0.0
      %1864 = vmatprep.subr.mxu0 0.0
      %1865 = vmatpush1.msra.mxu0 0.0
      %1866 = vmatprep.mubr.f32.mxu0 0.0
      %1867 = vmatmul.mubr.f32.gmra.mrb[0].mxu0 %v1800
      %v1868 = vpop.f32.mrb[0].mxu0
      %v1869 = vadd.f32 0.0, %v1868
      %v1870 = vpop.f32.mrb[0].mxu0
      %1871 = vdwg.mxu0
      %v1872 = vld [vmem:[%s8 + $0x10] sm:$0xf]
      %v1873 = vld [vmem:[%s8 + $0x14] sm:$0xf]
      %v1874 = vld [vmem:[%s8 + $0x18] sm:$0xf]
      %v1875 = vld [vmem:[%s8 + $0x1c] sm:$0xf]
      %v1876 = vpack.c.bf16 %v1869, %v1869
      %v1881 = vunpack.c.l.b16 %v1872
      %v1882 = vunpack.c.l.b16 %v1873
      %v1883 = vunpack.c.l.b16 %v1874
      %v1884 = vunpack.c.l.b16 %v1875
      %v1885 = vpack.c.b16 %v1882, %v1881
      %v1886 = vpack.c.b16 %v1884, %v1883
      %v1890 = vsel %vm679, %v1876, 0
      %1892 = vmatprep.subr.bf16.mxu0 0
      %1893 = vmatpush1.bf16.msra.mxu0 %v1885
      %1894 = vmatprep.subr.bf16.mxu0 0
      %1895 = vmatpush1.bf16.msra.mxu0 %v1886
      %1896 = vmatprep.subr.bf16.mxu0 0
      %1897 = vmatpush1.bf16.msra.mxu0 0
      %1898 = vmatprep.subr.bf16.mxu0 0
      %1899 = vmatpush1.bf16.msra.mxu0 0
      %1900 = vmatprep.subr.bf16.mxu0 0
      %1901 = vmatpush1.bf16.msra.mxu0 0
      %1902 = vmatprep.subr.bf16.mxu0 0
      %1903 = vmatpush1.bf16.msra.mxu0 0
      %1904 = vmatprep.subr.bf16.mxu0 0
      %1905 = vmatpush1.bf16.msra.mxu0 0
      %1906 = vmatprep.subr.bf16.mxu0 0
      %1907 = vmatpush1.bf16.msra.mxu0 0
      %1908 = vmatprep.subr.bf16.mxu0 0
      %1909 = vmatpush1.bf16.msra.mxu0 0
      %1910 = vmatprep.subr.bf16.mxu0 0
      %1911 = vmatpush1.bf16.msra.mxu0 0
      %1912 = vmatprep.subr.bf16.mxu0 0
      %1913 = vmatpush1.bf16.msra.mxu0 0
      %1914 = vmatprep.subr.bf16.mxu0 0
      %1915 = vmatpush1.bf16.msra.mxu0 0
      %1916 = vmatprep.subr.bf16.mxu0 0
      %1917 = vmatpush1.bf16.msra.mxu0 0
      %1918 = vmatprep.subr.bf16.mxu0 0
      %1919 = vmatpush1.bf16.msra.mxu0 0
      %1920 = vmatprep.subr.bf16.mxu0 0
      %1921 = vmatpush1.bf16.msra.mxu0 0
      %1922 = vmatprep.subr.bf16.mxu0 0
      %1923 = vmatpush1.bf16.msra.mxu0 0
      %1924 = vmatprep.mubr.bf16.mxu0 0
      %1925 = vmatmul.mubr.bf16.gmra.mrb[0].mxu0 %v1890
      %v1926 = vpop.f32.mrb[0].mxu0
      %v1927 = vadd.f32 0.0, %v1926
      %v1928 = vpop.f32.mrb[0].mxu0
      %v1929 = vpop.f32.mrb[0].mxu0
      %v1930 = vpop.f32.mrb[0].mxu0
      %1931 = vdwg.mxu0
      %v1936 = vunpack.c.l.b16 %v1790
      %v1937 = vunpack.c.l.b16 %v1791
      %v1938 = vunpack.c.l.b16 %v1792
      %v1939 = vunpack.c.l.b16 %v1793
      %v1940 = vpack.c.b16 %v1937, %v1936
      %v1941 = vpack.c.b16 %v1939, %v1938
      %v1945 = vsel %vm679, %v1794, 0
      %1947 = vmatprep.subr.bf16.mxu0 0
      %1948 = vmatpush1.bf16.msra.mxu0 %v1940
      %1949 = vmatprep.subr.bf16.mxu0 0
      %1950 = vmatpush1.bf16.msra.mxu0 %v1941
      %1951 = vmatprep.subr.bf16.mxu0 0
      %1952 = vmatpush1.bf16.msra.mxu0 0
      %1953 = vmatprep.subr.bf16.mxu0 0
      %1954 = vmatpush1.bf16.msra.mxu0 0
      %1955 = vmatprep.subr.bf16.mxu0 0
      %1956 = vmatpush1.bf16.msra.mxu0 0
      %1957 = vmatprep.subr.bf16.mxu0 0
      %1958 = vmatpush1.bf16.msra.mxu0 0
      %1959 = vmatprep.subr.bf16.mxu0 0
      %1960 = vmatpush1.bf16.msra.mxu0 0
      %1961 = vmatprep.subr.bf16.mxu0 0
      %1962 = vmatpush1.bf16.msra.mxu0 0
      %1963 = vmatprep.subr.bf16.mxu0 0
      %1964 = vmatpush1.bf16.msra.mxu0 0
      %1965 = vmatprep.subr.bf16.mxu0 0
      %1966 = vmatpush1.bf16.msra.mxu0 0
      %1967 = vmatprep.subr.bf16.mxu0 0
      %1968 = vmatpush1.bf16.msra.mxu0 0
      %1969 = vmatprep.subr.bf16.mxu0 0
      %1970 = vmatpush1.bf16.msra.mxu0 0
      %1971 = vmatprep.subr.bf16.mxu0 0
      %1972 = vmatpush1.bf16.msra.mxu0 0
      %1973 = vmatprep.subr.bf16.mxu0 0
      %1974 = vmatpush1.bf16.msra.mxu0 0
      %1975 = vmatprep.subr.bf16.mxu0 0
      %1976 = vmatpush1.bf16.msra.mxu0 0
      %1977 = vmatprep.subr.bf16.mxu0 0
      %1978 = vmatpush1.bf16.msra.mxu0 0
      %1979 = vmatprep.mubr.bf16.mxu0 0
      %1980 = vmatmul.mubr.bf16.gmra.mrb[0].mxu0 %v1945
      %v1981 = vpop.f32.mrb[0].mxu0
      %v1982 = vadd.f32 %v1927, %v1981
      %v1983 = vpop.f32.mrb[0].mxu0
      %v1984 = vpop.f32.mrb[0].mxu0
      %v1985 = vpop.f32.mrb[0].mxu0
      %1986 = vdwg.mxu0
      %v1987 = vadd.s32 %v1466, 2
      %vm1988 = vcmp.eq.s32.totalorder %v560, %v1987
      %v1989 = vsel %vm1988, 1, 0
      %v1990 = vcvt.s32.f32 %v1989
      %v1992 = vsel %vm1471, %v1990, 0
      %1994 = vmatprep.subr.mxu0 0.0
      %1995 = vmatpush1.msra.mxu0 %v1458
      %1996 = vmatprep.subr.mxu0 0.0
      %1997 = vmatpush1.msra.mxu0 %v1459
      %1998 = vmatprep.subr.mxu0 0.0
      %1999 = vmatpush1.msra.mxu0 %v1460
      %2000 = vmatprep.subr.mxu0 0.0
      %2001 = vmatpush1.msra.mxu0 %v1461
      %2002 = vmatprep.subr.mxu0 0.0
      %2003 = vmatpush1.msra.mxu0 %v1462
      %2004 = vmatprep.subr.mxu0 0.0
      %2005 = vmatpush1.msra.mxu0 %v1463
      %2006 = vmatprep.subr.mxu0 0.0
      %2007 = vmatpush1.msra.mxu0 %v1464
      %2008 = vmatprep.subr.mxu0 0.0
      %2009 = vmatpush1.msra.mxu0 %v1465
      %2010 = vmatprep.subr.mxu0 0.0
      %2011 = vmatpush1.msra.mxu0 0.0
      %2012 = vmatprep.subr.mxu0 0.0
      %2013 = vmatpush1.msra.mxu0 0.0
      %2014 = vmatprep.subr.mxu0 0.0
      %2015 = vmatpush1.msra.mxu0 0.0
      %2016 = vmatprep.subr.mxu0 0.0
      %2017 = vmatpush1.msra.mxu0 0.0
      %2018 = vmatprep.subr.mxu0 0.0
      %2019 = vmatpush1.msra.mxu0 0.0
      %2020 = vmatprep.subr.mxu0 0.0
      %2021 = vmatpush1.msra.mxu0 0.0
      %2022 = vmatprep.subr.mxu0 0.0
      %2023 = vmatpush1.msra.mxu0 0.0
      %2024 = vmatprep.subr.mxu0 0.0
      %2025 = vmatpush1.msra.mxu0 0.0
      %2026 = vmatprep.subr.mxu0 0.0
      %2027 = vmatpush1.msra.mxu0 0.0
      %2028 = vmatprep.subr.mxu0 0.0
      %2029 = vmatpush1.msra.mxu0 0.0
      %2030 = vmatprep.subr.mxu0 0.0
      %2031 = vmatpush1.msra.mxu0 0.0
      %2032 = vmatprep.subr.mxu0 0.0
      %2033 = vmatpush1.msra.mxu0 0.0
      %2034 = vmatprep.subr.mxu0 0.0
      %2035 = vmatpush1.msra.mxu0 0.0
      %2036 = vmatprep.subr.mxu0 0.0
      %2037 = vmatpush1.msra.mxu0 0.0
      %2038 = vmatprep.subr.mxu0 0.0
      %2039 = vmatpush1.msra.mxu0 0.0
      %2040 = vmatprep.subr.mxu0 0.0
      %2041 = vmatpush1.msra.mxu0 0.0
      %2042 = vmatprep.subr.mxu0 0.0
      %2043 = vmatpush1.msra.mxu0 0.0
      %2044 = vmatprep.subr.mxu0 0.0
      %2045 = vmatpush1.msra.mxu0 0.0
      %2046 = vmatprep.subr.mxu0 0.0
      %2047 = vmatpush1.msra.mxu0 0.0
      %2048 = vmatprep.subr.mxu0 0.0
      %2049 = vmatpush1.msra.mxu0 0.0
      %2050 = vmatprep.subr.mxu0 0.0
      %2051 = vmatpush1.msra.mxu0 0.0
      %2052 = vmatprep.subr.mxu0 0.0
      %2053 = vmatpush1.msra.mxu0 0.0
      %2054 = vmatprep.subr.mxu0 0.0
      %2055 = vmatpush1.msra.mxu0 0.0
      %2056 = vmatprep.subr.mxu0 0.0
      %2057 = vmatpush1.msra.mxu0 0.0
      %2058 = vmatprep.mubr.f32.mxu0 0.0
      %2059 = vmatmul.mubr.f32.gmra.mrb[0].mxu0 %v1992
      %v2060 = vpop.f32.mrb[0].mxu0
      %v2061 = vadd.f32 0.0, %v2060
      %v2062 = vpop.f32.mrb[0].mxu0
      %2063 = vdwg.mxu0
      %v2064 = vld [vmem:[%s8 + $0x20] sm:$0xf]
      %v2065 = vld [vmem:[%s8 + $0x24] sm:$0xf]
      %v2066 = vld [vmem:[%s8 + $0x28] sm:$0xf]
      %v2067 = vld [vmem:[%s8 + $0x2c] sm:$0xf]
      %v2068 = vpack.c.bf16 %v2061, %v2061
      %v2073 = vunpack.c.l.b16 %v2064
      %v2074 = vunpack.c.l.b16 %v2065
      %v2075 = vunpack.c.l.b16 %v2066
      %v2076 = vunpack.c.l.b16 %v2067
      %v2077 = vpack.c.b16 %v2074, %v2073
      %v2078 = vpack.c.b16 %v2076, %v2075
      %v2082 = vsel %vm679, %v2068, 0
      %2084 = vmatprep.subr.bf16.mxu0 0
      %2085 = vmatpush1.bf16.msra.mxu0 %v2077
      %2086 = vmatprep.subr.bf16.mxu0 0
      %2087 = vmatpush1.bf16.msra.mxu0 %v2078
      %2088 = vmatprep.subr.bf16.mxu0 0
      %2089 = vmatpush1.bf16.msra.mxu0 0
      %2090 = vmatprep.subr.bf16.mxu0 0
      %2091 = vmatpush1.bf16.msra.mxu0 0
      %2092 = vmatprep.subr.bf16.mxu0 0
      %2093 = vmatpush1.bf16.msra.mxu0 0
      %2094 = vmatprep.subr.bf16.mxu0 0
      %2095 = vmatpush1.bf16.msra.mxu0 0
      %2096 = vmatprep.subr.bf16.mxu0 0
      %2097 = vmatpush1.bf16.msra.mxu0 0
      %2098 = vmatprep.subr.bf16.mxu0 0
      %2099 = vmatpush1.bf16.msra.mxu0 0
      %2100 = vmatprep.subr.bf16.mxu0 0
      %2101 = vmatpush1.bf16.msra.mxu0 0
      %2102 = vmatprep.subr.bf16.mxu0 0
      %2103 = vmatpush1.bf16.msra.mxu0 0
      %2104 = vmatprep.subr.bf16.mxu0 0
      %2105 = vmatpush1.bf16.msra.mxu0 0
      %2106 = vmatprep.subr.bf16.mxu0 0
      %2107 = vmatpush1.bf16.msra.mxu0 0
      %2108 = vmatprep.subr.bf16.mxu0 0
      %2109 = vmatpush1.bf16.msra.mxu0 0
      %2110 = vmatprep.subr.bf16.mxu0 0
      %2111 = vmatpush1.bf16.msra.mxu0 0
      %2112 = vmatprep.subr.bf16.mxu0 0
      %2113 = vmatpush1.bf16.msra.mxu0 0
      %2114 = vmatprep.subr.bf16.mxu0 0
      %2115 = vmatpush1.bf16.msra.mxu0 0
      %2116 = vmatprep.mubr.bf16.mxu0 0
      %2117 = vmatmul.mubr.bf16.gmra.mrb[0].mxu0 %v2082
      %v2118 = vpop.f32.mrb[0].mxu0
      %v2119 = vadd.f32 0.0, %v2118
      %v2120 = vpop.f32.mrb[0].mxu0
      %v2121 = vpop.f32.mrb[0].mxu0
      %v2122 = vpop.f32.mrb[0].mxu0
      %2123 = vdwg.mxu0
      %v2124 = vadd.f32 %v1982, %v2119
      %v2125 = vadd.s32 %v1466, 3
      %vm2126 = vcmp.eq.s32.totalorder %v560, %v2125
      %v2127 = vsel %vm2126, 1, 0
      %v2128 = vcvt.s32.f32 %v2127
      %v2130 = vsel %vm1471, %v2128, 0
      %2132 = vmatprep.subr.mxu0 0.0
      %2133 = vmatpush1.msra.mxu0 %v1458
      %2134 = vmatprep.subr.mxu0 0.0
      %2135 = vmatpush1.msra.mxu0 %v1459
      %2136 = vmatprep.subr.mxu0 0.0
      %2137 = vmatpush1.msra.mxu0 %v1460
      %2138 = vmatprep.subr.mxu0 0.0
      %2139 = vmatpush1.msra.mxu0 %v1461
      %2140 = vmatprep.subr.mxu0 0.0
      %2141 = vmatpush1.msra.mxu0 %v1462
      %2142 = vmatprep.subr.mxu0 0.0
      %2143 = vmatpush1.msra.mxu0 %v1463
      %2144 = vmatprep.subr.mxu0 0.0
      %2145 = vmatpush1.msra.mxu0 %v1464
      %2146 = vmatprep.subr.mxu0 0.0
      %2147 = vmatpush1.msra.mxu0 %v1465
      %2148 = vmatprep.subr.mxu0 0.0
      %2149 = vmatpush1.msra.mxu0 0.0
      %2150 = vmatprep.subr.mxu0 0.0
      %2151 = vmatpush1.msra.mxu0 0.0
      %2152 = vmatprep.subr.mxu0 0.0
      %2153 = vmatpush1.msra.mxu0 0.0
      %2154 = vmatprep.subr.mxu0 0.0
      %2155 = vmatpush1.msra.mxu0 0.0
      %2156 = vmatprep.subr.mxu0 0.0
      %2157 = vmatpush1.msra.mxu0 0.0
      %2158 = vmatprep.subr.mxu0 0.0
      %2159 = vmatpush1.msra.mxu0 0.0
      %2160 = vmatprep.subr.mxu0 0.0
      %2161 = vmatpush1.msra.mxu0 0.0
      %2162 = vmatprep.subr.mxu0 0.0
      %2163 = vmatpush1.msra.mxu0 0.0
      %2164 = vmatprep.subr.mxu0 0.0
      %2165 = vmatpush1.msra.mxu0 0.0
      %2166 = vmatprep.subr.mxu0 0.0
      %2167 = vmatpush1.msra.mxu0 0.0
      %2168 = vmatprep.subr.mxu0 0.0
      %2169 = vmatpush1.msra.mxu0 0.0
      %2170 = vmatprep.subr.mxu0 0.0
      %2171 = vmatpush1.msra.mxu0 0.0
      %2172 = vmatprep.subr.mxu0 0.0
      %2173 = vmatpush1.msra.mxu0 0.0
      %2174 = vmatprep.subr.mxu0 0.0
      %2175 = vmatpush1.msra.mxu0 0.0
      %2176 = vmatprep.subr.mxu0 0.0
      %2177 = vmatpush1.msra.mxu0 0.0
      %2178 = vmatprep.subr.mxu0 0.0
      %2179 = vmatpush1.msra.mxu0 0.0
      %2180 = vmatprep.subr.mxu0 0.0
      %2181 = vmatpush1.msra.mxu0 0.0
      %2182 = vmatprep.subr.mxu0 0.0
      %2183 = vmatpush1.msra.mxu0 0.0
      %2184 = vmatprep.subr.mxu0 0.0
      %2185 = vmatpush1.msra.mxu0 0.0
      %2186 = vmatprep.subr.mxu0 0.0
      %2187 = vmatpush1.msra.mxu0 0.0
      %2188 = vmatprep.subr.mxu0 0.0
      %2189 = vmatpush1.msra.mxu0 0.0
      %2190 = vmatprep.subr.mxu0 0.0
      %2191 = vmatpush1.msra.mxu0 0.0
      %2192 = vmatprep.subr.mxu0 0.0
      %2193 = vmatpush1.msra.mxu0 0.0
      %2194 = vmatprep.subr.mxu0 0.0
      %2195 = vmatpush1.msra.mxu0 0.0
      %2196 = vmatprep.mubr.f32.mxu0 0.0
      %2197 = vmatmul.mubr.f32.gmra.mrb[0].mxu0 %v2130
      %v2198 = vpop.f32.mrb[0].mxu0
      %v2199 = vadd.f32 0.0, %v2198
      %v2200 = vpop.f32.mrb[0].mxu0
      %2201 = vdwg.mxu0
      %v2202 = vld [vmem:[%s8 + $0x30] sm:$0xf]
      %v2203 = vld [vmem:[%s8 + $0x34] sm:$0xf]
      %v2204 = vld [vmem:[%s8 + $0x38] sm:$0xf]
      %v2205 = vld [vmem:[%s8 + $0x3c] sm:$0xf]
      %v2206 = vpack.c.bf16 %v2199, %v2199
      %v2211 = vunpack.c.l.b16 %v2202
      %v2212 = vunpack.c.l.b16 %v2203
      %v2213 = vunpack.c.l.b16 %v2204
      %v2214 = vunpack.c.l.b16 %v2205
      %v2215 = vpack.c.b16 %v2212, %v2211
      %v2216 = vpack.c.b16 %v2214, %v2213
      %v2220 = vsel %vm679, %v2206, 0
      %2222 = vmatprep.subr.bf16.mxu0 0
      %2223 = vmatpush1.bf16.msra.mxu0 %v2215
      %2224 = vmatprep.subr.bf16.mxu0 0
      %2225 = vmatpush1.bf16.msra.mxu0 %v2216
      %2226 = vmatprep.subr.bf16.mxu0 0
      %2227 = vmatpush1.bf16.msra.mxu0 0
      %2228 = vmatprep.subr.bf16.mxu0 0
      %2229 = vmatpush1.bf16.msra.mxu0 0
      %2230 = vmatprep.subr.bf16.mxu0 0
      %2231 = vmatpush1.bf16.msra.mxu0 0
      %2232 = vmatprep.subr.bf16.mxu0 0
      %2233 = vmatpush1.bf16.msra.mxu0 0
      %2234 = vmatprep.subr.bf16.mxu0 0
      %2235 = vmatpush1.bf16.msra.mxu0 0
      %2236 = vmatprep.subr.bf16.mxu0 0
      %2237 = vmatpush1.bf16.msra.mxu0 0
      %2238 = vmatprep.subr.bf16.mxu0 0
      %2239 = vmatpush1.bf16.msra.mxu0 0
      %2240 = vmatprep.subr.bf16.mxu0 0
      %2241 = vmatpush1.bf16.msra.mxu0 0
      %2242 = vmatprep.subr.bf16.mxu0 0
      %2243 = vmatpush1.bf16.msra.mxu0 0
      %2244 = vmatprep.subr.bf16.mxu0 0
      %2245 = vmatpush1.bf16.msra.mxu0 0
      %2246 = vmatprep.subr.bf16.mxu0 0
      %2247 = vmatpush1.bf16.msra.mxu0 0
      %2248 = vmatprep.subr.bf16.mxu0 0
      %2249 = vmatpush1.bf16.msra.mxu0 0
      %2250 = vmatprep.subr.bf16.mxu0 0
      %2251 = vmatpush1.bf16.msra.mxu0 0
      %2252 = vmatprep.subr.bf16.mxu0 0
      %2253 = vmatpush1.bf16.msra.mxu0 0
      %2254 = vmatprep.mubr.bf16.mxu0 0
      %2255 = vmatmul.mubr.bf16.gmra.mrb[0].mxu0 %v2220
      %v2256 = vpop.f32.mrb[0].mxu0
      %v2257 = vadd.f32 0.0, %v2256
      %v2258 = vpop.f32.mrb[0].mxu0
      %v2259 = vpop.f32.mrb[0].mxu0
      %v2260 = vpop.f32.mrb[0].mxu0
      %2261 = vdwg.mxu0
      %v2262 = vadd.f32 %v2124, %v2257
      %v2263 = vadd.s32 %v1466, 4
      %vm2264 = vcmp.eq.s32.totalorder %v560, %v2263
      %v2265 = vsel %vm2264, 1, 0
      %v2266 = vcvt.s32.f32 %v2265
      %v2268 = vsel %vm1471, %v2266, 0
      %2270 = vmatprep.subr.mxu0 0.0
      %2271 = vmatpush1.msra.mxu0 %v1458
      %2272 = vmatprep.subr.mxu0 0.0
      %2273 = vmatpush1.msra.mxu0 %v1459
      %2274 = vmatprep.subr.mxu0 0.0
      %2275 = vmatpush1.msra.mxu0 %v1460
      %2276 = vmatprep.subr.mxu0 0.0
      %2277 = vmatpush1.msra.mxu0 %v1461
      %2278 = vmatprep.subr.mxu0 0.0
      %2279 = vmatpush1.msra.mxu0 %v1462
      %2280 = vmatprep.subr.mxu0 0.0
      %2281 = vmatpush1.msra.mxu0 %v1463
      %2282 = vmatprep.subr.mxu0 0.0
      %2283 = vmatpush1.msra.mxu0 %v1464
      %2284 = vmatprep.subr.mxu0 0.0
      %2285 = vmatpush1.msra.mxu0 %v1465
      %2286 = vmatprep.subr.mxu0 0.0
      %2287 = vmatpush1.msra.mxu0 0.0
      %2288 = vmatprep.subr.mxu0 0.0
      %2289 = vmatpush1.msra.mxu0 0.0
      %2290 = vmatprep.subr.mxu0 0.0
      %2291 = vmatpush1.msra.mxu0 0.0
      %2292 = vmatprep.subr.mxu0 0.0
      %2293 = vmatpush1.msra.mxu0 0.0
      %2294 = vmatprep.subr.mxu0 0.0
      %2295 = vmatpush1.msra.mxu0 0.0
      %2296 = vmatprep.subr.mxu0 0.0
      %2297 = vmatpush1.msra.mxu0 0.0
      %2298 = vmatprep.subr.mxu0 0.0
      %2299 = vmatpush1.msra.mxu0 0.0
      %2300 = vmatprep.subr.mxu0 0.0
      %2301 = vmatpush1.msra.mxu0 0.0
      %2302 = vmatprep.subr.mxu0 0.0
      %2303 = vmatpush1.msra.mxu0 0.0
      %2304 = vmatprep.subr.mxu0 0.0
      %2305 = vmatpush1.msra.mxu0 0.0
      %2306 = vmatprep.subr.mxu0 0.0
      %2307 = vmatpush1.msra.mxu0 0.0
      %2308 = vmatprep.subr.mxu0 0.0
      %2309 = vmatpush1.msra.mxu0 0.0
      %2310 = vmatprep.subr.mxu0 0.0
      %2311 = vmatpush1.msra.mxu0 0.0
      %2312 = vmatprep.subr.mxu0 0.0
      %2313 = vmatpush1.msra.mxu0 0.0
      %2314 = vmatprep.subr.mxu0 0.0
      %2315 = vmatpush1.msra.mxu0 0.0
      %2316 = vmatprep.subr.mxu0 0.0
      %2317 = vmatpush1.msra.mxu0 0.0
      %2318 = vmatprep.subr.mxu0 0.0
      %2319 = vmatpush1.msra.mxu0 0.0
      %2320 = vmatprep.subr.mxu0 0.0
      %2321 = vmatpush1.msra.mxu0 0.0
      %2322 = vmatprep.subr.mxu0 0.0
      %2323 = vmatpush1.msra.mxu0 0.0
      %2324 = vmatprep.subr.mxu0 0.0
      %2325 = vmatpush1.msra.mxu0 0.0
      %2326 = vmatprep.subr.mxu0 0.0
      %2327 = vmatpush1.msra.mxu0 0.0
      %2328 = vmatprep.subr.mxu0 0.0
      %2329 = vmatpush1.msra.mxu0 0.0
      %2330 = vmatprep.subr.mxu0 0.0
      %2331 = vmatpush1.msra.mxu0 0.0
      %2332 = vmatprep.subr.mxu0 0.0
      %2333 = vmatpush1.msra.mxu0 0.0
      %2334 = vmatprep.mubr.f32.mxu0 0.0
      %2335 = vmatmul.mubr.f32.gmra.mrb[0].mxu0 %v2268
      %v2336 = vpop.f32.mrb[0].mxu0
      %v2337 = vadd.f32 0.0, %v2336
      %v2338 = vpop.f32.mrb[0].mxu0
      %2339 = vdwg.mxu0
      %v2340 = vld [vmem:[%s8 + $0x40] sm:$0xf]
      %v2341 = vld [vmem:[%s8 + $0x44] sm:$0xf]
      %v2342 = vld [vmem:[%s8 + $0x48] sm:$0xf]
      %v2343 = vld [vmem:[%s8 + $0x4c] sm:$0xf]
      %v2344 = vpack.c.bf16 %v2337, %v2337
      %v2349 = vunpack.c.l.b16 %v2340
      %v2350 = vunpack.c.l.b16 %v2341
      %v2351 = vunpack.c.l.b16 %v2342
      %v2352 = vunpack.c.l.b16 %v2343
      %v2353 = vpack.c.b16 %v2350, %v2349
      %v2354 = vpack.c.b16 %v2352, %v2351
      %v2358 = vsel %vm679, %v2344, 0
      %2360 = vmatprep.subr.bf16.mxu0 0
      %2361 = vmatpush1.bf16.msra.mxu0 %v2353
      %2362 = vmatprep.subr.bf16.mxu0 0
      %2363 = vmatpush1.bf16.msra.mxu0 %v2354
      %2364 = vmatprep.subr.bf16.mxu0 0
      %2365 = vmatpush1.bf16.msra.mxu0 0
      %2366 = vmatprep.subr.bf16.mxu0 0
      %2367 = vmatpush1.bf16.msra.mxu0 0
      %2368 = vmatprep.subr.bf16.mxu0 0
      %2369 = vmatpush1.bf16.msra.mxu0 0
      %2370 = vmatprep.subr.bf16.mxu0 0
      %2371 = vmatpush1.bf16.msra.mxu0 0
      %2372 = vmatprep.subr.bf16.mxu0 0
      %2373 = vmatpush1.bf16.msra.mxu0 0
      %2374 = vmatprep.subr.bf16.mxu0 0
      %2375 = vmatpush1.bf16.msra.mxu0 0
      %2376 = vmatprep.subr.bf16.mxu0 0
      %2377 = vmatpush1.bf16.msra.mxu0 0
      %2378 = vmatprep.subr.bf16.mxu0 0
      %2379 = vmatpush1.bf16.msra.mxu0 0
      %2380 = vmatprep.subr.bf16.mxu0 0
      %2381 = vmatpush1.bf16.msra.mxu0 0
      %2382 = vmatprep.subr.bf16.mxu0 0
      %2383 = vmatpush1.bf16.msra.mxu0 0
      %2384 = vmatprep.subr.bf16.mxu0 0
      %2385 = vmatpush1.bf16.msra.mxu0 0
      %2386 = vmatprep.subr.bf16.mxu0 0
      %2387 = vmatpush1.bf16.msra.mxu0 0
      %2388 = vmatprep.subr.bf16.mxu0 0
      %2389 = vmatpush1.bf16.msra.mxu0 0
      %2390 = vmatprep.subr.bf16.mxu0 0
      %2391 = vmatpush1.bf16.msra.mxu0 0
      %2392 = vmatprep.mubr.bf16.mxu0 0
      %2393 = vmatmul.mubr.bf16.gmra.mrb[0].mxu0 %v2358
      %v2394 = vpop.f32.mrb[0].mxu0
      %v2395 = vadd.f32 0.0, %v2394
      %v2396 = vpop.f32.mrb[0].mxu0
      %v2397 = vpop.f32.mrb[0].mxu0
      %v2398 = vpop.f32.mrb[0].mxu0
      %2399 = vdwg.mxu0
      %v2400 = vadd.f32 %v2262, %v2395
      %v2401 = vadd.s32 %v1466, 5
      %vm2402 = vcmp.eq.s32.totalorder %v560, %v2401
      %v2403 = vsel %vm2402, 1, 0
      %v2404 = vcvt.s32.f32 %v2403
      %v2406 = vsel %vm1471, %v2404, 0
      %2408 = vmatprep.subr.mxu0 0.0
      %2409 = vmatpush1.msra.mxu0 %v1458
      %2410 = vmatprep.subr.mxu0 0.0
      %2411 = vmatpush1.msra.mxu0 %v1459
      %2412 = vmatprep.subr.mxu0 0.0
      %2413 = vmatpush1.msra.mxu0 %v1460
      %2414 = vmatprep.subr.mxu0 0.0
      %2415 = vmatpush1.msra.mxu0 %v1461
      %2416 = vmatprep.subr.mxu0 0.0
      %2417 = vmatpush1.msra.mxu0 %v1462
      %2418 = vmatprep.subr.mxu0 0.0
      %2419 = vmatpush1.msra.mxu0 %v1463
      %2420 = vmatprep.subr.mxu0 0.0
      %2421 = vmatpush1.msra.mxu0 %v1464
      %2422 = vmatprep.subr.mxu0 0.0
      %2423 = vmatpush1.msra.mxu0 %v1465
      %2424 = vmatprep.subr.mxu0 0.0
      %2425 = vmatpush1.msra.mxu0 0.0
      %2426 = vmatprep.subr.mxu0 0.0
      %2427 = vmatpush1.msra.mxu0 0.0
      %2428 = vmatprep.subr.mxu0 0.0
      %2429 = vmatpush1.msra.mxu0 0.0
      %2430 = vmatprep.subr.mxu0 0.0
      %2431 = vmatpush1.msra.mxu0 0.0
      %2432 = vmatprep.subr.mxu0 0.0
      %2433 = vmatpush1.msra.mxu0 0.0
      %2434 = vmatprep.subr.mxu0 0.0
      %2435 = vmatpush1.msra.mxu0 0.0
      %2436 = vmatprep.subr.mxu0 0.0
      %2437 = vmatpush1.msra.mxu0 0.0
      %2438 = vmatprep.subr.mxu0 0.0
      %2439 = vmatpush1.msra.mxu0 0.0
      %2440 = vmatprep.subr.mxu0 0.0
      %2441 = vmatpush1.msra.mxu0 0.0
      %2442 = vmatprep.subr.mxu0 0.0
      %2443 = vmatpush1.msra.mxu0 0.0
      %2444 = vmatprep.subr.mxu0 0.0
      %2445 = vmatpush1.msra.mxu0 0.0
      %2446 = vmatprep.subr.mxu0 0.0
      %2447 = vmatpush1.msra.mxu0 0.0
      %2448 = vmatprep.subr.mxu0 0.0
      %2449 = vmatpush1.msra.mxu0 0.0
      %2450 = vmatprep.subr.mxu0 0.0
      %2451 = vmatpush1.msra.mxu0 0.0
      %2452 = vmatprep.subr.mxu0 0.0
      %2453 = vmatpush1.msra.mxu0 0.0
      %2454 = vmatprep.subr.mxu0 0.0
      %2455 = vmatpush1.msra.mxu0 0.0
      %2456 = vmatprep.subr.mxu0 0.0
      %2457 = vmatpush1.msra.mxu0 0.0
      %2458 = vmatprep.subr.mxu0 0.0
      %2459 = vmatpush1.msra.mxu0 0.0
      %2460 = vmatprep.subr.mxu0 0.0
      %2461 = vmatpush1.msra.mxu0 0.0
      %2462 = vmatprep.subr.mxu0 0.0
      %2463 = vmatpush1.msra.mxu0 0.0
      %2464 = vmatprep.subr.mxu0 0.0
      %2465 = vmatpush1.msra.mxu0 0.0
      %2466 = vmatprep.subr.mxu0 0.0
      %2467 = vmatpush1.msra.mxu0 0.0
      %2468 = vmatprep.subr.mxu0 0.0
      %2469 = vmatpush1.msra.mxu0 0.0
      %2470 = vmatprep.subr.mxu0 0.0
      %2471 = vmatpush1.msra.mxu0 0.0
      %2472 = vmatprep.mubr.f32.mxu0 0.0
      %2473 = vmatmul.mubr.f32.gmra.mrb[0].mxu0 %v2406
      %v2474 = vpop.f32.mrb[0].mxu0
      %v2475 = vadd.f32 0.0, %v2474
      %v2476 = vpop.f32.mrb[0].mxu0
      %2477 = vdwg.mxu0
      %v2478 = vld [vmem:[%s8 + $0x50] sm:$0xf]
      %v2479 = vld [vmem:[%s8 + $0x54] sm:$0xf]
      %v2480 = vld [vmem:[%s8 + $0x58] sm:$0xf]
      %v2481 = vld [vmem:[%s8 + $0x5c] sm:$0xf]
      %v2482 = vpack.c.bf16 %v2475, %v2475
      %v2487 = vunpack.c.l.b16 %v2478
      %v2488 = vunpack.c.l.b16 %v2479
      %v2489 = vunpack.c.l.b16 %v2480
      %v2490 = vunpack.c.l.b16 %v2481
      %v2491 = vpack.c.b16 %v2488, %v2487
      %v2492 = vpack.c.b16 %v2490, %v2489
      %v2496 = vsel %vm679, %v2482, 0
      %2498 = vmatprep.subr.bf16.mxu0 0
      %2499 = vmatpush1.bf16.msra.mxu0 %v2491
      %2500 = vmatprep.subr.bf16.mxu0 0
      %2501 = vmatpush1.bf16.msra.mxu0 %v2492
      %2502 = vmatprep.subr.bf16.mxu0 0
      %2503 = vmatpush1.bf16.msra.mxu0 0
      %2504 = vmatprep.subr.bf16.mxu0 0
      %2505 = vmatpush1.bf16.msra.mxu0 0
      %2506 = vmatprep.subr.bf16.mxu0 0
      %2507 = vmatpush1.bf16.msra.mxu0 0
      %2508 = vmatprep.subr.bf16.mxu0 0
      %2509 = vmatpush1.bf16.msra.mxu0 0
      %2510 = vmatprep.subr.bf16.mxu0 0
      %2511 = vmatpush1.bf16.msra.mxu0 0
      %2512 = vmatprep.subr.bf16.mxu0 0
      %2513 = vmatpush1.bf16.msra.mxu0 0
      %2514 = vmatprep.subr.bf16.mxu0 0
      %2515 = vmatpush1.bf16.msra.mxu0 0
      %2516 = vmatprep.subr.bf16.mxu0 0
      %2517 = vmatpush1.bf16.msra.mxu0 0
      %2518 = vmatprep.subr.bf16.mxu0 0
      %2519 = vmatpush1.bf16.msra.mxu0 0
      %2520 = vmatprep.subr.bf16.mxu0 0
      %2521 = vmatpush1.bf16.msra.mxu0 0
      %2522 = vmatprep.subr.bf16.mxu0 0
      %2523 = vmatpush1.bf16.msra.mxu0 0
      %2524 = vmatprep.subr.bf16.mxu0 0
      %2525 = vmatpush1.bf16.msra.mxu0 0
      %2526 = vmatprep.subr.bf16.mxu0 0
      %2527 = vmatpush1.bf16.msra.mxu0 0
      %2528 = vmatprep.subr.bf16.mxu0 0
      %2529 = vmatpush1.bf16.msra.mxu0 0
      %2530 = vmatprep.mubr.bf16.mxu0 0
      %2531 = vmatmul.mubr.bf16.gmra.mrb[0].mxu0 %v2496
      %v2532 = vpop.f32.mrb[0].mxu0
      %v2533 = vadd.f32 0.0, %v2532
      %v2534 = vpop.f32.mrb[0].mxu0
      %v2535 = vpop.f32.mrb[0].mxu0
      %v2536 = vpop.f32.mrb[0].mxu0
      %2537 = vdwg.mxu0
      %v2538 = vadd.f32 %v2400, %v2533
      %v2539 = vld [vmem:[%s9] sm:$0x1]
      %v2541 = vlaneseq
      %v2542 = vshrl.u32 %v2541, 7
      %v2543 = vsub.s32 0, %v2542
      %v2544 = vrot.slane %v2539, %v2543
      %v2546 = vadd.f32 %v2538, %v2544
      %v2547 = vld [vmem:[%s10] sm:$0x1]
      %v2548 = vld [vmem:[%s11] sm:$0x1]
      %v2549 = vsel %vm679, %v2546, 0.0
      %2550 = vadd.xlane.f32.xlu0 %v2549
      %v2551 = vpop.xlane.xlu0 %2550
      %v2552 = vmul.f32 %v2551, %v1617
      %v2553 = vsub.f32 %v2546, %v2552
      %v2554 = vmul.f32 %v2553, %v2553
      %v2555 = vsel %vm679, %v2554, 0.0
      %2556 = vadd.xlane.f32.xlu0 %v2555
      %v2557 = vpop.xlane.xlu0 %2556
      %v2558 = vmul.f32 %v2557, %v1617
      %v2559 = vadd.f32 %v2558, 1e-05
      %v2560 = vrsqrt.pop %v2559
      %v2561 = vmul.f32 %v2553, %v2560
      %v2563 = vlaneseq
      %v2564 = vshrl.u32 %v2563, 7
      %v2565 = vsub.s32 0, %v2564
      %v2566 = vrot.slane %v2547, %v2565
      %v2568 = vmul.f32 %v2561, %v2566
      %v2570 = vlaneseq
      %v2571 = vshrl.u32 %v2570, 7
      %v2572 = vsub.s32 0, %v2571
      %v2573 = vrot.slane %v2548, %v2572
      %v2575 = vadd.f32 %v2568, %v2573
      %v2576 = vmul.f32 %v2575, 0.5
      %v2577 = vmul.f32 %v2575, 0.70710677
      %v2578 = verf.f32.pop %v2577
      %v2579 = vadd.f32 %v2578, 1.0
      %v2580 = vmul.f32 %v2576, %v2579
      %v2581 = vld [vmem:[%s12] sm:$0xf]
      %v2582 = vld [vmem:[%s12 + $0x4] sm:$0xf]
      %v2583 = vld [vmem:[%s12 + $0x8] sm:$0xf]
      %v2584 = vld [vmem:[%s12 + $0xc] sm:$0xf]
      %v2585 = vpack.c.bf16 %v2580, %v2580
      %v2586 = vld [vmem:[%s13] sm:$0x1]
      %v2588 = vlaneseq
      %v2589 = vshrl.u32 %v2588, 7
      %v2590 = vsub.s32 0, %v2589
      %v2591 = vrot.slane %v2586, %v2590
      %v2597 = vunpack.c.l.b16 %v2581
      %v2598 = vunpack.c.l.b16 %v2582
      %v2599 = vunpack.c.l.b16 %v2583
      %v2600 = vunpack.c.l.b16 %v2584
      %v2601 = vpack.c.b16 %v2598, %v2597
      %v2602 = vpack.c.b16 %v2600, %v2599
      %v2606 = vsel %vm679, %v2585, 0
      %2608 = vmatprep.subr.bf16.mxu0 0
      %2609 = vmatpush1.bf16.msra.mxu0 %v2601
      %2610 = vmatprep.subr.bf16.mxu0 0
      %2611 = vmatpush1.bf16.msra.mxu0 %v2602
      %2612 = vmatprep.subr.bf16.mxu0 0
      %2613 = vmatpush1.bf16.msra.mxu0 0
      %2614 = vmatprep.subr.bf16.mxu0 0
      %2615 = vmatpush1.bf16.msra.mxu0 0
      %2616 = vmatprep.subr.bf16.mxu0 0
      %2617 = vmatpush1.bf16.msra.mxu0 0
      %2618 = vmatprep.subr.bf16.mxu0 0
      %2619 = vmatpush1.bf16.msra.mxu0 0
      %2620 = vmatprep.subr.bf16.mxu0 0
      %2621 = vmatpush1.bf16.msra.mxu0 0
      %2622 = vmatprep.subr.bf16.mxu0 0
      %2623 = vmatpush1.bf16.msra.mxu0 0
      %2624 = vmatprep.subr.bf16.mxu0 0
      %2625 = vmatpush1.bf16.msra.mxu0 0
      %2626 = vmatprep.subr.bf16.mxu0 0
      %2627 = vmatpush1.bf16.msra.mxu0 0
      %2628 = vmatprep.subr.bf16.mxu0 0
      %2629 = vmatpush1.bf16.msra.mxu0 0
      %2630 = vmatprep.subr.bf16.mxu0 0
      %2631 = vmatpush1.bf16.msra.mxu0 0
      %2632 = vmatprep.subr.bf16.mxu0 0
      %2633 = vmatpush1.bf16.msra.mxu0 0
      %2634 = vmatprep.subr.bf16.mxu0 0
      %2635 = vmatpush1.bf16.msra.mxu0 0
      %2636 = vmatprep.subr.bf16.mxu0 0
      %2637 = vmatpush1.bf16.msra.mxu0 0
      %2638 = vmatprep.subr.bf16.mxu0 0
      %2639 = vmatpush1.bf16.msra.mxu0 0
      %2640 = vmatprep.mubr.bf16.mxu0 0
      %2641 = vmatmul.mubr.bf16.gmra.mrb[0].mxu0 %v2606
      %v2642 = vpop.f32.mrb[0].mxu0
      %v2643 = vadd.f32 %v2591, %v2642
      %v2644 = vpop.f32.mrb[0].mxu0
      %v2645 = vpop.f32.mrb[0].mxu0
      %v2646 = vpop.f32.mrb[0].mxu0
      %2647 = vdwg.mxu0
      %v2648 = vld [vmem:[%s14] sm:$0xf]
      %v2649 = vld [vmem:[%s14 + $0x4] sm:$0xf]
      %v2650 = vpack.c.bf16 %v1709, %v1709
      %v2651 = vld [vmem:[%s14 + $0x8] sm:$0xf]
      %v2652 = vld [vmem:[%s14 + $0xc] sm:$0xf]
      %v2653 = vpack.c.bf16 %v2643, %v2643
      %v2656 = vunpack.c.l.b16 %v2651
      %v2657 = vunpack.c.l.b16 %v2652
      %v2658 = vpack.c.b16 %v2657, %v2656
      %vm2660 = vcmask 130048
      %v2662 = vsel %vm2660, %v2653, 0
      %2664 = vmatprep.subr.bf16.mxu0 0
      %2665 = vmatpush1.bf16.msra.mxu0 %v2658
      %2666 = vmatprep.subr.bf16.mxu0 0
      %2667 = vmatpush1.bf16.msra.mxu0 0
      %2668 = vmatprep.subr.bf16.mxu0 0
      %2669 = vmatpush1.bf16.msra.mxu0 0
      %2670 = vmatprep.subr.bf16.mxu0 0
      %2671 = vmatpush1.bf16.msra.mxu0 0
      %2672 = vmatprep.subr.bf16.mxu0 0
      %2673 = vmatpush1.bf16.msra.mxu0 0
      %2674 = vmatprep.subr.bf16.mxu0 0
      %2675 = vmatpush1.bf16.msra.mxu0 0
      %2676 = vmatprep.subr.bf16.mxu0 0
      %2677 = vmatpush1.bf16.msra.mxu0 0
      %2678 = vmatprep.subr.bf16.mxu0 0
      %2679 = vmatpush1.bf16.msra.mxu0 0
      %2680 = vmatprep.subr.bf16.mxu0 0
      %2681 = vmatpush1.bf16.msra.mxu0 0
      %2682 = vmatprep.subr.bf16.mxu0 0
      %2683 = vmatpush1.bf16.msra.mxu0 0
      %2684 = vmatprep.subr.bf16.mxu0 0
      %2685 = vmatpush1.bf16.msra.mxu0 0
      %2686 = vmatprep.subr.bf16.mxu0 0
      %2687 = vmatpush1.bf16.msra.mxu0 0
      %2688 = vmatprep.subr.bf16.mxu0 0
      %2689 = vmatpush1.bf16.msra.mxu0 0
      %2690 = vmatprep.subr.bf16.mxu0 0
      %2691 = vmatpush1.bf16.msra.mxu0 0
      %2692 = vmatprep.subr.bf16.mxu0 0
      %2693 = vmatpush1.bf16.msra.mxu0 0
      %2694 = vmatprep.subr.bf16.mxu0 0
      %2695 = vmatpush1.bf16.msra.mxu0 0
      %2696 = vmatprep.mubr.bf16.mxu0 0
      %2697 = vmatmul.mubr.bf16.gmra.mrb[0].mxu0 %v2662
      %v2698 = vpop.f32.mrb[0].mxu0
      %v2699 = vadd.f32 0.0, %v2698
      %v2700 = vpop.f32.mrb[0].mxu0
      %v2701 = vpop.f32.mrb[0].mxu0
      %v2702 = vpop.f32.mrb[0].mxu0
      %2703 = vdwg.mxu0
      %v2706 = vunpack.c.l.b16 %v2648
      %v2707 = vunpack.c.l.b16 %v2649
      %v2708 = vpack.c.b16 %v2707, %v2706
      %v2711 = vsel %vm2660, %v2650, 0
      %2713 = vmatprep.subr.bf16.mxu0 0
      %2714 = vmatpush1.bf16.msra.mxu0 %v2708
      %2715 = vmatprep.subr.bf16.mxu0 0
      %2716 = vmatpush1.bf16.msra.mxu0 0
      %2717 = vmatprep.subr.bf16.mxu0 0
      %2718 = vmatpush1.bf16.msra.mxu0 0
      %2719 = vmatprep.subr.bf16.mxu0 0
      %2720 = vmatpush1.bf16.msra.mxu0 0
      %2721 = vmatprep.subr.bf16.mxu0 0
      %2722 = vmatpush1.bf16.msra.mxu0 0
      %2723 = vmatprep.subr.bf16.mxu0 0
      %2724 = vmatpush1.bf16.msra.mxu0 0
      %2725 = vmatprep.subr.bf16.mxu0 0
      %2726 = vmatpush1.bf16.msra.mxu0 0
      %2727 = vmatprep.subr.bf16.mxu0 0
      %2728 = vmatpush1.bf16.msra.mxu0 0
      %2729 = vmatprep.subr.bf16.mxu0 0
      %2730 = vmatpush1.bf16.msra.mxu0 0
      %2731 = vmatprep.subr.bf16.mxu0 0
      %2732 = vmatpush1.bf16.msra.mxu0 0
      %2733 = vmatprep.subr.bf16.mxu0 0
      %2734 = vmatpush1.bf16.msra.mxu0 0
      %2735 = vmatprep.subr.bf16.mxu0 0
      %2736 = vmatpush1.bf16.msra.mxu0 0
      %2737 = vmatprep.subr.bf16.mxu0 0
      %2738 = vmatpush1.bf16.msra.mxu0 0
      %2739 = vmatprep.subr.bf16.mxu0 0
      %2740 = vmatpush1.bf16.msra.mxu0 0
      %2741 = vmatprep.subr.bf16.mxu0 0
      %2742 = vmatpush1.bf16.msra.mxu0 0
      %2743 = vmatprep.subr.bf16.mxu0 0
      %2744 = vmatpush1.bf16.msra.mxu0 0
      %2745 = vmatprep.mubr.bf16.mxu0 0
      %2746 = vmatmul.mubr.bf16.gmra.mrb[0].mxu0 %v2711
      %v2747 = vpop.f32.mrb[0].mxu0
      %v2748 = vadd.f32 %v2699, %v2747
      %v2749 = vpop.f32.mrb[0].mxu0
      %v2750 = vpop.f32.mrb[0].mxu0
      %v2751 = vpop.f32.mrb[0].mxu0
      %2752 = vdwg.mxu0
      %v2753 = vld [vmem:[%s15] sm:$0x1]
      %v2755 = vlaneseq
      %v2756 = vshrl.u32 %v2755, 7
      %v2757 = vsub.s32 0, %v2756
      %v2758 = vrot.slane %v2753, %v2757
      %v2760 = vadd.f32 %v2748, %v2758
      %v2761 = vmul.f32 %v2760, 0.5
      %v2762 = vmul.f32 %v2760, 0.70710677
      %v2763 = verf.f32.pop %v2762
      %v2764 = vadd.f32 %v2763, 1.0
      %v2765 = vmul.f32 %v2761, %v2764
      %v2766 = vld [vmem:[%s16] sm:$0xf]
      %v2767 = vld [vmem:[%s16 + $0x4] sm:$0xf]
      %v2768 = vpack.c.bf16 %v2765, %v2765
      %v2769 = vld [vmem:[%s17] sm:$0x1]
      %v2771 = vlaneseq
      %v2772 = vshrl.u32 %v2771, 7
      %v2773 = vsub.s32 0, %v2772
      %v2774 = vrot.slane %v2769, %v2773
      %v2778 = vunpack.c.l.b16 %v2766
      %v2779 = vunpack.c.l.b16 %v2767
      %v2780 = vpack.c.b16 %v2779, %v2778
      %v2783 = vsel %vm2660, %v2768, 0
      %2785 = vmatprep.subr.bf16.mxu0 0
      %2786 = vmatpush1.bf16.msra.mxu0 %v2780
      %2787 = vmatprep.subr.bf16.mxu0 0
      %2788 = vmatpush1.bf16.msra.mxu0 0
      %2789 = vmatprep.subr.bf16.mxu0 0
      %2790 = vmatpush1.bf16.msra.mxu0 0
      %2791 = vmatprep.subr.bf16.mxu0 0
      %2792 = vmatpush1.bf16.msra.mxu0 0
      %2793 = vmatprep.subr.bf16.mxu0 0
      %2794 = vmatpush1.bf16.msra.mxu0 0
      %2795 = vmatprep.subr.bf16.mxu0 0
      %2796 = vmatpush1.bf16.msra.mxu0 0
      %2797 = vmatprep.subr.bf16.mxu0 0
      %2798 = vmatpush1.bf16.msra.mxu0 0
      %2799 = vmatprep.subr.bf16.mxu0 0
      %2800 = vmatpush1.bf16.msra.mxu0 0
      %2801 = vmatprep.subr.bf16.mxu0 0
      %2802 = vmatpush1.bf16.msra.mxu0 0
      %2803 = vmatprep.subr.bf16.mxu0 0
      %2804 = vmatpush1.bf16.msra.mxu0 0
      %2805 = vmatprep.subr.bf16.mxu0 0
      %2806 = vmatpush1.bf16.msra.mxu0 0
      %2807 = vmatprep.subr.bf16.mxu0 0
      %2808 = vmatpush1.bf16.msra.mxu0 0
      %2809 = vmatprep.subr.bf16.mxu0 0
      %2810 = vmatpush1.bf16.msra.mxu0 0
      %2811 = vmatprep.subr.bf16.mxu0 0
      %2812 = vmatpush1.bf16.msra.mxu0 0
      %2813 = vmatprep.subr.bf16.mxu0 0
      %2814 = vmatpush1.bf16.msra.mxu0 0
      %2815 = vmatprep.subr.bf16.mxu0 0
      %2816 = vmatpush1.bf16.msra.mxu0 0
      %2817 = vmatprep.mubr.bf16.mxu0 0
      %2818 = vmatmul.mubr.bf16.gmra.mrb[0].mxu0 %v2783
      %v2819 = vpop.f32.mrb[0].mxu0
      %v2820 = vadd.f32 %v2774, %v2819
      %v2821 = vpop.f32.mrb[0].mxu0
      %v2822 = vpop.f32.mrb[0].mxu0
      %v2823 = vpop.f32.mrb[0].mxu0
      %2824 = vdwg.mxu0
      %vm2825 = vcmask 15360
      %2826 = vst.msk [vmem:[%s555] sm:$0xff] %vm2825, %v2820
      %p2827 = scmp.lt.s32.totalorder %s35, 1
      %s2828 = scalar_select %p2827, %s35, 1
      %s2829 = smul.addr %s2828, 8
      %s2830 = scalar_lea.vmem %s18, %s2829
      // Predicated region
      $region89: #{tpu_custom_call.1} parent=87 // pred_check
        %p2831 = pneg %p415
      $region90: #{tpu_custom_call.1} parent=87 // pred_check_branch
        %2833 = sbr.rel (%p2831) target = $region92
      $region91: #{tpu_custom_call.1} parent=87 // pred_region
        _
      $region92: #{tpu_custom_call.1} parent=87 // pred_fallthru
        _
    $region88: #{tpu_custom_call.1} parent=5 // pred_fallthru
      _
    %p2834 = scmp.le.s32.totalorder 2, %s30
    // Predicated region
    $region93: #{tpu_custom_call.1} parent=5 // pred_check
      %p2835 = pneg %p2834
    $region94: #{tpu_custom_call.1} parent=5 // pred_check_branch
      %2837 = sbr.rel (%p2835) target = $region96
    $region95: #{tpu_custom_call.1} parent=5 // pred_region
      %s2838 = ssub.s32 %s30, 2
      // Predicated region
      $region97: #{tpu_custom_call.1} parent=95 // pred_check
        %p2839 = pneg %p421
      $region98: #{tpu_custom_call.1} parent=95 // pred_check_branch
        %2841 = sbr.rel (%p2839) target = $region100
      $region99: #{tpu_custom_call.1} parent=95 // pred_region
        %p2842 = scmp.lt.s32.totalorder %s36, 1
        %s2843 = scalar_select %p2842, %s36, 1
        %s2844 = smul.addr %s2843, 8
        %s2845 = scalar_lea.vmem %s18, %s2844
      $region100: #{tpu_custom_call.1} parent=95 // pred_fallthru
        _
    $region96: #{tpu_custom_call.1} parent=5 // pred_fallthru
      _
  $region6: #{tpu_custom_call.1} parent=0 // loop_footer
    %s34 = sadd.s32 1, %s30
  $region7: #{tpu_custom_call.1} parent=0 // loop_footer_branch
    %29 = sbr.rel target = $region3
  $region8: #{tpu_custom_call.1} parent=0 // loop_exit
    _

</llo_original>
